<compile_context>
chip_gen: v7x
topology: tpu7x:2x2x1
jax: 0.10.0
libtpu: 0.0.40
codegen_flags: <defaults>
</compile_context>

<pallas_src>
import functools
import math

import jax
import jax.numpy as jnp
from jax.experimental import pallas as pl
from jax.experimental.pallas import tpu as pltpu

LAYER_NORM_EPS = 1e-05
NEG_INF = -1e20  # ParlAI neginf() for float32


# ----------------------------------------------------------------------------
# In-kernel helpers
# ----------------------------------------------------------------------------
def _layer_norm(x, gamma, beta):
    """LayerNorm over the last dim (biased variance, matching torch.nn.LayerNorm)."""
    mu = jnp.mean(x, axis=-1, keepdims=True)
    xc = x - mu
    var = jnp.mean(xc * xc, axis=-1, keepdims=True)
    return xc * jax.lax.rsqrt(var + LAYER_NORM_EPS) * gamma + beta


def _softmax_lastdim(scores):
    m = jnp.max(scores, axis=-1, keepdims=True)
    e = jnp.exp(scores - m)
    s = jnp.sum(e, axis=-1, keepdims=True)
    return e * pl.reciprocal(s, approx=True)


# ----------------------------------------------------------------------------
# Fused decoder-layer kernel (one batch element per grid step)
# ----------------------------------------------------------------------------
def reformer_decoder_layer_kernel(
    # activations
    x_ref, hid_ref, enc_ref, enc_mask_ref,
    # self-attention (per-head packed; 1/sqrt(dh) folded into the q slice)
    w_qkv_s_ref, b_qkv_s_ref, wo_s_ref, bo_s_ref,
    # LayerNorm 1
    g1_ref, be1_ref,
    # cross-attention
    wq_c_ref, bq_c_ref, w_kv_c_ref, b_kv_c_ref, wo_c_ref, bo_c_ref,
    # LayerNorm 2
    g2_ref, be2_ref,
    # GRU (pointwise, seq-len-1 per position)
    wih_ref, whh_ref, bih_ref, bhh_ref,
    # LayerNorm 3
    g3_ref, be3_ref,
    # outputs
    out_ref, hid_out_ref,
    *, n_heads,
):
    H = n_heads
    x = x_ref[0].astype(jnp.float32)                      # (T, D)
    T, D = x.shape
    dh = D // H

    # ------------------ causal self-attention (heads batched) ------------------
    xh = jnp.broadcast_to(x[None], (H, T, D))
    qkv = jnp.einsum('htd,hdk->htk', xh, w_qkv_s_ref[...],
                     preferred_element_type=jnp.float32) + b_qkv_s_ref[...]   # (H, T, 3dh)
    q = qkv[:, :, 0:dh]
    k = qkv[:, :, dh:2 * dh]
    v = qkv[:, :, 2 * dh:3 * dh]
    scores = jnp.einsum('hqd,hkd->hqk', q, k, preferred_element_type=jnp.float32)  # (H, T, T)
    row = jax.lax.broadcasted_iota(jnp.int32, (H, T, T), 1)
    col = jax.lax.broadcasted_iota(jnp.int32, (H, T, T), 2)
    scores = jnp.where(col <= row, scores, NEG_INF)        # causal (tril) mask, built in-kernel
    p = _softmax_lastdim(scores)
    ctx = jnp.einsum('hqk,hkd->hqd', p, v, preferred_element_type=jnp.float32)      # (H, T, dh)
    sa = jnp.sum(jnp.einsum('hqd,hde->hqe', ctx, wo_s_ref[...],
                            preferred_element_type=jnp.float32), axis=0) + bo_s_ref[...]
    x1 = _layer_norm(sa, g1_ref[...], be1_ref[...])        # (T, D)

    # ------------------ cross-attention over encoder states ------------------
    enc = enc_ref[0].astype(jnp.float32)                   # (L, D)
    L = enc.shape[0]
    x1h = jnp.broadcast_to(x1[None], (H, T, D))
    ench = jnp.broadcast_to(enc[None], (H, L, D))
    qc = jnp.einsum('htd,hdk->htk', x1h, wq_c_ref[...],
                    preferred_element_type=jnp.float32) + bq_c_ref[...]              # (H, T, dh)
    kv = jnp.einsum('hld,hdk->hlk', ench, w_kv_c_ref[...],
                    preferred_element_type=jnp.float32) + b_kv_c_ref[...]            # (H, L, 2dh)
    kc = kv[:, :, 0:dh]
    vc = kv[:, :, dh:2 * dh]
    sc = jnp.einsum('hqd,hkd->hqk', qc, kc, preferred_element_type=jnp.float32)      # (H, T, L)
    emask = enc_mask_ref[0]                                 # (1, L): 1 = keep, 0 = pad
    sc = jnp.where(emask[None, :, :] == 0.0, NEG_INF, sc)
    pc = _softmax_lastdim(sc)
    ctxc = jnp.einsum('hqk,hkd->hqd', pc, vc, preferred_element_type=jnp.float32)    # (H, T, dh)
    ca = jnp.sum(jnp.einsum('hqd,hde->hqe', ctxc, wo_c_ref[...],
                            preferred_element_type=jnp.float32), axis=0) + bo_c_ref[...]
    x2 = _layer_norm(ca, g2_ref[...], be2_ref[...])         # (T, D)

    # ------------------ pointwise GRU (ReformerRNN reshapes to seq-len-1 steps) ------------------
    h0 = hid_ref[0].astype(jnp.float32)                     # (T, D)
    gi = jnp.dot(x2, wih_ref[...], preferred_element_type=jnp.float32) + bih_ref[...]
    gh = jnp.dot(h0, whh_ref[...], preferred_element_type=jnp.float32) + bhh_ref[...]
    i_r, i_z, i_n = gi[:, 0:D], gi[:, D:2 * D], gi[:, 2 * D:3 * D]
    h_r, h_z, h_n = gh[:, 0:D], gh[:, D:2 * D], gh[:, 2 * D:3 * D]
    r = jax.nn.sigmoid(i_r + h_r)
    z = jax.nn.sigmoid(i_z + h_z)
    n = jnp.tanh(i_n + r * h_n)
    hy = (1.0 - z) * n + z * h0                              # new hidden == GRU output

    x3 = _layer_norm(hy, g3_ref[...], be3_ref[...])

    out_ref[0] = x3.astype(out_ref.dtype)                    # x after LN3
    hid_out_ref[0] = hy.astype(hid_out_ref.dtype)            # hid (pre-LN3), as in the module


# ----------------------------------------------------------------------------
# Host-side weight packing (per-head layout, scale folding)
# ----------------------------------------------------------------------------
def _split_heads_w(w, n_heads):
    # w: (D, D_out) with output columns grouped per head -> (H, D, dh)
    D, Dout = w.shape
    dh = Dout // n_heads
    return jnp.transpose(w.reshape(D, n_heads, dh), (1, 0, 2))


def _split_heads_b(b, n_heads):
    # b: (1, D_out) -> (H, 1, dh)
    Dout = b.shape[-1]
    dh = Dout // n_heads
    return b.reshape(n_heads, 1, dh)


def _pack_self_attn(p, n_heads, dim):
    dh = dim // n_heads
    scale = math.sqrt(dh)
    wq = _split_heads_w(p["wq"] / scale, n_heads)       # fold 1/sqrt(dh) into q
    wk = _split_heads_w(p["wk"], n_heads)
    wv = _split_heads_w(p["wv"], n_heads)
    w_qkv = jnp.concatenate([wq, wk, wv], axis=-1)       # (H, D, 3dh)
    bq = _split_heads_b(p["bq"] / scale, n_heads)
    bk = _split_heads_b(p["bk"], n_heads)
    bv = _split_heads_b(p["bv"], n_heads)
    b_qkv = jnp.concatenate([bq, bk, bv], axis=-1)       # (H, 1, 3dh)
    wo = p["wo"].reshape(n_heads, dh, dim)               # (H, dh, D)
    return w_qkv, b_qkv, wo, p["bo"]


def _pack_cross_attn(p, n_heads, dim):
    dh = dim // n_heads
    scale = math.sqrt(dh)
    wq = _split_heads_w(p["wq"] / scale, n_heads)        # (H, D, dh)
    bq = _split_heads_b(p["bq"] / scale, n_heads)        # (H, 1, dh)
    wk = _split_heads_w(p["wk"], n_heads)
    wv = _split_heads_w(p["wv"], n_heads)
    w_kv = jnp.concatenate([wk, wv], axis=-1)            # (H, D, 2dh)
    bk = _split_heads_b(p["bk"], n_heads)
    bv = _split_heads_b(p["bv"], n_heads)
    b_kv = jnp.concatenate([bk, bv], axis=-1)            # (H, 1, 2dh)
    wo = p["wo"].reshape(n_heads, dh, dim)               # (H, dh, D)
    return wq, bq, w_kv, b_kv, wo, p["bo"]


# ----------------------------------------------------------------------------
# Full decoder-layer forward (single fused pallas_call)
# ----------------------------------------------------------------------------
def reformer_decoder_layer(x, hid, encoder_output, encoder_mask, params, n_heads):
    B, T, D = x.shape
    L = encoder_output.shape[1]
    dh = D // n_heads

    w_qkv_s, b_qkv_s, wo_s, bo_s = _pack_self_attn(params["self_attn"], n_heads, D)
    wq_c, bq_c, w_kv_c, b_kv_c, wo_c, bo_c = _pack_cross_attn(params["enc_attn"], n_heads, D)
    gru = params["gru"]

    enc_mask3 = encoder_mask.astype(jnp.float32).reshape(B, 1, L)

    def const_spec(shape):
        nd = len(shape)
        return pl.BlockSpec(shape, lambda b, _nd=nd: (0,) * _nd)

    def batched_spec(s, d):
        return pl.BlockSpec((1, s, d), lambda b: (b, 0, 0))

    kern = functools.partial(reformer_decoder_layer_kernel, n_heads=n_heads)

    in_specs = [
        batched_spec(T, D),                               # x
        batched_spec(T, D),                               # hid
        batched_spec(L, D),                               # encoder_output
        pl.BlockSpec((1, 1, L), lambda b: (b, 0, 0)),     # encoder_mask (B,1,L)
        const_spec((n_heads, D, 3 * dh)),                 # self-attn fused QKV weight
        const_spec((n_heads, 1, 3 * dh)),                 # self-attn fused QKV bias
        const_spec((n_heads, dh, D)),                     # self-attn out proj (per head)
        const_spec((1, D)),                               # self-attn out bias
        const_spec((1, D)), const_spec((1, D)),           # LN1 gamma / beta
        const_spec((n_heads, D, dh)),                     # cross-attn Q weight
        const_spec((n_heads, 1, dh)),                     # cross-attn Q bias
        const_spec((n_heads, D, 2 * dh)),                 # cross-attn fused KV weight
        const_spec((n_heads, 1, 2 * dh)),                 # cross-attn fused KV bias
        const_spec((n_heads, dh, D)),                     # cross-attn out proj
        const_spec((1, D)),                               # cross-attn out bias
        const_spec((1, D)), const_spec((1, D)),           # LN2
        const_spec((D, 3 * D)),                           # GRU wih (r,z,n)
        const_spec((D, 3 * D)),                           # GRU whh
        const_spec((1, 3 * D)),                           # GRU bih
        const_spec((1, 3 * D)),                           # GRU bhh
        const_spec((1, D)), const_spec((1, D)),           # LN3
    ]
    out_specs = (batched_spec(T, D), batched_spec(T, D))
    out_shapes = (jax.ShapeDtypeStruct((B, T, D), x.dtype),
                  jax.ShapeDtypeStruct((B, T, D), x.dtype))

    out, hid_new = pl.pallas_call(
        kern,
        out_shape=out_shapes,
        grid=(B,),
        in_specs=in_specs,
        out_specs=out_specs,
        compiler_params=pltpu.CompilerParams(
            dimension_semantics=("parallel",)),           # v7x: batch split across the 2 TCs
    )(x, hid, encoder_output, enc_mask3,
      w_qkv_s, b_qkv_s, wo_s, bo_s,
      params["norm1"]["gamma"], params["norm1"]["beta"],
      wq_c, bq_c, w_kv_c, b_kv_c, wo_c, bo_c,
      params["norm2"]["gamma"], params["norm2"]["beta"],
      gru["wih"], gru["whh"], gru["bih"], gru["bhh"],
      params["norm3"]["gamma"], params["norm3"]["beta"])
    return out, hid_new


# ----------------------------------------------------------------------------
# Deterministic parameter init (synthetic; mirrors module __init__ shapes)
# ----------------------------------------------------------------------------
def init_params(key, dim):
    def xavier(k, shape):
        fan_in, fan_out = shape
        std = math.sqrt(2.0 / (fan_in + fan_out))
        return std * jax.random.normal(k, shape, jnp.float32)

    def attn_params(k):
        ks = jax.random.split(k, 8)
        return {
            "wq": xavier(ks[0], (dim, dim)), "bq": 0.01 * jax.random.normal(ks[1], (1, dim), jnp.float32),
            "wk": xavier(ks[2], (dim, dim)), "bk": 0.01 * jax.random.normal(ks[3], (1, dim), jnp.float32),
            "wv": xavier(ks[4], (dim, dim)), "bv": 0.01 * jax.random.normal(ks[5], (1, dim), jnp.float32),
            "wo": xavier(ks[6], (dim, dim)), "bo": 0.01 * jax.random.normal(ks[7], (1, dim), jnp.float32),
        }

    def ln_params():
        return {"gamma": jnp.ones((1, dim), jnp.float32),
                "beta": jnp.zeros((1, dim), jnp.float32)}

    k_self, k_enc, k_gru = jax.random.split(key, 3)
    kg = jax.random.split(k_gru, 4)
    gru_std = 1.0 / math.sqrt(dim)
    gru = {
        "wih": gru_std * jax.random.normal(kg[0], (dim, 3 * dim), jnp.float32),
        "whh": gru_std * jax.random.normal(kg[1], (dim, 3 * dim), jnp.float32),
        "bih": gru_std * jax.random.normal(kg[2], (1, 3 * dim), jnp.float32),
        "bhh": gru_std * jax.random.normal(kg[3], (1, 3 * dim), jnp.float32),
    }
    return {
        "self_attn": attn_params(k_self),
        "enc_attn": attn_params(k_enc),
        "norm1": ln_params(),
        "norm2": ln_params(),
        "norm3": ln_params(),
        "gru": gru,
    }


if __name__ == "__main__":
    B, T, L, D, N_HEADS = 2, 8, 8, 32, 2   # batch, dec seq, enc seq, embed dim, heads

    root = jax.random.PRNGKey(0)
    k_par, k_x, k_hid, k_enc = jax.random.split(root, 4)

    params = init_params(k_par, D)
    x = jax.random.normal(k_x, (B, T, D), jnp.float32)
    hid = jax.random.normal(k_hid, (B, T, D), jnp.float32)        # ReformerRNN hid: (B, T, D)
    encoder_output = jax.random.normal(k_enc, (B, L, D), jnp.float32)
    # encoder_mask: 1 = valid token, 0 = padding (pad last 2 positions of batch 1)
    encoder_mask = jnp.ones((B, L), jnp.float32).at[1, L - 2:].set(0.0)

    fwd = jax.jit(functools.partial(reformer_decoder_layer, n_heads=N_HEADS))
    out, hid_out = fwd(x, hid, encoder_output, encoder_mask, params)
    jax.block_until_ready((out, hid_out))

    assert out.shape == (B, T, D) and hid_out.shape == (B, T, D)
    assert bool(jnp.all(jnp.isfinite(out))) and bool(jnp.all(jnp.isfinite(hid_out)))
    print("KERNEL_OK")
</pallas_src>

<mosaic_0001>
module attributes {stable_mosaic.version = 11 : i64} {
  func.func @reformer_decoder_layer_kernel(%arg0: i32, %arg1: memref<1x8x32xf32, #tpu.memory_space<vmem>>, %arg2: memref<1x8x32xf32, #tpu.memory_space<vmem>>, %arg3: memref<1x8x32xf32, #tpu.memory_space<vmem>>, %arg4: memref<1x1x8xf32, #tpu.memory_space<vmem>>, %arg5: memref<2x32x48xf32, #tpu.memory_space<vmem>>, %arg6: memref<2x1x48xf32, #tpu.memory_space<vmem>>, %arg7: memref<2x16x32xf32, #tpu.memory_space<vmem>>, %arg8: memref<1x32xf32, #tpu.memory_space<vmem>>, %arg9: memref<1x32xf32, #tpu.memory_space<vmem>>, %arg10: memref<1x32xf32, #tpu.memory_space<vmem>>, %arg11: memref<2x32x16xf32, #tpu.memory_space<vmem>>, %arg12: memref<2x1x16xf32, #tpu.memory_space<vmem>>, %arg13: memref<2x32x32xf32, #tpu.memory_space<vmem>>, %arg14: memref<2x1x32xf32, #tpu.memory_space<vmem>>, %arg15: memref<2x16x32xf32, #tpu.memory_space<vmem>>, %arg16: memref<1x32xf32, #tpu.memory_space<vmem>>, %arg17: memref<1x32xf32, #tpu.memory_space<vmem>>, %arg18: memref<1x32xf32, #tpu.memory_space<vmem>>, %arg19: memref<32x96xf32, #tpu.memory_space<vmem>>, %arg20: memref<32x96xf32, #tpu.memory_space<vmem>>, %arg21: memref<1x96xf32, #tpu.memory_space<vmem>>, %arg22: memref<1x96xf32, #tpu.memory_space<vmem>>, %arg23: memref<1x32xf32, #tpu.memory_space<vmem>>, %arg24: memref<1x32xf32, #tpu.memory_space<vmem>>, %arg25: memref<1x8x32xf32, #tpu.memory_space<vmem>>, %arg26: memref<1x8x32xf32, #tpu.memory_space<vmem>>) attributes {dimension_semantics = [#tpu.dimension_semantics<parallel>], iteration_bounds = array<i64: 2>, scalar_prefetch = 0 : i64, scratch_operands = 0 : i64, tpu.core_type = #tpu.core_type<tc>, window_params = [{transform_indices = @transform_0, window_bounds = array<i64: 1, 8, 32>}, {transform_indices = @transform_1, window_bounds = array<i64: 1, 8, 32>}, {transform_indices = @transform_2, window_bounds = array<i64: 1, 8, 32>}, {transform_indices = @transform_3, window_bounds = array<i64: 1, 1, 8>}, {pipeline_mode = #tpu.pipeline_mode<synchronous>, transform_indices = @transform_4, window_bounds = array<i64: 2, 32, 48>}, {pipeline_mode = #tpu.pipeline_mode<synchronous>, transform_indices = @transform_5, window_bounds = array<i64: 2, 1, 48>}, {pipeline_mode = #tpu.pipeline_mode<synchronous>, transform_indices = @transform_6, window_bounds = array<i64: 2, 16, 32>}, {pipeline_mode = #tpu.pipeline_mode<synchronous>, transform_indices = @transform_7, window_bounds = array<i64: 1, 32>}, {pipeline_mode = #tpu.pipeline_mode<synchronous>, transform_indices = @transform_8, window_bounds = array<i64: 1, 32>}, {pipeline_mode = #tpu.pipeline_mode<synchronous>, transform_indices = @transform_9, window_bounds = array<i64: 1, 32>}, {pipeline_mode = #tpu.pipeline_mode<synchronous>, transform_indices = @transform_10, window_bounds = array<i64: 2, 32, 16>}, {pipeline_mode = #tpu.pipeline_mode<synchronous>, transform_indices = @transform_11, window_bounds = array<i64: 2, 1, 16>}, {pipeline_mode = #tpu.pipeline_mode<synchronous>, transform_indices = @transform_12, window_bounds = array<i64: 2, 32, 32>}, {pipeline_mode = #tpu.pipeline_mode<synchronous>, transform_indices = @transform_13, window_bounds = array<i64: 2, 1, 32>}, {pipeline_mode = #tpu.pipeline_mode<synchronous>, transform_indices = @transform_14, window_bounds = array<i64: 2, 16, 32>}, {pipeline_mode = #tpu.pipeline_mode<synchronous>, transform_indices = @transform_15, window_bounds = array<i64: 1, 32>}, {pipeline_mode = #tpu.pipeline_mode<synchronous>, transform_indices = @transform_16, window_bounds = array<i64: 1, 32>}, {pipeline_mode = #tpu.pipeline_mode<synchronous>, transform_indices = @transform_17, window_bounds = array<i64: 1, 32>}, {pipeline_mode = #tpu.pipeline_mode<synchronous>, transform_indices = @transform_18, window_bounds = array<i64: 32, 96>}, {pipeline_mode = #tpu.pipeline_mode<synchronous>, transform_indices = @transform_19, window_bounds = array<i64: 32, 96>}, {pipeline_mode = #tpu.pipeline_mode<synchronous>, transform_indices = @transform_20, window_bounds = array<i64: 1, 96>}, {pipeline_mode = #tpu.pipeline_mode<synchronous>, transform_indices = @transform_21, window_bounds = array<i64: 1, 96>}, {pipeline_mode = #tpu.pipeline_mode<synchronous>, transform_indices = @transform_22, window_bounds = array<i64: 1, 32>}, {pipeline_mode = #tpu.pipeline_mode<synchronous>, transform_indices = @transform_23, window_bounds = array<i64: 1, 32>}, {transform_indices = @transform_24, window_bounds = array<i64: 1, 8, 32>}, {transform_indices = @transform_25, window_bounds = array<i64: 1, 8, 32>}]} {
    %c0 = arith.constant 0 : index
    %c0_0 = arith.constant 0 : index
    %c0_1 = arith.constant 0 : index
    %0 = vector.load %arg1[%c0, %c0_0, %c0_1] : memref<1x8x32xf32, #tpu.memory_space<vmem>>, vector<1x8x32xf32>
    %1 = vector.shape_cast %0 : vector<1x8x32xf32> to vector<8x32xf32>
    %2 = vector.shape_cast %1 : vector<8x32xf32> to vector<1x8x32xf32>
    %3 = vector.shape_cast %2 : vector<1x8x32xf32> to vector<1x8x32xf32>
    %4 = vector.broadcast %3 : vector<1x8x32xf32> to vector<2x8x32xf32>
    %c0_2 = arith.constant 0 : index
    %c0_3 = arith.constant 0 : index
    %c0_4 = arith.constant 0 : index
    %5 = vector.load %arg5[%c0_2, %c0_3, %c0_4] : memref<2x32x48xf32, #tpu.memory_space<vmem>>, vector<2x32x48xf32>
    "tpu.trace_start"() <{level = 10 : i32, message = "htd,hdk->htk"}> : () -> ()
    %cst = arith.constant dense<0.000000e+00> : vector<2x8x48xf32>
    %6 = tpu.matmul %4, %5, %cst {dimension_numbers = #tpu.dot_dimension_numbers<[2], [1], [1], [2], [0, 0, 0, 1, 1, 2], [0], [0]>} : vector<2x8x32xf32>, vector<2x32x48xf32>, vector<2x8x48xf32> -> vector<2x8x48xf32>
    "tpu.trace_stop"() : () -> ()
    %c0_5 = arith.constant 0 : index
    %c0_6 = arith.constant 0 : index
    %c0_7 = arith.constant 0 : index
    %7 = vector.load %arg6[%c0_5, %c0_6, %c0_7] : memref<2x1x48xf32, #tpu.memory_space<vmem>>, vector<2x1x48xf32>
    %8 = vector.broadcast %7 : vector<2x1x48xf32> to vector<2x8x48xf32>
    %9 = arith.addf %6, %8 : vector<2x8x48xf32>
    %10 = vector.extract_strided_slice %9 {offsets = [0, 0, 0], sizes = [2, 8, 16], strides = [1, 1, 1]} : vector<2x8x48xf32> to vector<2x8x16xf32>
    %11 = vector.extract_strided_slice %9 {offsets = [0, 0, 16], sizes = [2, 8, 16], strides = [1, 1, 1]} : vector<2x8x48xf32> to vector<2x8x16xf32>
    %12 = vector.extract_strided_slice %9 {offsets = [0, 0, 32], sizes = [2, 8, 16], strides = [1, 1, 1]} : vector<2x8x48xf32> to vector<2x8x16xf32>
    "tpu.trace_start"() <{level = 10 : i32, message = "hqd,hkd->hqk"}> : () -> ()
    %cst_8 = arith.constant dense<0.000000e+00> : vector<2x8x8xf32>
    %13 = tpu.matmul %10, %11, %cst_8 {dimension_numbers = #tpu.dot_dimension_numbers<[2], [2], [1], [1], [0, 0, 0, 1, 1, 1], [0], [0]>} : vector<2x8x16xf32>, vector<2x8x16xf32>, vector<2x8x8xf32> -> vector<2x8x8xf32>
    "tpu.trace_stop"() : () -> ()
    %14 = tpu.iota {dimensions = array<i32: 1>} : vector<2x8x8xi32>
    %15 = tpu.iota {dimensions = array<i32: 2>} : vector<2x8x8xi32>
    %16 = arith.cmpi sle, %15, %14 : vector<2x8x8xi32>
    %cst_9 = arith.constant -1.000000e+20 : f32
    %17 = vector.broadcast %cst_9 : f32 to vector<2x8x8xf32>
    %18 = arith.select %16, %13, %17 : vector<2x8x8xi1>, vector<2x8x8xf32>
    %cst_10 = arith.constant dense<0xFF800000> : vector<2x8xf32>
    %19 = vector.multi_reduction <maximumf>, %18, %cst_10 [2] : vector<2x8x8xf32> to vector<2x8xf32>
    %20 = vector.shape_cast %19 : vector<2x8xf32> to vector<2x8x1xf32>
    %21 = vector.broadcast %20 : vector<2x8x1xf32> to vector<2x8x8xf32>
    %22 = arith.subf %18, %21 : vector<2x8x8xf32>
    %23 = math.exp %22 : vector<2x8x8xf32>
    %cst_11 = arith.constant dense<0.000000e+00> : vector<2x8xf32>
    %24 = vector.multi_reduction <add>, %23, %cst_11 [2] : vector<2x8x8xf32> to vector<2x8xf32>
    %25 = vector.shape_cast %24 : vector<2x8xf32> to vector<2x8x1xf32>
    %26 = tpu.reciprocal %25 {approx = true} : vector<2x8x1xf32> -> vector<2x8x1xf32>
    %27 = vector.broadcast %26 : vector<2x8x1xf32> to vector<2x8x8xf32>
    %28 = arith.mulf %23, %27 : vector<2x8x8xf32>
    "tpu.trace_start"() <{level = 10 : i32, message = "hqk,hkd->hqd"}> : () -> ()
    %cst_12 = arith.constant dense<0.000000e+00> : vector<2x8x16xf32>
    %29 = tpu.matmul %28, %12, %cst_12 {dimension_numbers = #tpu.dot_dimension_numbers<[2], [1], [1], [2], [0, 0, 0, 1, 1, 2], [0], [0]>} : vector<2x8x8xf32>, vector<2x8x16xf32>, vector<2x8x16xf32> -> vector<2x8x16xf32>
    "tpu.trace_stop"() : () -> ()
    %c0_13 = arith.constant 0 : index
    %c0_14 = arith.constant 0 : index
    %c0_15 = arith.constant 0 : index
    %30 = vector.load %arg7[%c0_13, %c0_14, %c0_15] : memref<2x16x32xf32, #tpu.memory_space<vmem>>, vector<2x16x32xf32>
    "tpu.trace_start"() <{level = 10 : i32, message = "hqd,hde->hqe"}> : () -> ()
    %cst_16 = arith.constant dense<0.000000e+00> : vector<2x8x32xf32>
    %31 = tpu.matmul %29, %30, %cst_16 {dimension_numbers = #tpu.dot_dimension_numbers<[2], [1], [1], [2], [0, 0, 0, 1, 1, 2], [0], [0]>} : vector<2x8x16xf32>, vector<2x16x32xf32>, vector<2x8x32xf32> -> vector<2x8x32xf32>
    "tpu.trace_stop"() : () -> ()
    %cst_17 = arith.constant dense<0.000000e+00> : vector<8x32xf32>
    %32 = vector.multi_reduction <add>, %31, %cst_17 [0] : vector<2x8x32xf32> to vector<8x32xf32>
    %c0_18 = arith.constant 0 : index
    %c0_19 = arith.constant 0 : index
    %33 = vector.load %arg8[%c0_18, %c0_19] : memref<1x32xf32, #tpu.memory_space<vmem>>, vector<1x32xf32>
    %34 = vector.broadcast %33 : vector<1x32xf32> to vector<8x32xf32>
    %35 = arith.addf %32, %34 : vector<8x32xf32>
    %c0_20 = arith.constant 0 : index
    %c0_21 = arith.constant 0 : index
    %36 = vector.load %arg9[%c0_20, %c0_21] : memref<1x32xf32, #tpu.memory_space<vmem>>, vector<1x32xf32>
    %c0_22 = arith.constant 0 : index
    %c0_23 = arith.constant 0 : index
    %37 = vector.load %arg10[%c0_22, %c0_23] : memref<1x32xf32, #tpu.memory_space<vmem>>, vector<1x32xf32>
    %cst_24 = arith.constant dense<0.000000e+00> : vector<8xf32>
    %38 = vector.multi_reduction <add>, %35, %cst_24 [1] : vector<8x32xf32> to vector<8xf32>
    %39 = vector.shape_cast %38 : vector<8xf32> to vector<8x1xf32>
    %cst_25 = arith.constant 3.200000e+01 : f32
    %40 = vector.broadcast %cst_25 : f32 to vector<8x1xf32>
    %41 = arith.divf %39, %40 : vector<8x1xf32>
    %42 = vector.broadcast %41 : vector<8x1xf32> to vector<8x32xf32>
    %43 = arith.subf %35, %42 : vector<8x32xf32>
    %44 = arith.mulf %43, %43 : vector<8x32xf32>
    %cst_26 = arith.constant dense<0.000000e+00> : vector<8xf32>
    %45 = vector.multi_reduction <add>, %44, %cst_26 [1] : vector<8x32xf32> to vector<8xf32>
    %46 = vector.shape_cast %45 : vector<8xf32> to vector<8x1xf32>
    %cst_27 = arith.constant 3.200000e+01 : f32
    %47 = vector.broadcast %cst_27 : f32 to vector<8x1xf32>
    %48 = arith.divf %46, %47 : vector<8x1xf32>
    %cst_28 = arith.constant 9.99999974E-6 : f32
    %49 = vector.broadcast %cst_28 : f32 to vector<8x1xf32>
    %50 = arith.addf %48, %49 : vector<8x1xf32>
    %51 = math.rsqrt %50 : vector<8x1xf32>
    %52 = vector.broadcast %51 : vector<8x1xf32> to vector<8x32xf32>
    %53 = arith.mulf %43, %52 : vector<8x32xf32>
    %54 = vector.broadcast %36 : vector<1x32xf32> to vector<8x32xf32>
    %55 = arith.mulf %53, %54 : vector<8x32xf32>
    %56 = vector.broadcast %37 : vector<1x32xf32> to vector<8x32xf32>
    %57 = arith.addf %55, %56 : vector<8x32xf32>
    %c0_29 = arith.constant 0 : index
    %c0_30 = arith.constant 0 : index
    %c0_31 = arith.constant 0 : index
    %58 = vector.load %arg3[%c0_29, %c0_30, %c0_31] : memref<1x8x32xf32, #tpu.memory_space<vmem>>, vector<1x8x32xf32>
    %59 = vector.shape_cast %58 : vector<1x8x32xf32> to vector<8x32xf32>
    %60 = vector.shape_cast %57 : vector<8x32xf32> to vector<1x8x32xf32>
    %61 = vector.shape_cast %60 : vector<1x8x32xf32> to vector<1x8x32xf32>
    %62 = vector.broadcast %61 : vector<1x8x32xf32> to vector<2x8x32xf32>
    %63 = vector.shape_cast %59 : vector<8x32xf32> to vector<1x8x32xf32>
    %64 = vector.shape_cast %63 : vector<1x8x32xf32> to vector<1x8x32xf32>
    %65 = vector.broadcast %64 : vector<1x8x32xf32> to vector<2x8x32xf32>
    %c0_32 = arith.constant 0 : index
    %c0_33 = arith.constant 0 : index
    %c0_34 = arith.constant 0 : index
    %66 = vector.load %arg11[%c0_32, %c0_33, %c0_34] : memref<2x32x16xf32, #tpu.memory_space<vmem>>, vector<2x32x16xf32>
    "tpu.trace_start"() <{level = 10 : i32, message = "htd,hdk->htk"}> : () -> ()
    %cst_35 = arith.constant dense<0.000000e+00> : vector<2x8x16xf32>
    %67 = tpu.matmul %62, %66, %cst_35 {dimension_numbers = #tpu.dot_dimension_numbers<[2], [1], [1], [2], [0, 0, 0, 1, 1, 2], [0], [0]>} : vector<2x8x32xf32>, vector<2x32x16xf32>, vector<2x8x16xf32> -> vector<2x8x16xf32>
    "tpu.trace_stop"() : () -> ()
    %c0_36 = arith.constant 0 : index
    %c0_37 = arith.constant 0 : index
    %c0_38 = arith.constant 0 : index
    %68 = vector.load %arg12[%c0_36, %c0_37, %c0_38] : memref<2x1x16xf32, #tpu.memory_space<vmem>>, vector<2x1x16xf32>
    %69 = vector.broadcast %68 : vector<2x1x16xf32> to vector<2x8x16xf32>
    %70 = arith.addf %67, %69 : vector<2x8x16xf32>
    %c0_39 = arith.constant 0 : index
    %c0_40 = arith.constant 0 : index
    %c0_41 = arith.constant 0 : index
    %71 = vector.load %arg13[%c0_39, %c0_40, %c0_41] : memref<2x32x32xf32, #tpu.memory_space<vmem>>, vector<2x32x32xf32>
    "tpu.trace_start"() <{level = 10 : i32, message = "hld,hdk->hlk"}> : () -> ()
    %cst_42 = arith.constant dense<0.000000e+00> : vector<2x8x32xf32>
    %72 = tpu.matmul %65, %71, %cst_42 {dimension_numbers = #tpu.dot_dimension_numbers<[2], [1], [1], [2], [0, 0, 0, 1, 1, 2], [0], [0]>} : vector<2x8x32xf32>, vector<2x32x32xf32>, vector<2x8x32xf32> -> vector<2x8x32xf32>
    "tpu.trace_stop"() : () -> ()
    %c0_43 = arith.constant 0 : index
    %c0_44 = arith.constant 0 : index
    %c0_45 = arith.constant 0 : index
    %73 = vector.load %arg14[%c0_43, %c0_44, %c0_45] : memref<2x1x32xf32, #tpu.memory_space<vmem>>, vector<2x1x32xf32>
    %74 = vector.broadcast %73 : vector<2x1x32xf32> to vector<2x8x32xf32>
    %75 = arith.addf %72, %74 : vector<2x8x32xf32>
    %76 = vector.extract_strided_slice %75 {offsets = [0, 0, 0], sizes = [2, 8, 16], strides = [1, 1, 1]} : vector<2x8x32xf32> to vector<2x8x16xf32>
    %77 = vector.extract_strided_slice %75 {offsets = [0, 0, 16], sizes = [2, 8, 16], strides = [1, 1, 1]} : vector<2x8x32xf32> to vector<2x8x16xf32>
    "tpu.trace_start"() <{level = 10 : i32, message = "hqd,hkd->hqk"}> : () -> ()
    %cst_46 = arith.constant dense<0.000000e+00> : vector<2x8x8xf32>
    %78 = tpu.matmul %70, %76, %cst_46 {dimension_numbers = #tpu.dot_dimension_numbers<[2], [2], [1], [1], [0, 0, 0, 1, 1, 1], [0], [0]>} : vector<2x8x16xf32>, vector<2x8x16xf32>, vector<2x8x8xf32> -> vector<2x8x8xf32>
    "tpu.trace_stop"() : () -> ()
    %c0_47 = arith.constant 0 : index
    %c0_48 = arith.constant 0 : index
    %c0_49 = arith.constant 0 : index
    %79 = vector.load %arg4[%c0_47, %c0_48, %c0_49] : memref<1x1x8xf32, #tpu.memory_space<vmem>>, vector<1x1x8xf32>
    %80 = vector.shape_cast %79 : vector<1x1x8xf32> to vector<1x8xf32>
    %81 = vector.shape_cast %80 : vector<1x8xf32> to vector<1x1x8xf32>
    %cst_50 = arith.constant 0.000000e+00 : f32
    %82 = vector.broadcast %cst_50 : f32 to vector<1x1x8xf32>
    %83 = arith.cmpf oeq, %81, %82 : vector<1x1x8xf32>
    %cst_51 = arith.constant -1.000000e+20 : f32
    %84 = vector.shape_cast %83 : vector<1x1x8xi1> to vector<1x1x8xi1>
    %85 = vector.broadcast %84 : vector<1x1x8xi1> to vector<2x8x8xi1>
    %86 = vector.broadcast %cst_51 : f32 to vector<2x8x8xf32>
    %87 = arith.select %85, %86, %78 : vector<2x8x8xi1>, vector<2x8x8xf32>
    %cst_52 = arith.constant dense<0xFF800000> : vector<2x8xf32>
    %88 = vector.multi_reduction <maximumf>, %87, %cst_52 [2] : vector<2x8x8xf32> to vector<2x8xf32>
    %89 = vector.shape_cast %88 : vector<2x8xf32> to vector<2x8x1xf32>
    %90 = vector.broadcast %89 : vector<2x8x1xf32> to vector<2x8x8xf32>
    %91 = arith.subf %87, %90 : vector<2x8x8xf32>
    %92 = math.exp %91 : vector<2x8x8xf32>
    %cst_53 = arith.constant dense<0.000000e+00> : vector<2x8xf32>
    %93 = vector.multi_reduction <add>, %92, %cst_53 [2] : vector<2x8x8xf32> to vector<2x8xf32>
    %94 = vector.shape_cast %93 : vector<2x8xf32> to vector<2x8x1xf32>
    %95 = tpu.reciprocal %94 {approx = true} : vector<2x8x1xf32> -> vector<2x8x1xf32>
    %96 = vector.broadcast %95 : vector<2x8x1xf32> to vector<2x8x8xf32>
    %97 = arith.mulf %92, %96 : vector<2x8x8xf32>
    "tpu.trace_start"() <{level = 10 : i32, message = "hqk,hkd->hqd"}> : () -> ()
    %cst_54 = arith.constant dense<0.000000e+00> : vector<2x8x16xf32>
    %98 = tpu.matmul %97, %77, %cst_54 {dimension_numbers = #tpu.dot_dimension_numbers<[2], [1], [1], [2], [0, 0, 0, 1, 1, 2], [0], [0]>} : vector<2x8x8xf32>, vector<2x8x16xf32>, vector<2x8x16xf32> -> vector<2x8x16xf32>
    "tpu.trace_stop"() : () -> ()
    %c0_55 = arith.constant 0 : index
    %c0_56 = arith.constant 0 : index
    %c0_57 = arith.constant 0 : index
    %99 = vector.load %arg15[%c0_55, %c0_56, %c0_57] : memref<2x16x32xf32, #tpu.memory_space<vmem>>, vector<2x16x32xf32>
    "tpu.trace_start"() <{level = 10 : i32, message = "hqd,hde->hqe"}> : () -> ()
    %cst_58 = arith.constant dense<0.000000e+00> : vector<2x8x32xf32>
    %100 = tpu.matmul %98, %99, %cst_58 {dimension_numbers = #tpu.dot_dimension_numbers<[2], [1], [1], [2], [0, 0, 0, 1, 1, 2], [0], [0]>} : vector<2x8x16xf32>, vector<2x16x32xf32>, vector<2x8x32xf32> -> vector<2x8x32xf32>
    "tpu.trace_stop"() : () -> ()
    %cst_59 = arith.constant dense<0.000000e+00> : vector<8x32xf32>
    %101 = vector.multi_reduction <add>, %100, %cst_59 [0] : vector<2x8x32xf32> to vector<8x32xf32>
    %c0_60 = arith.constant 0 : index
    %c0_61 = arith.constant 0 : index
    %102 = vector.load %arg16[%c0_60, %c0_61] : memref<1x32xf32, #tpu.memory_space<vmem>>, vector<1x32xf32>
    %103 = vector.broadcast %102 : vector<1x32xf32> to vector<8x32xf32>
    %104 = arith.addf %101, %103 : vector<8x32xf32>
    %c0_62 = arith.constant 0 : index
    %c0_63 = arith.constant 0 : index
    %105 = vector.load %arg17[%c0_62, %c0_63] : memref<1x32xf32, #tpu.memory_space<vmem>>, vector<1x32xf32>
    %c0_64 = arith.constant 0 : index
    %c0_65 = arith.constant 0 : index
    %106 = vector.load %arg18[%c0_64, %c0_65] : memref<1x32xf32, #tpu.memory_space<vmem>>, vector<1x32xf32>
    %cst_66 = arith.constant dense<0.000000e+00> : vector<8xf32>
    %107 = vector.multi_reduction <add>, %104, %cst_66 [1] : vector<8x32xf32> to vector<8xf32>
    %108 = vector.shape_cast %107 : vector<8xf32> to vector<8x1xf32>
    %cst_67 = arith.constant 3.200000e+01 : f32
    %109 = vector.broadcast %cst_67 : f32 to vector<8x1xf32>
    %110 = arith.divf %108, %109 : vector<8x1xf32>
    %111 = vector.broadcast %110 : vector<8x1xf32> to vector<8x32xf32>
    %112 = arith.subf %104, %111 : vector<8x32xf32>
    %113 = arith.mulf %112, %112 : vector<8x32xf32>
    %cst_68 = arith.constant dense<0.000000e+00> : vector<8xf32>
    %114 = vector.multi_reduction <add>, %113, %cst_68 [1] : vector<8x32xf32> to vector<8xf32>
    %115 = vector.shape_cast %114 : vector<8xf32> to vector<8x1xf32>
    %cst_69 = arith.constant 3.200000e+01 : f32
    %116 = vector.broadcast %cst_69 : f32 to vector<8x1xf32>
    %117 = arith.divf %115, %116 : vector<8x1xf32>
    %cst_70 = arith.constant 9.99999974E-6 : f32
    %118 = vector.broadcast %cst_70 : f32 to vector<8x1xf32>
    %119 = arith.addf %117, %118 : vector<8x1xf32>
    %120 = math.rsqrt %119 : vector<8x1xf32>
    %121 = vector.broadcast %120 : vector<8x1xf32> to vector<8x32xf32>
    %122 = arith.mulf %112, %121 : vector<8x32xf32>
    %123 = vector.broadcast %105 : vector<1x32xf32> to vector<8x32xf32>
    %124 = arith.mulf %122, %123 : vector<8x32xf32>
    %125 = vector.broadcast %106 : vector<1x32xf32> to vector<8x32xf32>
    %126 = arith.addf %124, %125 : vector<8x32xf32>
    %c0_71 = arith.constant 0 : index
    %c0_72 = arith.constant 0 : index
    %c0_73 = arith.constant 0 : index
    %127 = vector.load %arg2[%c0_71, %c0_72, %c0_73] : memref<1x8x32xf32, #tpu.memory_space<vmem>>, vector<1x8x32xf32>
    %128 = vector.shape_cast %127 : vector<1x8x32xf32> to vector<8x32xf32>
    %c0_74 = arith.constant 0 : index
    %c0_75 = arith.constant 0 : index
    %129 = vector.load %arg19[%c0_74, %c0_75] : memref<32x96xf32, #tpu.memory_space<vmem>>, vector<32x96xf32>
    %cst_76 = arith.constant dense<0.000000e+00> : vector<8x96xf32>
    %130 = tpu.matmul %126, %129, %cst_76 {dimension_numbers = #tpu.dot_dimension_numbers<[1], [0], [0], [1], [0, 0, 1, 1], [], []>} : vector<8x32xf32>, vector<32x96xf32>, vector<8x96xf32> -> vector<8x96xf32>
    %c0_77 = arith.constant 0 : index
    %c0_78 = arith.constant 0 : index
    %131 = vector.load %arg21[%c0_77, %c0_78] : memref<1x96xf32, #tpu.memory_space<vmem>>, vector<1x96xf32>
    %132 = vector.broadcast %131 : vector<1x96xf32> to vector<8x96xf32>
    %133 = arith.addf %130, %132 : vector<8x96xf32>
    %c0_79 = arith.constant 0 : index
    %c0_80 = arith.constant 0 : index
    %134 = vector.load %arg20[%c0_79, %c0_80] : memref<32x96xf32, #tpu.memory_space<vmem>>, vector<32x96xf32>
    %cst_81 = arith.constant dense<0.000000e+00> : vector<8x96xf32>
    %135 = tpu.matmul %128, %134, %cst_81 {dimension_numbers = #tpu.dot_dimension_numbers<[1], [0], [0], [1], [0, 0, 1, 1], [], []>} : vector<8x32xf32>, vector<32x96xf32>, vector<8x96xf32> -> vector<8x96xf32>
    %c0_82 = arith.constant 0 : index
    %c0_83 = arith.constant 0 : index
    %136 = vector.load %arg22[%c0_82, %c0_83] : memref<1x96xf32, #tpu.memory_space<vmem>>, vector<1x96xf32>
    %137 = vector.broadcast %136 : vector<1x96xf32> to vector<8x96xf32>
    %138 = arith.addf %135, %137 : vector<8x96xf32>
    %139 = vector.extract_strided_slice %133 {offsets = [0, 0], sizes = [8, 32], strides = [1, 1]} : vector<8x96xf32> to vector<8x32xf32>
    %140 = vector.extract_strided_slice %133 {offsets = [0, 32], sizes = [8, 32], strides = [1, 1]} : vector<8x96xf32> to vector<8x32xf32>
    %141 = vector.extract_strided_slice %133 {offsets = [0, 64], sizes = [8, 32], strides = [1, 1]} : vector<8x96xf32> to vector<8x32xf32>
    %142 = vector.extract_strided_slice %138 {offsets = [0, 0], sizes = [8, 32], strides = [1, 1]} : vector<8x96xf32> to vector<8x32xf32>
    %143 = vector.extract_strided_slice %138 {offsets = [0, 32], sizes = [8, 32], strides = [1, 1]} : vector<8x96xf32> to vector<8x32xf32>
    %144 = vector.extract_strided_slice %138 {offsets = [0, 64], sizes = [8, 32], strides = [1, 1]} : vector<8x96xf32> to vector<8x32xf32>
    %145 = arith.addf %139, %142 : vector<8x32xf32>
    %146 = arith.negf %145 : vector<8x32xf32>
    %147 = math.exp %146 : vector<8x32xf32>
    %cst_84 = arith.constant 1.000000e+00 : f32
    %148 = vector.broadcast %cst_84 : f32 to vector<8x32xf32>
    %149 = arith.addf %148, %147 : vector<8x32xf32>
    %150 = arith.divf %148, %149 : vector<8x32xf32>
    %151 = arith.addf %140, %143 : vector<8x32xf32>
    %152 = arith.negf %151 : vector<8x32xf32>
    %153 = math.exp %152 : vector<8x32xf32>
    %cst_85 = arith.constant 1.000000e+00 : f32
    %154 = vector.broadcast %cst_85 : f32 to vector<8x32xf32>
    %155 = arith.addf %154, %153 : vector<8x32xf32>
    %156 = arith.divf %154, %155 : vector<8x32xf32>
    %157 = arith.mulf %150, %144 : vector<8x32xf32>
    %158 = arith.addf %141, %157 : vector<8x32xf32>
    %159 = math.tanh %158 : vector<8x32xf32>
    %cst_86 = arith.constant 1.000000e+00 : f32
    %160 = vector.broadcast %cst_86 : f32 to vector<8x32xf32>
    %161 = arith.subf %160, %156 : vector<8x32xf32>
    %162 = arith.mulf %161, %159 : vector<8x32xf32>
    %163 = arith.mulf %156, %128 : vector<8x32xf32>
    %164 = arith.addf %162, %163 : vector<8x32xf32>
    %c0_87 = arith.constant 0 : index
    %c0_88 = arith.constant 0 : index
    %165 = vector.load %arg23[%c0_87, %c0_88] : memref<1x32xf32, #tpu.memory_space<vmem>>, vector<1x32xf32>
    %c0_89 = arith.constant 0 : index
    %c0_90 = arith.constant 0 : index
    %166 = vector.load %arg24[%c0_89, %c0_90] : memref<1x32xf32, #tpu.memory_space<vmem>>, vector<1x32xf32>
    %cst_91 = arith.constant dense<0.000000e+00> : vector<8xf32>
    %167 = vector.multi_reduction <add>, %164, %cst_91 [1] : vector<8x32xf32> to vector<8xf32>
    %168 = vector.shape_cast %167 : vector<8xf32> to vector<8x1xf32>
    %cst_92 = arith.constant 3.200000e+01 : f32
    %169 = vector.broadcast %cst_92 : f32 to vector<8x1xf32>
    %170 = arith.divf %168, %169 : vector<8x1xf32>
    %171 = vector.broadcast %170 : vector<8x1xf32> to vector<8x32xf32>
    %172 = arith.subf %164, %171 : vector<8x32xf32>
    %173 = arith.mulf %172, %172 : vector<8x32xf32>
    %cst_93 = arith.constant dense<0.000000e+00> : vector<8xf32>
    %174 = vector.multi_reduction <add>, %173, %cst_93 [1] : vector<8x32xf32> to vector<8xf32>
    %175 = vector.shape_cast %174 : vector<8xf32> to vector<8x1xf32>
    %cst_94 = arith.constant 3.200000e+01 : f32
    %176 = vector.broadcast %cst_94 : f32 to vector<8x1xf32>
    %177 = arith.divf %175, %176 : vector<8x1xf32>
    %cst_95 = arith.constant 9.99999974E-6 : f32
    %178 = vector.broadcast %cst_95 : f32 to vector<8x1xf32>
    %179 = arith.addf %177, %178 : vector<8x1xf32>
    %180 = math.rsqrt %179 : vector<8x1xf32>
    %181 = vector.broadcast %180 : vector<8x1xf32> to vector<8x32xf32>
    %182 = arith.mulf %172, %181 : vector<8x32xf32>
    %183 = vector.broadcast %165 : vector<1x32xf32> to vector<8x32xf32>
    %184 = arith.mulf %182, %183 : vector<8x32xf32>
    %185 = vector.broadcast %166 : vector<1x32xf32> to vector<8x32xf32>
    %186 = arith.addf %184, %185 : vector<8x32xf32>
    %c0_96 = arith.constant 0 : index
    %c0_97 = arith.constant 0 : index
    %c0_98 = arith.constant 0 : index
    %187 = vector.load %arg25[%c0_96, %c0_97, %c0_98] : memref<1x8x32xf32, #tpu.memory_space<vmem>>, vector<1x8x32xf32>
    %188 = vector.shape_cast %187 : vector<1x8x32xf32> to vector<8x32xf32>
    %189 = vector.shape_cast %186 : vector<8x32xf32> to vector<1x8x32xf32>
    tpu.vector_store %arg25[%c0_96, %c0_97, %c0_98], %189 {strides = array<i32>} : memref<1x8x32xf32, #tpu.memory_space<vmem>>, vector<1x8x32xf32>,
    %c0_99 = arith.constant 0 : index
    %c0_100 = arith.constant 0 : index
    %c0_101 = arith.constant 0 : index
    %190 = vector.load %arg26[%c0_99, %c0_100, %c0_101] : memref<1x8x32xf32, #tpu.memory_space<vmem>>, vector<1x8x32xf32>
    %191 = vector.shape_cast %190 : vector<1x8x32xf32> to vector<8x32xf32>
    %192 = vector.shape_cast %164 : vector<8x32xf32> to vector<1x8x32xf32>
    tpu.vector_store %arg26[%c0_99, %c0_100, %c0_101], %192 {strides = array<i32>} : memref<1x8x32xf32, #tpu.memory_space<vmem>>, vector<1x8x32xf32>,
    return
  }
  func.func @transform_0(%arg0: i32) -> (i32, i32, i32) {
    %c0_i32 = arith.constant 0 : i32
    %c0_i32_0 = arith.constant 0 : i32
    %c0_i32_1 = arith.constant 0 : i32
    return %arg0, %c0_i32, %c0_i32_0 : i32, i32, i32
  }
  func.func @transform_1(%arg0: i32) -> (i32, i32, i32) {
    %c0_i32 = arith.constant 0 : i32
    %c0_i32_0 = arith.constant 0 : i32
    %c0_i32_1 = arith.constant 0 : i32
    return %arg0, %c0_i32, %c0_i32_0 : i32, i32, i32
  }
  func.func @transform_2(%arg0: i32) -> (i32, i32, i32) {
    %c0_i32 = arith.constant 0 : i32
    %c0_i32_0 = arith.constant 0 : i32
    %c0_i32_1 = arith.constant 0 : i32
    return %arg0, %c0_i32, %c0_i32_0 : i32, i32, i32
  }
  func.func @transform_3(%arg0: i32) -> (i32, i32, i32) {
    %c0_i32 = arith.constant 0 : i32
    %c0_i32_0 = arith.constant 0 : i32
    %c0_i32_1 = arith.constant 0 : i32
    return %arg0, %c0_i32, %c0_i32_0 : i32, i32, i32
  }
  func.func @transform_4(%arg0: i32) -> (i32, i32, i32) {
    %c0_i32 = arith.constant 0 : i32
    %c0_i32_0 = arith.constant 0 : i32
    %c0_i32_1 = arith.constant 0 : i32
    %c0_i32_2 = arith.constant 0 : i32
    return %c0_i32, %c0_i32_0, %c0_i32_1 : i32, i32, i32
  }
  func.func @transform_5(%arg0: i32) -> (i32, i32, i32) {
    %c0_i32 = arith.constant 0 : i32
    %c0_i32_0 = arith.constant 0 : i32
    %c0_i32_1 = arith.constant 0 : i32
    %c0_i32_2 = arith.constant 0 : i32
    return %c0_i32, %c0_i32_0, %c0_i32_1 : i32, i32, i32
  }
  func.func @transform_6(%arg0: i32) -> (i32, i32, i32) {
    %c0_i32 = arith.constant 0 : i32
    %c0_i32_0 = arith.constant 0 : i32
    %c0_i32_1 = arith.constant 0 : i32
    %c0_i32_2 = arith.constant 0 : i32
    return %c0_i32, %c0_i32_0, %c0_i32_1 : i32, i32, i32
  }
  func.func @transform_7(%arg0: i32) -> (i32, i32) {
    %c0_i32 = arith.constant 0 : i32
    %c0_i32_0 = arith.constant 0 : i32
    %c0_i32_1 = arith.constant 0 : i32
    return %c0_i32, %c0_i32_0 : i32, i32
  }
  func.func @transform_8(%arg0: i32) -> (i32, i32) {
    %c0_i32 = arith.constant 0 : i32
    %c0_i32_0 = arith.constant 0 : i32
    %c0_i32_1 = arith.constant 0 : i32
    return %c0_i32, %c0_i32_0 : i32, i32
  }
  func.func @transform_9(%arg0: i32) -> (i32, i32) {
    %c0_i32 = arith.constant 0 : i32
    %c0_i32_0 = arith.constant 0 : i32
    %c0_i32_1 = arith.constant 0 : i32
    return %c0_i32, %c0_i32_0 : i32, i32
  }
  func.func @transform_10(%arg0: i32) -> (i32, i32, i32) {
    %c0_i32 = arith.constant 0 : i32
    %c0_i32_0 = arith.constant 0 : i32
    %c0_i32_1 = arith.constant 0 : i32
    %c0_i32_2 = arith.constant 0 : i32
    return %c0_i32, %c0_i32_0, %c0_i32_1 : i32, i32, i32
  }
  func.func @transform_11(%arg0: i32) -> (i32, i32, i32) {
    %c0_i32 = arith.constant 0 : i32
    %c0_i32_0 = arith.constant 0 : i32
    %c0_i32_1 = arith.constant 0 : i32
    %c0_i32_2 = arith.constant 0 : i32
    return %c0_i32, %c0_i32_0, %c0_i32_1 : i32, i32, i32
  }
  func.func @transform_12(%arg0: i32) -> (i32, i32, i32) {
    %c0_i32 = arith.constant 0 : i32
    %c0_i32_0 = arith.constant 0 : i32
    %c0_i32_1 = arith.constant 0 : i32
    %c0_i32_2 = arith.constant 0 : i32
    return %c0_i32, %c0_i32_0, %c0_i32_1 : i32, i32, i32
  }
  func.func @transform_13(%arg0: i32) -> (i32, i32, i32) {
    %c0_i32 = arith.constant 0 : i32
    %c0_i32_0 = arith.constant 0 : i32
    %c0_i32_1 = arith.constant 0 : i32
    %c0_i32_2 = arith.constant 0 : i32
    return %c0_i32, %c0_i32_0, %c0_i32_1 : i32, i32, i32
  }
  func.func @transform_14(%arg0: i32) -> (i32, i32, i32) {
    %c0_i32 = arith.constant 0 : i32
    %c0_i32_0 = arith.constant 0 : i32
    %c0_i32_1 = arith.constant 0 : i32
    %c0_i32_2 = arith.constant 0 : i32
    return %c0_i32, %c0_i32_0, %c0_i32_1 : i32, i32, i32
  }
  func.func @transform_15(%arg0: i32) -> (i32, i32) {
    %c0_i32 = arith.constant 0 : i32
    %c0_i32_0 = arith.constant 0 : i32
    %c0_i32_1 = arith.constant 0 : i32
    return %c0_i32, %c0_i32_0 : i32, i32
  }
  func.func @transform_16(%arg0: i32) -> (i32, i32) {
    %c0_i32 = arith.constant 0 : i32
    %c0_i32_0 = arith.constant 0 : i32
    %c0_i32_1 = arith.constant 0 : i32
    return %c0_i32, %c0_i32_0 : i32, i32
  }
  func.func @transform_17(%arg0: i32) -> (i32, i32) {
    %c0_i32 = arith.constant 0 : i32
    %c0_i32_0 = arith.constant 0 : i32
    %c0_i32_1 = arith.constant 0 : i32
    return %c0_i32, %c0_i32_0 : i32, i32
  }
  func.func @transform_18(%arg0: i32) -> (i32, i32) {
    %c0_i32 = arith.constant 0 : i32
    %c0_i32_0 = arith.constant 0 : i32
    %c0_i32_1 = arith.constant 0 : i32
    return %c0_i32, %c0_i32_0 : i32, i32
  }
  func.func @transform_19(%arg0: i32) -> (i32, i32) {
    %c0_i32 = arith.constant 0 : i32
    %c0_i32_0 = arith.constant 0 : i32
    %c0_i32_1 = arith.constant 0 : i32
    return %c0_i32, %c0_i32_0 : i32, i32
  }
  func.func @transform_20(%arg0: i32) -> (i32, i32) {
    %c0_i32 = arith.constant 0 : i32
    %c0_i32_0 = arith.constant 0 : i32
    %c0_i32_1 = arith.constant 0 : i32
    return %c0_i32, %c0_i32_0 : i32, i32
  }
  func.func @transform_21(%arg0: i32) -> (i32, i32) {
    %c0_i32 = arith.constant 0 : i32
    %c0_i32_0 = arith.constant 0 : i32
    %c0_i32_1 = arith.constant 0 : i32
    return %c0_i32, %c0_i32_0 : i32, i32
  }
  func.func @transform_22(%arg0: i32) -> (i32, i32) {
    %c0_i32 = arith.constant 0 : i32
    %c0_i32_0 = arith.constant 0 : i32
    %c0_i32_1 = arith.constant 0 : i32
    return %c0_i32, %c0_i32_0 : i32, i32
  }
  func.func @transform_23(%arg0: i32) -> (i32, i32) {
    %c0_i32 = arith.constant 0 : i32
    %c0_i32_0 = arith.constant 0 : i32
    %c0_i32_1 = arith.constant 0 : i32
    return %c0_i32, %c0_i32_0 : i32, i32
  }
  func.func @transform_24(%arg0: i32) -> (i32, i32, i32) {
    %c0_i32 = arith.constant 0 : i32
    %c0_i32_0 = arith.constant 0 : i32
    %c0_i32_1 = arith.constant 0 : i32
    return %arg0, %c0_i32, %c0_i32_0 : i32, i32, i32
  }
  func.func @transform_25(%arg0: i32) -> (i32, i32, i32) {
    %c0_i32 = arith.constant 0 : i32
    %c0_i32_0 = arith.constant 0 : i32
    %c0_i32_1 = arith.constant 0 : i32
    return %arg0, %c0_i32, %c0_i32_0 : i32, i32, i32
  }
}

</mosaic_0001>

<llo_original>
// kernel: reformer_decoder_layer.1
$region0: #{reformer_decoder_layer.1}
  #allocation0 [shape = 'u32[]', space=smem, size = 0x4, offset = 0x4, fixed_abs, tag = 'smem constant byte address 0x4 - core index']
  #allocation1 [shape = 'u32[144,128]{1,0:T(1,128)}', space=vmem, size = 0x12000, scoped, tag = 'internal scratch']
  %s0 = inlined_call_operand.vmem [shape: f32[2,8,32], index: 0, kind: input, shape index: {}]
  %s1 = inlined_call_operand.vmem [shape: f32[2,8,32], index: 1, kind: input, shape index: {}]
  %s2 = inlined_call_operand.vmem [shape: f32[2,8,32], index: 2, kind: input, shape index: {}]
  %s3 = inlined_call_operand.vmem [shape: f32[2,1,8], index: 3, kind: input, shape index: {}]
  %s4 = inlined_call_operand.vmem [shape: f32[2,32,48], index: 4, kind: input, shape index: {}]
  %s5 = inlined_call_operand.vmem [shape: f32[2,1,48], index: 5, kind: input, shape index: {}]
  %s6 = inlined_call_operand.vmem [shape: f32[2,16,32], index: 6, kind: input, shape index: {}]
  %s7 = inlined_call_operand.vmem [shape: f32[1,32], index: 7, kind: input, shape index: {}]
  %s8 = inlined_call_operand.vmem [shape: f32[1,32], index: 8, kind: input, shape index: {}]
  %s9 = inlined_call_operand.vmem [shape: f32[1,32], index: 9, kind: input, shape index: {}]
  %s10 = inlined_call_operand.vmem [shape: f32[2,32,16], index: 10, kind: input, shape index: {}]
  %s11 = inlined_call_operand.vmem [shape: f32[2,1,16], index: 11, kind: input, shape index: {}]
  %s12 = inlined_call_operand.vmem [shape: f32[2,32,32], index: 12, kind: input, shape index: {}]
  %s13 = inlined_call_operand.vmem [shape: f32[2,1,32], index: 13, kind: input, shape index: {}]
  %s14 = inlined_call_operand.vmem [shape: f32[2,16,32], index: 14, kind: input, shape index: {}]
  %s15 = inlined_call_operand.vmem [shape: f32[1,32], index: 15, kind: input, shape index: {}]
  %s16 = inlined_call_operand.vmem [shape: f32[1,32], index: 16, kind: input, shape index: {}]
  %s17 = inlined_call_operand.vmem [shape: f32[1,32], index: 17, kind: input, shape index: {}]
  %s18 = inlined_call_operand.vmem [shape: f32[32,96], index: 18, kind: input, shape index: {}]
  %s19 = inlined_call_operand.vmem [shape: f32[32,96], index: 19, kind: input, shape index: {}]
  %s20 = inlined_call_operand.vmem [shape: f32[1,96], index: 20, kind: input, shape index: {}]
  %s21 = inlined_call_operand.vmem [shape: f32[1,96], index: 21, kind: input, shape index: {}]
  %s22 = inlined_call_operand.vmem [shape: f32[1,32], index: 22, kind: input, shape index: {}]
  %s23 = inlined_call_operand.vmem [shape: f32[1,32], index: 23, kind: input, shape index: {}]
  %s24 = inlined_call_operand.hbm [shape: f32[2,8,32], index: 24, kind: output, shape index: {0}]
  %s25 = inlined_call_operand.hbm [shape: f32[2,8,32], index: 25, kind: output, shape index: {1}]
  %26 = xla_tuple %s24, %s25
  %s27 = sld [smem:[#allocation0]]
  $region137: #{reformer_decoder_layer.1} parent=0
    _
  %s29 = ssub.s32 1, %s27
  %s30 = scalar_select 0, %s29, %s27
  $region1: #{reformer_decoder_layer.1} parent=0
    #allocation2 [shape = 'u8[8192]{0}', space=vmem, size = 0x2000, scoped, tag = 'output window, operand 0']
    #allocation3 [shape = 's32[2]{0}', space=sflag, size = 0x8, scoped, tag = 'scoped memory for reformer_decoder_layer.1']
    #allocation4 [shape = 'u8[8192]{0}', space=vmem, size = 0x2000, scoped, tag = 'output window, operand 1']
    #allocation5 [shape = 's32[2]{0}', space=sflag, size = 0x8, scoped, tag = 'scoped memory for reformer_decoder_layer.1']
    %31 = vsyncpa [#allocation3], 0
    %s32 = scalar_lea.sflag [#allocation3], 1
    %33 = vsyncpa %s32, 0
    %34 = vsyncpa [#allocation5], 0
    %s35 = scalar_lea.sflag [#allocation5], 1
    %36 = vsyncpa %s35, 0
    loop: start=0, step=1, limit=4
    $region2: #{reformer_decoder_layer.1} parent=1 // loop_pre_header
      _
    $region3: #{reformer_decoder_layer.1} parent=1 // loop_header
      %s38 = sphi 0, %s42
      %p39 = scmp.ge.s32.totalorder %s38, 4
      %s48 = sphi 0, %s50
      %s51 = sphi 0, %s48
      %s52 = sphi 0, %s51
      %s68 = sphi 0, %s52
      %s74 = sphi 0, %s76
      %s77 = sphi 0, %s74
      %s78 = sphi 0, %s77
      %s94 = sphi 0, %s78
      %s100 = sphi 0, %s102
      %s103 = sphi 0, %s100
      %s104 = sphi 0, %s103
      %s120 = sphi 0, %s104
      %s126 = sphi 0, %s128
      %s129 = sphi 0, %s126
      %s130 = sphi 0, %s129
      %s146 = sphi 0, %s130
      %s150 = sphi 0, %s150
      %s152 = sphi 0, %s150
      %s153 = sphi 0, %s152
      %s167 = sphi 0, %s153
      %s171 = sphi 0, %s171
      %s173 = sphi 0, %s171
      %s174 = sphi 0, %s173
      %s188 = sphi 0, %s174
      %s192 = sphi 0, %s192
      %s194 = sphi 0, %s192
      %s195 = sphi 0, %s194
      %s209 = sphi 0, %s195
      %s213 = sphi 0, %s213
      %s215 = sphi 0, %s213
      %s216 = sphi 0, %s215
      %s230 = sphi 0, %s216
      %s234 = sphi 0, %s234
      %s236 = sphi 0, %s234
      %s237 = sphi 0, %s236
      %s251 = sphi 0, %s237
      %s255 = sphi 0, %s255
      %s257 = sphi 0, %s255
      %s258 = sphi 0, %s257
      %s272 = sphi 0, %s258
      %s276 = sphi 0, %s276
      %s278 = sphi 0, %s276
      %s279 = sphi 0, %s278
      %s293 = sphi 0, %s279
      %s297 = sphi 0, %s297
      %s299 = sphi 0, %s297
      %s300 = sphi 0, %s299
      %s314 = sphi 0, %s300
      %s318 = sphi 0, %s318
      %s320 = sphi 0, %s318
      %s321 = sphi 0, %s320
      %s335 = sphi 0, %s321
      %s339 = sphi 0, %s339
      %s341 = sphi 0, %s339
      %s342 = sphi 0, %s341
      %s356 = sphi 0, %s342
      %s360 = sphi 0, %s360
      %s362 = sphi 0, %s360
      %s363 = sphi 0, %s362
      %s377 = sphi 0, %s363
      %s381 = sphi 0, %s381
      %s383 = sphi 0, %s381
      %s384 = sphi 0, %s383
      %s398 = sphi 0, %s384
      %s402 = sphi 0, %s402
      %s404 = sphi 0, %s402
      %s405 = sphi 0, %s404
      %s419 = sphi 0, %s405
      %s423 = sphi 0, %s423
      %s425 = sphi 0, %s423
      %s426 = sphi 0, %s425
      %s440 = sphi 0, %s426
      %s444 = sphi 0, %s444
      %s446 = sphi 0, %s444
      %s447 = sphi 0, %s446
      %s461 = sphi 0, %s447
      %s465 = sphi 0, %s465
      %s467 = sphi 0, %s465
      %s468 = sphi 0, %s467
      %s482 = sphi 0, %s468
      %s486 = sphi 0, %s486
      %s488 = sphi 0, %s486
      %s489 = sphi 0, %s488
      %s503 = sphi 0, %s489
      %s507 = sphi 0, %s507
      %s509 = sphi 0, %s507
      %s510 = sphi 0, %s509
      %s524 = sphi 0, %s510
      %s528 = sphi 0, %s528
      %s530 = sphi 0, %s528
      %s531 = sphi 0, %s530
      %s545 = sphi 0, %s531
      %s549 = sphi 0, %s549
      %s551 = sphi 0, %s549
      %s552 = sphi 0, %s551
      %s566 = sphi 0, %s552
      %s572 = sphi 0, %s574
      %s575 = sphi 0, %s572
      %s576 = sphi 0, %s575
      %s592 = sphi 0, %s576
      %s598 = sphi 0, %s600
      %s601 = sphi 0, %s598
      %s602 = sphi 0, %s601
      %s618 = sphi 0, %s602
    $region4: #{reformer_decoder_layer.1} parent=1 // loop_header_branch
      %41 = sbr.rel (%p39) target = $region8
    $region5: #{reformer_decoder_layer.1} parent=1 // loop_body
      %s43 = ssub.s32 %s38, 1
      %s44 = ssub.s32 %s38, 2
      %s45 = sadd.s32 %s38, 1
      %s46 = ssub.s32 %s38, %s45
      %p47 = scmp.eq.s32.totalorder %s46, 0
      %s49 = sadd.s32 %s48, 1
      %s50 = scalar_select %p47, %s48, %s49
      %p53 = pneg %p47
      %p54 = scmp.eq.s32.totalorder %s38, 1
      %p55 = por %p53, %p54
      %p56 = scmp.ne.s32.totalorder %s48, %s51
      %p57 = scmp.eq.s32.totalorder %s38, 0
      %p58 = por %p56, %p57
      %p59 = scmp.ne.s32.totalorder %s48, %s51
      %p60 = scmp.eq.s32.totalorder %s43, 1
      %p61 = por %p59, %p60
      %p62 = scmp.ne.s32.totalorder %s51, %s52
      %p63 = scmp.eq.s32.totalorder %s43, 0
      %p64 = por %p62, %p63
      %p65 = scmp.ne.s32.totalorder %s51, %s52
      %p66 = scmp.eq.s32.totalorder %s44, 1
      %p67 = por %p65, %p66
      %p69 = scmp.ne.s32.totalorder %s52, %s68
      %p70 = scmp.eq.s32.totalorder %s44, 0
      %p71 = por %p69, %p70
      %s72 = ssub.s32 %s38, %s45
      %p73 = scmp.eq.s32.totalorder %s72, 0
      %s75 = sadd.s32 %s74, 1
      %s76 = scalar_select %p73, %s74, %s75
      %p79 = pneg %p73
      %p80 = scmp.eq.s32.totalorder %s38, 1
      %p81 = por %p79, %p80
      %p82 = scmp.ne.s32.totalorder %s74, %s77
      %p83 = scmp.eq.s32.totalorder %s38, 0
      %p84 = por %p82, %p83
      %p85 = scmp.ne.s32.totalorder %s74, %s77
      %p86 = scmp.eq.s32.totalorder %s43, 1
      %p87 = por %p85, %p86
      %p88 = scmp.ne.s32.totalorder %s77, %s78
      %p89 = scmp.eq.s32.totalorder %s43, 0
      %p90 = por %p88, %p89
      %p91 = scmp.ne.s32.totalorder %s77, %s78
      %p92 = scmp.eq.s32.totalorder %s44, 1
      %p93 = por %p91, %p92
      %p95 = scmp.ne.s32.totalorder %s78, %s94
      %p96 = scmp.eq.s32.totalorder %s44, 0
      %p97 = por %p95, %p96
      %s98 = ssub.s32 %s38, %s45
      %p99 = scmp.eq.s32.totalorder %s98, 0
      %s101 = sadd.s32 %s100, 1
      %s102 = scalar_select %p99, %s100, %s101
      %p105 = pneg %p99
      %p106 = scmp.eq.s32.totalorder %s38, 1
      %p107 = por %p105, %p106
      %p108 = scmp.ne.s32.totalorder %s100, %s103
      %p109 = scmp.eq.s32.totalorder %s38, 0
      %p110 = por %p108, %p109
      %p111 = scmp.ne.s32.totalorder %s100, %s103
      %p112 = scmp.eq.s32.totalorder %s43, 1
      %p113 = por %p111, %p112
      %p114 = scmp.ne.s32.totalorder %s103, %s104
      %p115 = scmp.eq.s32.totalorder %s43, 0
      %p116 = por %p114, %p115
      %p117 = scmp.ne.s32.totalorder %s103, %s104
      %p118 = scmp.eq.s32.totalorder %s44, 1
      %p119 = por %p117, %p118
      %p121 = scmp.ne.s32.totalorder %s104, %s120
      %p122 = scmp.eq.s32.totalorder %s44, 0
      %p123 = por %p121, %p122
      %s124 = ssub.s32 %s38, %s45
      %p125 = scmp.eq.s32.totalorder %s124, 0
      %s127 = sadd.s32 %s126, 1
      %s128 = scalar_select %p125, %s126, %s127
      %p131 = pneg %p125
      %p132 = scmp.eq.s32.totalorder %s38, 1
      %p133 = por %p131, %p132
      %p134 = scmp.ne.s32.totalorder %s126, %s129
      %p135 = scmp.eq.s32.totalorder %s38, 0
      %p136 = por %p134, %p135
      %p137 = scmp.ne.s32.totalorder %s126, %s129
      %p138 = scmp.eq.s32.totalorder %s43, 1
      %p139 = por %p137, %p138
      %p140 = scmp.ne.s32.totalorder %s129, %s130
      %p141 = scmp.eq.s32.totalorder %s43, 0
      %p142 = por %p140, %p141
      %p143 = scmp.ne.s32.totalorder %s129, %s130
      %p144 = scmp.eq.s32.totalorder %s44, 1
      %p145 = por %p143, %p144
      %p147 = scmp.ne.s32.totalorder %s130, %s146
      %p148 = scmp.eq.s32.totalorder %s44, 0
      %p149 = por %p147, %p148
      %s151 = sadd.s32 %s150, 1
      %p154 = scmp.eq.s32.totalorder %s38, 1
      %p155 = scmp.ne.s32.totalorder %s150, %s152
      %p156 = scmp.eq.s32.totalorder %s38, 0
      %p157 = por %p155, %p156
      %p158 = scmp.ne.s32.totalorder %s150, %s152
      %p159 = scmp.eq.s32.totalorder %s43, 1
      %p160 = por %p158, %p159
      %p161 = scmp.ne.s32.totalorder %s152, %s153
      %p162 = scmp.eq.s32.totalorder %s43, 0
      %p163 = por %p161, %p162
      %p164 = scmp.ne.s32.totalorder %s152, %s153
      %p165 = scmp.eq.s32.totalorder %s44, 1
      %p166 = por %p164, %p165
      %p168 = scmp.ne.s32.totalorder %s153, %s167
      %p169 = scmp.eq.s32.totalorder %s44, 0
      %p170 = por %p168, %p169
      %s172 = sadd.s32 %s171, 1
      %p175 = scmp.eq.s32.totalorder %s38, 1
      %p176 = scmp.ne.s32.totalorder %s171, %s173
      %p177 = scmp.eq.s32.totalorder %s38, 0
      %p178 = por %p176, %p177
      %p179 = scmp.ne.s32.totalorder %s171, %s173
      %p180 = scmp.eq.s32.totalorder %s43, 1
      %p181 = por %p179, %p180
      %p182 = scmp.ne.s32.totalorder %s173, %s174
      %p183 = scmp.eq.s32.totalorder %s43, 0
      %p184 = por %p182, %p183
      %p185 = scmp.ne.s32.totalorder %s173, %s174
      %p186 = scmp.eq.s32.totalorder %s44, 1
      %p187 = por %p185, %p186
      %p189 = scmp.ne.s32.totalorder %s174, %s188
      %p190 = scmp.eq.s32.totalorder %s44, 0
      %p191 = por %p189, %p190
      %s193 = sadd.s32 %s192, 1
      %p196 = scmp.eq.s32.totalorder %s38, 1
      %p197 = scmp.ne.s32.totalorder %s192, %s194
      %p198 = scmp.eq.s32.totalorder %s38, 0
      %p199 = por %p197, %p198
      %p200 = scmp.ne.s32.totalorder %s192, %s194
      %p201 = scmp.eq.s32.totalorder %s43, 1
      %p202 = por %p200, %p201
      %p203 = scmp.ne.s32.totalorder %s194, %s195
      %p204 = scmp.eq.s32.totalorder %s43, 0
      %p205 = por %p203, %p204
      %p206 = scmp.ne.s32.totalorder %s194, %s195
      %p207 = scmp.eq.s32.totalorder %s44, 1
      %p208 = por %p206, %p207
      %p210 = scmp.ne.s32.totalorder %s195, %s209
      %p211 = scmp.eq.s32.totalorder %s44, 0
      %p212 = por %p210, %p211
      %s214 = sadd.s32 %s213, 1
      %p217 = scmp.eq.s32.totalorder %s38, 1
      %p218 = scmp.ne.s32.totalorder %s213, %s215
      %p219 = scmp.eq.s32.totalorder %s38, 0
      %p220 = por %p218, %p219
      %p221 = scmp.ne.s32.totalorder %s213, %s215
      %p222 = scmp.eq.s32.totalorder %s43, 1
      %p223 = por %p221, %p222
      %p224 = scmp.ne.s32.totalorder %s215, %s216
      %p225 = scmp.eq.s32.totalorder %s43, 0
      %p226 = por %p224, %p225
      %p227 = scmp.ne.s32.totalorder %s215, %s216
      %p228 = scmp.eq.s32.totalorder %s44, 1
      %p229 = por %p227, %p228
      %p231 = scmp.ne.s32.totalorder %s216, %s230
      %p232 = scmp.eq.s32.totalorder %s44, 0
      %p233 = por %p231, %p232
      %s235 = sadd.s32 %s234, 1
      %p238 = scmp.eq.s32.totalorder %s38, 1
      %p239 = scmp.ne.s32.totalorder %s234, %s236
      %p240 = scmp.eq.s32.totalorder %s38, 0
      %p241 = por %p239, %p240
      %p242 = scmp.ne.s32.totalorder %s234, %s236
      %p243 = scmp.eq.s32.totalorder %s43, 1
      %p244 = por %p242, %p243
      %p245 = scmp.ne.s32.totalorder %s236, %s237
      %p246 = scmp.eq.s32.totalorder %s43, 0
      %p247 = por %p245, %p246
      %p248 = scmp.ne.s32.totalorder %s236, %s237
      %p249 = scmp.eq.s32.totalorder %s44, 1
      %p250 = por %p248, %p249
      %p252 = scmp.ne.s32.totalorder %s237, %s251
      %p253 = scmp.eq.s32.totalorder %s44, 0
      %p254 = por %p252, %p253
      %s256 = sadd.s32 %s255, 1
      %p259 = scmp.eq.s32.totalorder %s38, 1
      %p260 = scmp.ne.s32.totalorder %s255, %s257
      %p261 = scmp.eq.s32.totalorder %s38, 0
      %p262 = por %p260, %p261
      %p263 = scmp.ne.s32.totalorder %s255, %s257
      %p264 = scmp.eq.s32.totalorder %s43, 1
      %p265 = por %p263, %p264
      %p266 = scmp.ne.s32.totalorder %s257, %s258
      %p267 = scmp.eq.s32.totalorder %s43, 0
      %p268 = por %p266, %p267
      %p269 = scmp.ne.s32.totalorder %s257, %s258
      %p270 = scmp.eq.s32.totalorder %s44, 1
      %p271 = por %p269, %p270
      %p273 = scmp.ne.s32.totalorder %s258, %s272
      %p274 = scmp.eq.s32.totalorder %s44, 0
      %p275 = por %p273, %p274
      %s277 = sadd.s32 %s276, 1
      %p280 = scmp.eq.s32.totalorder %s38, 1
      %p281 = scmp.ne.s32.totalorder %s276, %s278
      %p282 = scmp.eq.s32.totalorder %s38, 0
      %p283 = por %p281, %p282
      %p284 = scmp.ne.s32.totalorder %s276, %s278
      %p285 = scmp.eq.s32.totalorder %s43, 1
      %p286 = por %p284, %p285
      %p287 = scmp.ne.s32.totalorder %s278, %s279
      %p288 = scmp.eq.s32.totalorder %s43, 0
      %p289 = por %p287, %p288
      %p290 = scmp.ne.s32.totalorder %s278, %s279
      %p291 = scmp.eq.s32.totalorder %s44, 1
      %p292 = por %p290, %p291
      %p294 = scmp.ne.s32.totalorder %s279, %s293
      %p295 = scmp.eq.s32.totalorder %s44, 0
      %p296 = por %p294, %p295
      %s298 = sadd.s32 %s297, 1
      %p301 = scmp.eq.s32.totalorder %s38, 1
      %p302 = scmp.ne.s32.totalorder %s297, %s299
      %p303 = scmp.eq.s32.totalorder %s38, 0
      %p304 = por %p302, %p303
      %p305 = scmp.ne.s32.totalorder %s297, %s299
      %p306 = scmp.eq.s32.totalorder %s43, 1
      %p307 = por %p305, %p306
      %p308 = scmp.ne.s32.totalorder %s299, %s300
      %p309 = scmp.eq.s32.totalorder %s43, 0
      %p310 = por %p308, %p309
      %p311 = scmp.ne.s32.totalorder %s299, %s300
      %p312 = scmp.eq.s32.totalorder %s44, 1
      %p313 = por %p311, %p312
      %p315 = scmp.ne.s32.totalorder %s300, %s314
      %p316 = scmp.eq.s32.totalorder %s44, 0
      %p317 = por %p315, %p316
      %s319 = sadd.s32 %s318, 1
      %p322 = scmp.eq.s32.totalorder %s38, 1
      %p323 = scmp.ne.s32.totalorder %s318, %s320
      %p324 = scmp.eq.s32.totalorder %s38, 0
      %p325 = por %p323, %p324
      %p326 = scmp.ne.s32.totalorder %s318, %s320
      %p327 = scmp.eq.s32.totalorder %s43, 1
      %p328 = por %p326, %p327
      %p329 = scmp.ne.s32.totalorder %s320, %s321
      %p330 = scmp.eq.s32.totalorder %s43, 0
      %p331 = por %p329, %p330
      %p332 = scmp.ne.s32.totalorder %s320, %s321
      %p333 = scmp.eq.s32.totalorder %s44, 1
      %p334 = por %p332, %p333
      %p336 = scmp.ne.s32.totalorder %s321, %s335
      %p337 = scmp.eq.s32.totalorder %s44, 0
      %p338 = por %p336, %p337
      %s340 = sadd.s32 %s339, 1
      %p343 = scmp.eq.s32.totalorder %s38, 1
      %p344 = scmp.ne.s32.totalorder %s339, %s341
      %p345 = scmp.eq.s32.totalorder %s38, 0
      %p346 = por %p344, %p345
      %p347 = scmp.ne.s32.totalorder %s339, %s341
      %p348 = scmp.eq.s32.totalorder %s43, 1
      %p349 = por %p347, %p348
      %p350 = scmp.ne.s32.totalorder %s341, %s342
      %p351 = scmp.eq.s32.totalorder %s43, 0
      %p352 = por %p350, %p351
      %p353 = scmp.ne.s32.totalorder %s341, %s342
      %p354 = scmp.eq.s32.totalorder %s44, 1
      %p355 = por %p353, %p354
      %p357 = scmp.ne.s32.totalorder %s342, %s356
      %p358 = scmp.eq.s32.totalorder %s44, 0
      %p359 = por %p357, %p358
      %s361 = sadd.s32 %s360, 1
      %p364 = scmp.eq.s32.totalorder %s38, 1
      %p365 = scmp.ne.s32.totalorder %s360, %s362
      %p366 = scmp.eq.s32.totalorder %s38, 0
      %p367 = por %p365, %p366
      %p368 = scmp.ne.s32.totalorder %s360, %s362
      %p369 = scmp.eq.s32.totalorder %s43, 1
      %p370 = por %p368, %p369
      %p371 = scmp.ne.s32.totalorder %s362, %s363
      %p372 = scmp.eq.s32.totalorder %s43, 0
      %p373 = por %p371, %p372
      %p374 = scmp.ne.s32.totalorder %s362, %s363
      %p375 = scmp.eq.s32.totalorder %s44, 1
      %p376 = por %p374, %p375
      %p378 = scmp.ne.s32.totalorder %s363, %s377
      %p379 = scmp.eq.s32.totalorder %s44, 0
      %p380 = por %p378, %p379
      %s382 = sadd.s32 %s381, 1
      %p385 = scmp.eq.s32.totalorder %s38, 1
      %p386 = scmp.ne.s32.totalorder %s381, %s383
      %p387 = scmp.eq.s32.totalorder %s38, 0
      %p388 = por %p386, %p387
      %p389 = scmp.ne.s32.totalorder %s381, %s383
      %p390 = scmp.eq.s32.totalorder %s43, 1
      %p391 = por %p389, %p390
      %p392 = scmp.ne.s32.totalorder %s383, %s384
      %p393 = scmp.eq.s32.totalorder %s43, 0
      %p394 = por %p392, %p393
      %p395 = scmp.ne.s32.totalorder %s383, %s384
      %p396 = scmp.eq.s32.totalorder %s44, 1
      %p397 = por %p395, %p396
      %p399 = scmp.ne.s32.totalorder %s384, %s398
      %p400 = scmp.eq.s32.totalorder %s44, 0
      %p401 = por %p399, %p400
      %s403 = sadd.s32 %s402, 1
      %p406 = scmp.eq.s32.totalorder %s38, 1
      %p407 = scmp.ne.s32.totalorder %s402, %s404
      %p408 = scmp.eq.s32.totalorder %s38, 0
      %p409 = por %p407, %p408
      %p410 = scmp.ne.s32.totalorder %s402, %s404
      %p411 = scmp.eq.s32.totalorder %s43, 1
      %p412 = por %p410, %p411
      %p413 = scmp.ne.s32.totalorder %s404, %s405
      %p414 = scmp.eq.s32.totalorder %s43, 0
      %p415 = por %p413, %p414
      %p416 = scmp.ne.s32.totalorder %s404, %s405
      %p417 = scmp.eq.s32.totalorder %s44, 1
      %p418 = por %p416, %p417
      %p420 = scmp.ne.s32.totalorder %s405, %s419
      %p421 = scmp.eq.s32.totalorder %s44, 0
      %p422 = por %p420, %p421
      %s424 = sadd.s32 %s423, 1
      %p427 = scmp.eq.s32.totalorder %s38, 1
      %p428 = scmp.ne.s32.totalorder %s423, %s425
      %p429 = scmp.eq.s32.totalorder %s38, 0
      %p430 = por %p428, %p429
      %p431 = scmp.ne.s32.totalorder %s423, %s425
      %p432 = scmp.eq.s32.totalorder %s43, 1
      %p433 = por %p431, %p432
      %p434 = scmp.ne.s32.totalorder %s425, %s426
      %p435 = scmp.eq.s32.totalorder %s43, 0
      %p436 = por %p434, %p435
      %p437 = scmp.ne.s32.totalorder %s425, %s426
      %p438 = scmp.eq.s32.totalorder %s44, 1
      %p439 = por %p437, %p438
      %p441 = scmp.ne.s32.totalorder %s426, %s440
      %p442 = scmp.eq.s32.totalorder %s44, 0
      %p443 = por %p441, %p442
      %s445 = sadd.s32 %s444, 1
      %p448 = scmp.eq.s32.totalorder %s38, 1
      %p449 = scmp.ne.s32.totalorder %s444, %s446
      %p450 = scmp.eq.s32.totalorder %s38, 0
      %p451 = por %p449, %p450
      %p452 = scmp.ne.s32.totalorder %s444, %s446
      %p453 = scmp.eq.s32.totalorder %s43, 1
      %p454 = por %p452, %p453
      %p455 = scmp.ne.s32.totalorder %s446, %s447
      %p456 = scmp.eq.s32.totalorder %s43, 0
      %p457 = por %p455, %p456
      %p458 = scmp.ne.s32.totalorder %s446, %s447
      %p459 = scmp.eq.s32.totalorder %s44, 1
      %p460 = por %p458, %p459
      %p462 = scmp.ne.s32.totalorder %s447, %s461
      %p463 = scmp.eq.s32.totalorder %s44, 0
      %p464 = por %p462, %p463
      %s466 = sadd.s32 %s465, 1
      %p469 = scmp.eq.s32.totalorder %s38, 1
      %p470 = scmp.ne.s32.totalorder %s465, %s467
      %p471 = scmp.eq.s32.totalorder %s38, 0
      %p472 = por %p470, %p471
      %p473 = scmp.ne.s32.totalorder %s465, %s467
      %p474 = scmp.eq.s32.totalorder %s43, 1
      %p475 = por %p473, %p474
      %p476 = scmp.ne.s32.totalorder %s467, %s468
      %p477 = scmp.eq.s32.totalorder %s43, 0
      %p478 = por %p476, %p477
      %p479 = scmp.ne.s32.totalorder %s467, %s468
      %p480 = scmp.eq.s32.totalorder %s44, 1
      %p481 = por %p479, %p480
      %p483 = scmp.ne.s32.totalorder %s468, %s482
      %p484 = scmp.eq.s32.totalorder %s44, 0
      %p485 = por %p483, %p484
      %s487 = sadd.s32 %s486, 1
      %p490 = scmp.eq.s32.totalorder %s38, 1
      %p491 = scmp.ne.s32.totalorder %s486, %s488
      %p492 = scmp.eq.s32.totalorder %s38, 0
      %p493 = por %p491, %p492
      %p494 = scmp.ne.s32.totalorder %s486, %s488
      %p495 = scmp.eq.s32.totalorder %s43, 1
      %p496 = por %p494, %p495
      %p497 = scmp.ne.s32.totalorder %s488, %s489
      %p498 = scmp.eq.s32.totalorder %s43, 0
      %p499 = por %p497, %p498
      %p500 = scmp.ne.s32.totalorder %s488, %s489
      %p501 = scmp.eq.s32.totalorder %s44, 1
      %p502 = por %p500, %p501
      %p504 = scmp.ne.s32.totalorder %s489, %s503
      %p505 = scmp.eq.s32.totalorder %s44, 0
      %p506 = por %p504, %p505
      %s508 = sadd.s32 %s507, 1
      %p511 = scmp.eq.s32.totalorder %s38, 1
      %p512 = scmp.ne.s32.totalorder %s507, %s509
      %p513 = scmp.eq.s32.totalorder %s38, 0
      %p514 = por %p512, %p513
      %p515 = scmp.ne.s32.totalorder %s507, %s509
      %p516 = scmp.eq.s32.totalorder %s43, 1
      %p517 = por %p515, %p516
      %p518 = scmp.ne.s32.totalorder %s509, %s510
      %p519 = scmp.eq.s32.totalorder %s43, 0
      %p520 = por %p518, %p519
      %p521 = scmp.ne.s32.totalorder %s509, %s510
      %p522 = scmp.eq.s32.totalorder %s44, 1
      %p523 = por %p521, %p522
      %p525 = scmp.ne.s32.totalorder %s510, %s524
      %p526 = scmp.eq.s32.totalorder %s44, 0
      %p527 = por %p525, %p526
      %s529 = sadd.s32 %s528, 1
      %p532 = scmp.eq.s32.totalorder %s38, 1
      %p533 = scmp.ne.s32.totalorder %s528, %s530
      %p534 = scmp.eq.s32.totalorder %s38, 0
      %p535 = por %p533, %p534
      %p536 = scmp.ne.s32.totalorder %s528, %s530
      %p537 = scmp.eq.s32.totalorder %s43, 1
      %p538 = por %p536, %p537
      %p539 = scmp.ne.s32.totalorder %s530, %s531
      %p540 = scmp.eq.s32.totalorder %s43, 0
      %p541 = por %p539, %p540
      %p542 = scmp.ne.s32.totalorder %s530, %s531
      %p543 = scmp.eq.s32.totalorder %s44, 1
      %p544 = por %p542, %p543
      %p546 = scmp.ne.s32.totalorder %s531, %s545
      %p547 = scmp.eq.s32.totalorder %s44, 0
      %p548 = por %p546, %p547
      %s550 = sadd.s32 %s549, 1
      %p553 = scmp.eq.s32.totalorder %s38, 1
      %p554 = scmp.ne.s32.totalorder %s549, %s551
      %p555 = scmp.eq.s32.totalorder %s38, 0
      %p556 = por %p554, %p555
      %p557 = scmp.ne.s32.totalorder %s549, %s551
      %p558 = scmp.eq.s32.totalorder %s43, 1
      %p559 = por %p557, %p558
      %p560 = scmp.ne.s32.totalorder %s551, %s552
      %p561 = scmp.eq.s32.totalorder %s43, 0
      %p562 = por %p560, %p561
      %p563 = scmp.ne.s32.totalorder %s551, %s552
      %p564 = scmp.eq.s32.totalorder %s44, 1
      %p565 = por %p563, %p564
      %p567 = scmp.ne.s32.totalorder %s552, %s566
      %p568 = scmp.eq.s32.totalorder %s44, 0
      %p569 = por %p567, %p568
      %s570 = ssub.s32 %s38, %s45
      %p571 = scmp.eq.s32.totalorder %s570, 0
      %s573 = sadd.s32 %s572, 1
      %s574 = scalar_select %p571, %s572, %s573
      %p577 = pneg %p571
      %p578 = scmp.eq.s32.totalorder %s38, 1
      %p579 = por %p577, %p578
      %p580 = scmp.ne.s32.totalorder %s572, %s575
      %p581 = scmp.eq.s32.totalorder %s38, 0
      %p582 = por %p580, %p581
      %p583 = scmp.ne.s32.totalorder %s572, %s575
      %p584 = scmp.eq.s32.totalorder %s43, 1
      %p585 = por %p583, %p584
      %p586 = scmp.ne.s32.totalorder %s575, %s576
      %p587 = scmp.eq.s32.totalorder %s43, 0
      %p588 = por %p586, %p587
      %p589 = scmp.ne.s32.totalorder %s575, %s576
      %p590 = scmp.eq.s32.totalorder %s44, 1
      %p591 = por %p589, %p590
      %p593 = scmp.ne.s32.totalorder %s576, %s592
      %p594 = scmp.eq.s32.totalorder %s44, 0
      %p595 = por %p593, %p594
      %s596 = ssub.s32 %s38, %s45
      %p597 = scmp.eq.s32.totalorder %s596, 0
      %s599 = sadd.s32 %s598, 1
      %s600 = scalar_select %p597, %s598, %s599
      %p603 = pneg %p597
      %p604 = scmp.eq.s32.totalorder %s38, 1
      %p605 = por %p603, %p604
      %p606 = scmp.ne.s32.totalorder %s598, %s601
      %p607 = scmp.eq.s32.totalorder %s38, 0
      %p608 = por %p606, %p607
      %p609 = scmp.ne.s32.totalorder %s598, %s601
      %p610 = scmp.eq.s32.totalorder %s43, 1
      %p611 = por %p609, %p610
      %p612 = scmp.ne.s32.totalorder %s601, %s602
      %p613 = scmp.eq.s32.totalorder %s43, 0
      %p614 = por %p612, %p613
      %p615 = scmp.ne.s32.totalorder %s601, %s602
      %p616 = scmp.eq.s32.totalorder %s44, 1
      %p617 = por %p615, %p616
      %p619 = scmp.ne.s32.totalorder %s602, %s618
      %p620 = scmp.eq.s32.totalorder %s44, 0
      %p621 = por %p619, %p620
      %p622 = scmp.le.s32.totalorder 1, %s38
      %p623 = scmp.lt.s32.totalorder %s38, 3
      %p624 = pnand %p622, %p623
      %p625 = pneg %p624
      // Predicated region
      $region9: #{reformer_decoder_layer.1} parent=5 // pred_check
        _
      $region10: #{reformer_decoder_layer.1} parent=5 // pred_check_branch
        %627 = sbr.rel (%p624) target = $region12
      $region11: #{reformer_decoder_layer.1} parent=5 // pred_region
        %s628 = ssub.s32 %s38, 1
        // Predicated region
        $region13: #{reformer_decoder_layer.1} parent=11 // pred_check
          %p629 = pneg %p163
        $region14: #{reformer_decoder_layer.1} parent=11 // pred_check_branch
          %631 = sbr.rel (%p629) target = $region16
        $region15: #{reformer_decoder_layer.1} parent=11 // pred_region
          _
        $region16: #{reformer_decoder_layer.1} parent=11 // pred_fallthru
          _
        // Predicated region
        $region17: #{reformer_decoder_layer.1} parent=11 // pred_check
          %p632 = pneg %p184
        $region18: #{reformer_decoder_layer.1} parent=11 // pred_check_branch
          %634 = sbr.rel (%p632) target = $region20
        $region19: #{reformer_decoder_layer.1} parent=11 // pred_region
          _
        $region20: #{reformer_decoder_layer.1} parent=11 // pred_fallthru
          _
        // Predicated region
        $region21: #{reformer_decoder_layer.1} parent=11 // pred_check
          %p635 = pneg %p205
        $region22: #{reformer_decoder_layer.1} parent=11 // pred_check_branch
          %637 = sbr.rel (%p635) target = $region24
        $region23: #{reformer_decoder_layer.1} parent=11 // pred_region
          _
        $region24: #{reformer_decoder_layer.1} parent=11 // pred_fallthru
          _
        // Predicated region
        $region25: #{reformer_decoder_layer.1} parent=11 // pred_check
          %p638 = pneg %p226
        $region26: #{reformer_decoder_layer.1} parent=11 // pred_check_branch
          %640 = sbr.rel (%p638) target = $region28
        $region27: #{reformer_decoder_layer.1} parent=11 // pred_region
          _
        $region28: #{reformer_decoder_layer.1} parent=11 // pred_fallthru
          _
        // Predicated region
        $region29: #{reformer_decoder_layer.1} parent=11 // pred_check
          %p641 = pneg %p247
        $region30: #{reformer_decoder_layer.1} parent=11 // pred_check_branch
          %643 = sbr.rel (%p641) target = $region32
        $region31: #{reformer_decoder_layer.1} parent=11 // pred_region
          _
        $region32: #{reformer_decoder_layer.1} parent=11 // pred_fallthru
          _
        // Predicated region
        $region33: #{reformer_decoder_layer.1} parent=11 // pred_check
          %p644 = pneg %p268
        $region34: #{reformer_decoder_layer.1} parent=11 // pred_check_branch
          %646 = sbr.rel (%p644) target = $region36
        $region35: #{reformer_decoder_layer.1} parent=11 // pred_region
          _
        $region36: #{reformer_decoder_layer.1} parent=11 // pred_fallthru
          _
        // Predicated region
        $region37: #{reformer_decoder_layer.1} parent=11 // pred_check
          %p647 = pneg %p289
        $region38: #{reformer_decoder_layer.1} parent=11 // pred_check_branch
          %649 = sbr.rel (%p647) target = $region40
        $region39: #{reformer_decoder_layer.1} parent=11 // pred_region
          _
        $region40: #{reformer_decoder_layer.1} parent=11 // pred_fallthru
          _
        // Predicated region
        $region41: #{reformer_decoder_layer.1} parent=11 // pred_check
          %p650 = pneg %p310
        $region42: #{reformer_decoder_layer.1} parent=11 // pred_check_branch
          %652 = sbr.rel (%p650) target = $region44
        $region43: #{reformer_decoder_layer.1} parent=11 // pred_region
          _
        $region44: #{reformer_decoder_layer.1} parent=11 // pred_fallthru
          _
        // Predicated region
        $region45: #{reformer_decoder_layer.1} parent=11 // pred_check
          %p653 = pneg %p331
        $region46: #{reformer_decoder_layer.1} parent=11 // pred_check_branch
          %655 = sbr.rel (%p653) target = $region48
        $region47: #{reformer_decoder_layer.1} parent=11 // pred_region
          _
        $region48: #{reformer_decoder_layer.1} parent=11 // pred_fallthru
          _
        // Predicated region
        $region49: #{reformer_decoder_layer.1} parent=11 // pred_check
          %p656 = pneg %p352
        $region50: #{reformer_decoder_layer.1} parent=11 // pred_check_branch
          %658 = sbr.rel (%p656) target = $region52
        $region51: #{reformer_decoder_layer.1} parent=11 // pred_region
          _
        $region52: #{reformer_decoder_layer.1} parent=11 // pred_fallthru
          _
        // Predicated region
        $region53: #{reformer_decoder_layer.1} parent=11 // pred_check
          %p659 = pneg %p373
        $region54: #{reformer_decoder_layer.1} parent=11 // pred_check_branch
          %661 = sbr.rel (%p659) target = $region56
        $region55: #{reformer_decoder_layer.1} parent=11 // pred_region
          _
        $region56: #{reformer_decoder_layer.1} parent=11 // pred_fallthru
          _
        // Predicated region
        $region57: #{reformer_decoder_layer.1} parent=11 // pred_check
          %p662 = pneg %p394
        $region58: #{reformer_decoder_layer.1} parent=11 // pred_check_branch
          %664 = sbr.rel (%p662) target = $region60
        $region59: #{reformer_decoder_layer.1} parent=11 // pred_region
          _
        $region60: #{reformer_decoder_layer.1} parent=11 // pred_fallthru
          _
        // Predicated region
        $region61: #{reformer_decoder_layer.1} parent=11 // pred_check
          %p665 = pneg %p415
        $region62: #{reformer_decoder_layer.1} parent=11 // pred_check_branch
          %667 = sbr.rel (%p665) target = $region64
        $region63: #{reformer_decoder_layer.1} parent=11 // pred_region
          _
        $region64: #{reformer_decoder_layer.1} parent=11 // pred_fallthru
          _
        // Predicated region
        $region65: #{reformer_decoder_layer.1} parent=11 // pred_check
          %p668 = pneg %p436
        $region66: #{reformer_decoder_layer.1} parent=11 // pred_check_branch
          %670 = sbr.rel (%p668) target = $region68
        $region67: #{reformer_decoder_layer.1} parent=11 // pred_region
          _
        $region68: #{reformer_decoder_layer.1} parent=11 // pred_fallthru
          _
        // Predicated region
        $region69: #{reformer_decoder_layer.1} parent=11 // pred_check
          %p671 = pneg %p457
        $region70: #{reformer_decoder_layer.1} parent=11 // pred_check_branch
          %673 = sbr.rel (%p671) target = $region72
        $region71: #{reformer_decoder_layer.1} parent=11 // pred_region
          _
        $region72: #{reformer_decoder_layer.1} parent=11 // pred_fallthru
          _
        // Predicated region
        $region73: #{reformer_decoder_layer.1} parent=11 // pred_check
          %p674 = pneg %p478
        $region74: #{reformer_decoder_layer.1} parent=11 // pred_check_branch
          %676 = sbr.rel (%p674) target = $region76
        $region75: #{reformer_decoder_layer.1} parent=11 // pred_region
          _
        $region76: #{reformer_decoder_layer.1} parent=11 // pred_fallthru
          _
        // Predicated region
        $region77: #{reformer_decoder_layer.1} parent=11 // pred_check
          %p677 = pneg %p499
        $region78: #{reformer_decoder_layer.1} parent=11 // pred_check_branch
          %679 = sbr.rel (%p677) target = $region80
        $region79: #{reformer_decoder_layer.1} parent=11 // pred_region
          _
        $region80: #{reformer_decoder_layer.1} parent=11 // pred_fallthru
          _
        // Predicated region
        $region81: #{reformer_decoder_layer.1} parent=11 // pred_check
          %p680 = pneg %p520
        $region82: #{reformer_decoder_layer.1} parent=11 // pred_check_branch
          %682 = sbr.rel (%p680) target = $region84
        $region83: #{reformer_decoder_layer.1} parent=11 // pred_region
          _
        $region84: #{reformer_decoder_layer.1} parent=11 // pred_fallthru
          _
        // Predicated region
        $region85: #{reformer_decoder_layer.1} parent=11 // pred_check
          %p683 = pneg %p541
        $region86: #{reformer_decoder_layer.1} parent=11 // pred_check_branch
          %685 = sbr.rel (%p683) target = $region88
        $region87: #{reformer_decoder_layer.1} parent=11 // pred_region
          _
        $region88: #{reformer_decoder_layer.1} parent=11 // pred_fallthru
          _
        // Predicated region
        $region89: #{reformer_decoder_layer.1} parent=11 // pred_check
          %p686 = pneg %p562
        $region90: #{reformer_decoder_layer.1} parent=11 // pred_check_branch
          %688 = sbr.rel (%p686) target = $region92
        $region91: #{reformer_decoder_layer.1} parent=11 // pred_region
          _
        $region92: #{reformer_decoder_layer.1} parent=11 // pred_fallthru
          _
      $region12: #{reformer_decoder_layer.1} parent=5 // pred_fallthru
        _
      %p689 = scmp.lt.s32.totalorder %s38, 2
      // Predicated region
      $region93: #{reformer_decoder_layer.1} parent=5 // pred_check
        %p690 = pneg %p689
      $region94: #{reformer_decoder_layer.1} parent=5 // pred_check_branch
        %692 = sbr.rel (%p690) target = $region96
      $region95: #{reformer_decoder_layer.1} parent=5 // pred_region
        // Predicated region
        $region97: #{reformer_decoder_layer.1} parent=95 // pred_check
          %p693 = pneg %p58
        $region98: #{reformer_decoder_layer.1} parent=95 // pred_check_branch
          %695 = sbr.rel (%p693) target = $region100
        $region99: #{reformer_decoder_layer.1} parent=95 // pred_region
          %p696 = scmp.lt.s32.totalorder %s38, 1
          %s697 = scalar_select %p696, %s38, 1
          %s698 = smul.addr %s697, 8
          %s699 = scalar_lea.vmem %s0, %s698
        $region100: #{reformer_decoder_layer.1} parent=95 // pred_fallthru
          _
        // Predicated region
        $region101: #{reformer_decoder_layer.1} parent=95 // pred_check
          %p700 = pneg %p84
        $region102: #{reformer_decoder_layer.1} parent=95 // pred_check_branch
          %702 = sbr.rel (%p700) target = $region104
        $region103: #{reformer_decoder_layer.1} parent=95 // pred_region
          %p703 = scmp.lt.s32.totalorder %s38, 1
          %s704 = scalar_select %p703, %s38, 1
          %s705 = smul.addr %s704, 8
          %s706 = scalar_lea.vmem %s1, %s705
        $region104: #{reformer_decoder_layer.1} parent=95 // pred_fallthru
          _
        // Predicated region
        $region105: #{reformer_decoder_layer.1} parent=95 // pred_check
          %p707 = pneg %p110
        $region106: #{reformer_decoder_layer.1} parent=95 // pred_check_branch
          %709 = sbr.rel (%p707) target = $region108
        $region107: #{reformer_decoder_layer.1} parent=95 // pred_region
          %p710 = scmp.lt.s32.totalorder %s38, 1
          %s711 = scalar_select %p710, %s38, 1
          %s712 = smul.addr %s711, 8
          %s713 = scalar_lea.vmem %s2, %s712
        $region108: #{reformer_decoder_layer.1} parent=95 // pred_fallthru
          _
        // Predicated region
        $region109: #{reformer_decoder_layer.1} parent=95 // pred_check
          %p714 = pneg %p136
        $region110: #{reformer_decoder_layer.1} parent=95 // pred_check_branch
          %716 = sbr.rel (%p714) target = $region112
        $region111: #{reformer_decoder_layer.1} parent=95 // pred_region
          %p717 = scmp.lt.s32.totalorder %s38, 1
          %s718 = scalar_select %p717, %s38, 1
          %s719 = scalar_lea.vmem %s3, %s718
        $region112: #{reformer_decoder_layer.1} parent=95 // pred_fallthru
          _
      $region96: #{reformer_decoder_layer.1} parent=5 // pred_fallthru
        _
      %p720 = scmp.le.s32.totalorder 1, %s38
      %p721 = scmp.lt.s32.totalorder %s38, 3
      %p722 = pnand %p720, %p721
      %p723 = pneg %p722
      // Predicated region
      $region113: #{reformer_decoder_layer.1} parent=5 // pred_check
        _
      $region114: #{reformer_decoder_layer.1} parent=5 // pred_check_branch
        %725 = sbr.rel (%p722) target = $region116
      $region115: #{reformer_decoder_layer.1} parent=5 // pred_region
        %s726 = ssub.s32 %s38, 1
        %p727 = scmp.lt.s32.totalorder %s43, 1
        %s728 = scalar_select %p727, %s43, 1
        %s729 = smul.addr %s728, 8
        %s730 = scalar_lea.vmem %s0, %s729
        %p731 = pneg %p64
        %p732 = pneg %p61
        %p733 = scmp.lt.s32.totalorder %s43, 1
        %s734 = scalar_select %p733, %s43, 1
        %s735 = smul.addr %s734, 8
        %s736 = scalar_lea.vmem %s1, %s735
        %p737 = pneg %p90
        %p738 = pneg %p87
        %p739 = scmp.lt.s32.totalorder %s43, 1
        %s740 = scalar_select %p739, %s43, 1
        %s741 = smul.addr %s740, 8
        %s742 = scalar_lea.vmem %s2, %s741
        %p743 = pneg %p116
        %p744 = pneg %p113
        %p745 = scmp.lt.s32.totalorder %s43, 1
        %s746 = scalar_select %p745, %s43, 1
        %s747 = scalar_lea.vmem %s3, %s746
        %p748 = pneg %p142
        %p749 = pneg %p139
        %p750 = pneg %p163
        %p751 = pneg %p160
        %p752 = pneg %p184
        %p753 = pneg %p181
        %p754 = pneg %p205
        %p755 = pneg %p202
        %p756 = pneg %p226
        %p757 = pneg %p223
        %p758 = pneg %p247
        %p759 = pneg %p244
        %p760 = pneg %p268
        %p761 = pneg %p265
        %p762 = pneg %p289
        %p763 = pneg %p286
        %p764 = pneg %p310
        %p765 = pneg %p307
        %p766 = pneg %p331
        %p767 = pneg %p328
        %p768 = pneg %p352
        %p769 = pneg %p349
        %p770 = pneg %p373
        %p771 = pneg %p370
        %p772 = pneg %p394
        %p773 = pneg %p391
        %p774 = pneg %p415
        %p775 = pneg %p412
        %p776 = pneg %p436
        %p777 = pneg %p433
        %p778 = pneg %p457
        %p779 = pneg %p454
        %p780 = pneg %p478
        %p781 = pneg %p475
        %p782 = pneg %p499
        %p783 = pneg %p496
        %p784 = pneg %p520
        %p785 = pneg %p517
        %p786 = pneg %p541
        %p787 = pneg %p538
        %p788 = pneg %p562
        %p789 = pneg %p559
        %p790 = pneg %p588
        %p791 = pneg %p585
        %s792 = sand.u32 %s575, 1
        %s793 = scalar_lea.sflag [#allocation3], %s792
        %s794 = sand.u32 %s575, 1
        %s795 = smul.addr %s794, 8
        %s796 = scalar_lea.vmem [#allocation2], %s795
        %p797 = pneg %p614
        %p798 = pneg %p611
        %s799 = sand.u32 %s601, 1
        %s800 = scalar_lea.sflag [#allocation5], %s799
        %s801 = sand.u32 %s601, 1
        %s802 = smul.addr %s801, 8
        %s803 = scalar_lea.vmem [#allocation4], %s802
        %p804 = scmp.lt.s32.totalorder %s43, 1
        %s805 = scalar_select %p804, %s43, 1
        %s806 = smul.addr %s805, 8
        %s807 = scalar_lea.vmem %s0, %s806
        %p808 = scmp.lt.s32.totalorder %s43, 1
        %s809 = scalar_select %p808, %s43, 1
        %s810 = smul.addr %s809, 8
        %s811 = scalar_lea.vmem %s1, %s810
        %p812 = scmp.lt.s32.totalorder %s43, 1
        %s813 = scalar_select %p812, %s43, 1
        %s814 = smul.addr %s813, 8
        %s815 = scalar_lea.vmem %s2, %s814
        %p816 = scmp.lt.s32.totalorder %s43, 1
        %s817 = scalar_select %p816, %s43, 1
        %s818 = scalar_lea.vmem %s3, %s817
        %v819 = vld [vmem:[%s807] sm:$0xff]
        %v820 = vld [vmem:[%s4] sm:$0xff]
        %v821 = vld [vmem:[%s4 + $0x8] sm:$0xff]
        %v822 = vld [vmem:[%s4 + $0x10] sm:$0xff]
        %v823 = vld [vmem:[%s4 + $0x18] sm:$0xff]
        %v824 = vld [vmem:[%s4 + $0x20] sm:$0xff]
        %v825 = vld [vmem:[%s4 + $0x28] sm:$0xff]
        %v826 = vld [vmem:[%s4 + $0x30] sm:$0xff]
        %v827 = vld [vmem:[%s4 + $0x38] sm:$0xff]
        %v828 = vld [vmem:[%s5] sm:$0x1]
        %v829 = vld [vmem:[%s5 + $0x1] sm:$0x1]
        %v832 = vlaneseq
        %v833 = vshrl.u32 %v832, 7
        %v834 = vsub.s32 0, %v833
        %v835 = vrot.slane %v828, %v834
        %v836 = vlaneseq
        %v837 = vshrl.u32 %v836, 7
        %v838 = vsub.s32 0, %v837
        %v839 = vrot.slane %v829, %v838
        %vm842 = vcmask 261120
        %v844 = vsel %vm842, %v819, 0
        %846 = vmatprep.subr.mxu0 0.0
        %847 = vmatpush1.msra.mxu0 %v820
        %848 = vmatprep.subr.mxu0 0.0
        %849 = vmatpush1.msra.mxu0 %v821
        %850 = vmatprep.subr.mxu0 0.0
        %851 = vmatpush1.msra.mxu0 %v822
        %852 = vmatprep.subr.mxu0 0.0
        %853 = vmatpush1.msra.mxu0 %v823
        %854 = vmatprep.subr.mxu0 0.0
        %855 = vmatpush1.msra.mxu0 0.0
        %856 = vmatprep.subr.mxu0 0.0
        %857 = vmatpush1.msra.mxu0 0.0
        %858 = vmatprep.subr.mxu0 0.0
        %859 = vmatpush1.msra.mxu0 0.0
        %860 = vmatprep.subr.mxu0 0.0
        %861 = vmatpush1.msra.mxu0 0.0
        %862 = vmatprep.subr.mxu0 0.0
        %863 = vmatpush1.msra.mxu0 0.0
        %864 = vmatprep.subr.mxu0 0.0
        %865 = vmatpush1.msra.mxu0 0.0
        %866 = vmatprep.subr.mxu0 0.0
        %867 = vmatpush1.msra.mxu0 0.0
        %868 = vmatprep.subr.mxu0 0.0
        %869 = vmatpush1.msra.mxu0 0.0
        %870 = vmatprep.subr.mxu0 0.0
        %871 = vmatpush1.msra.mxu0 0.0
        %872 = vmatprep.subr.mxu0 0.0
        %873 = vmatpush1.msra.mxu0 0.0
        %874 = vmatprep.subr.mxu0 0.0
        %875 = vmatpush1.msra.mxu0 0.0
        %876 = vmatprep.subr.mxu0 0.0
        %877 = vmatpush1.msra.mxu0 0.0
        %878 = vmatprep.subr.mxu0 0.0
        %879 = vmatpush1.msra.mxu0 0.0
        %880 = vmatprep.subr.mxu0 0.0
        %881 = vmatpush1.msra.mxu0 0.0
        %882 = vmatprep.subr.mxu0 0.0
        %883 = vmatpush1.msra.mxu0 0.0
        %884 = vmatprep.subr.mxu0 0.0
        %885 = vmatpush1.msra.mxu0 0.0
        %886 = vmatprep.subr.mxu0 0.0
        %887 = vmatpush1.msra.mxu0 0.0
        %888 = vmatprep.subr.mxu0 0.0
        %889 = vmatpush1.msra.mxu0 0.0
        %890 = vmatprep.subr.mxu0 0.0
        %891 = vmatpush1.msra.mxu0 0.0
        %892 = vmatprep.subr.mxu0 0.0
        %893 = vmatpush1.msra.mxu0 0.0
        %894 = vmatprep.subr.mxu0 0.0
        %895 = vmatpush1.msra.mxu0 0.0
        %896 = vmatprep.subr.mxu0 0.0
        %897 = vmatpush1.msra.mxu0 0.0
        %898 = vmatprep.subr.mxu0 0.0
        %899 = vmatpush1.msra.mxu0 0.0
        %900 = vmatprep.subr.mxu0 0.0
        %901 = vmatpush1.msra.mxu0 0.0
        %902 = vmatprep.subr.mxu0 0.0
        %903 = vmatpush1.msra.mxu0 0.0
        %904 = vmatprep.subr.mxu0 0.0
        %905 = vmatpush1.msra.mxu0 0.0
        %906 = vmatprep.subr.mxu0 0.0
        %907 = vmatpush1.msra.mxu0 0.0
        %908 = vmatprep.subr.mxu0 0.0
        %909 = vmatpush1.msra.mxu0 0.0
        %910 = vmatprep.mubr.f32.mxu0 0.0
        %911 = vmatmul.mubr.f32.gmra.mrb[0].mxu0 %v844
        %v912 = vpop.f32.mrb[0].mxu0
        %v913 = vadd.f32 %v835, %v912
        %v914 = vpop.f32.mrb[0].mxu0
        %915 = vdwg.mxu0
        %916 = vmatprep.subr.mxu0 0.0
        %917 = vmatpush1.msra.mxu0 %v824
        %918 = vmatprep.subr.mxu0 0.0
        %919 = vmatpush1.msra.mxu0 %v825
        %920 = vmatprep.subr.mxu0 0.0
        %921 = vmatpush1.msra.mxu0 %v826
        %922 = vmatprep.subr.mxu0 0.0
        %923 = vmatpush1.msra.mxu0 %v827
        %924 = vmatprep.subr.mxu0 0.0
        %925 = vmatpush1.msra.mxu0 0.0
        %926 = vmatprep.subr.mxu0 0.0
        %927 = vmatpush1.msra.mxu0 0.0
        %928 = vmatprep.subr.mxu0 0.0
        %929 = vmatpush1.msra.mxu0 0.0
        %930 = vmatprep.subr.mxu0 0.0
        %931 = vmatpush1.msra.mxu0 0.0
        %932 = vmatprep.subr.mxu0 0.0
        %933 = vmatpush1.msra.mxu0 0.0
        %934 = vmatprep.subr.mxu0 0.0
        %935 = vmatpush1.msra.mxu0 0.0
        %936 = vmatprep.subr.mxu0 0.0
        %937 = vmatpush1.msra.mxu0 0.0
        %938 = vmatprep.subr.mxu0 0.0
        %939 = vmatpush1.msra.mxu0 0.0
        %940 = vmatprep.subr.mxu0 0.0
        %941 = vmatpush1.msra.mxu0 0.0
        %942 = vmatprep.subr.mxu0 0.0
        %943 = vmatpush1.msra.mxu0 0.0
        %944 = vmatprep.subr.mxu0 0.0
        %945 = vmatpush1.msra.mxu0 0.0
        %946 = vmatprep.subr.mxu0 0.0
        %947 = vmatpush1.msra.mxu0 0.0
        %948 = vmatprep.subr.mxu0 0.0
        %949 = vmatpush1.msra.mxu0 0.0
        %950 = vmatprep.subr.mxu0 0.0
        %951 = vmatpush1.msra.mxu0 0.0
        %952 = vmatprep.subr.mxu0 0.0
        %953 = vmatpush1.msra.mxu0 0.0
        %954 = vmatprep.subr.mxu0 0.0
        %955 = vmatpush1.msra.mxu0 0.0
        %956 = vmatprep.subr.mxu0 0.0
        %957 = vmatpush1.msra.mxu0 0.0
        %958 = vmatprep.subr.mxu0 0.0
        %959 = vmatpush1.msra.mxu0 0.0
        %960 = vmatprep.subr.mxu0 0.0
        %961 = vmatpush1.msra.mxu0 0.0
        %962 = vmatprep.subr.mxu0 0.0
        %963 = vmatpush1.msra.mxu0 0.0
        %964 = vmatprep.subr.mxu0 0.0
        %965 = vmatpush1.msra.mxu0 0.0
        %966 = vmatprep.subr.mxu0 0.0
        %967 = vmatpush1.msra.mxu0 0.0
        %968 = vmatprep.subr.mxu0 0.0
        %969 = vmatpush1.msra.mxu0 0.0
        %970 = vmatprep.subr.mxu0 0.0
        %971 = vmatpush1.msra.mxu0 0.0
        %972 = vmatprep.subr.mxu0 0.0
        %973 = vmatpush1.msra.mxu0 0.0
        %974 = vmatprep.subr.mxu0 0.0
        %975 = vmatpush1.msra.mxu0 0.0
        %976 = vmatprep.subr.mxu0 0.0
        %977 = vmatpush1.msra.mxu0 0.0
        %978 = vmatprep.subr.mxu0 0.0
        %979 = vmatpush1.msra.mxu0 0.0
        %980 = vmatprep.mubr.f32.mxu0 0.0
        %981 = vmatmul.mubr.f32.gmra.mrb[0].mxu0 %v844
        %v982 = vpop.f32.mrb[0].mxu0
        %v983 = vadd.f32 %v839, %v982
        %v984 = vpop.f32.mrb[0].mxu0
        %985 = vdwg.mxu0
        %987 = vrot.lane.b32.xlu0 %v913, 112
        %v988 = vpop.permute.xlu0 %987
        %vm989 = vcmask 130048
        %v990 = vsel %vm989, %v913, 0
        %v992 = vsel %vm989, %v988, 0
        %994 = vmatprep.subr.mxu0 0.0
        %995 = vmatpush1.xpose.msra.mxu0 %v992
        %996 = vmatprep.subr.mxu0 0.0
        %997 = vmatpush1.xpose.msra.mxu0 0.0
        %998 = vmatprep.subr.mxu0 0.0
        %999 = vmatpush1.xpose.msra.mxu0 0.0
        %1000 = vmatprep.subr.mxu0 0.0
        %1001 = vmatpush1.xpose.msra.mxu0 0.0
        %1002 = vmatprep.subr.mxu0 0.0
        %1003 = vmatpush1.xpose.msra.mxu0 0.0
        %1004 = vmatprep.subr.mxu0 0.0
        %1005 = vmatpush1.xpose.msra.mxu0 0.0
        %1006 = vmatprep.subr.mxu0 0.0
        %1007 = vmatpush1.xpose.msra.mxu0 0.0
        %1008 = vmatprep.subr.mxu0 0.0
        %1009 = vmatpush1.xpose.msra.mxu0 0.0
        %1010 = vmatprep.subr.mxu0 0.0
        %1011 = vmatpush1.xpose.msra.mxu0 0.0
        %1012 = vmatprep.subr.mxu0 0.0
        %1013 = vmatpush1.xpose.msra.mxu0 0.0
        %1014 = vmatprep.subr.mxu0 0.0
        %1015 = vmatpush1.xpose.msra.mxu0 0.0
        %1016 = vmatprep.subr.mxu0 0.0
        %1017 = vmatpush1.xpose.msra.mxu0 0.0
        %1018 = vmatprep.subr.mxu0 0.0
        %1019 = vmatpush1.xpose.msra.mxu0 0.0
        %1020 = vmatprep.subr.mxu0 0.0
        %1021 = vmatpush1.xpose.msra.mxu0 0.0
        %1022 = vmatprep.subr.mxu0 0.0
        %1023 = vmatpush1.xpose.msra.mxu0 0.0
        %1024 = vmatprep.subr.mxu0 0.0
        %1025 = vmatpush1.xpose.msra.mxu0 0.0
        %1026 = vmatprep.subr.mxu0 0.0
        %1027 = vmatpush1.xpose.msra.mxu0 0.0
        %1028 = vmatprep.subr.mxu0 0.0
        %1029 = vmatpush1.xpose.msra.mxu0 0.0
        %1030 = vmatprep.subr.mxu0 0.0
        %1031 = vmatpush1.xpose.msra.mxu0 0.0
        %1032 = vmatprep.subr.mxu0 0.0
        %1033 = vmatpush1.xpose.msra.mxu0 0.0
        %1034 = vmatprep.subr.mxu0 0.0
        %1035 = vmatpush1.xpose.msra.mxu0 0.0
        %1036 = vmatprep.subr.mxu0 0.0
        %1037 = vmatpush1.xpose.msra.mxu0 0.0
        %1038 = vmatprep.subr.mxu0 0.0
        %1039 = vmatpush1.xpose.msra.mxu0 0.0
        %1040 = vmatprep.subr.mxu0 0.0
        %1041 = vmatpush1.xpose.msra.mxu0 0.0
        %1042 = vmatprep.subr.mxu0 0.0
        %1043 = vmatpush1.xpose.msra.mxu0 0.0
        %1044 = vmatprep.subr.mxu0 0.0
        %1045 = vmatpush1.xpose.msra.mxu0 0.0
        %1046 = vmatprep.subr.mxu0 0.0
        %1047 = vmatpush1.xpose.msra.mxu0 0.0
        %1048 = vmatprep.subr.mxu0 0.0
        %1049 = vmatpush1.xpose.msra.mxu0 0.0
        %1050 = vmatprep.subr.mxu0 0.0
        %1051 = vmatpush1.xpose.msra.mxu0 0.0
        %1052 = vmatprep.subr.mxu0 0.0
        %1053 = vmatpush1.xpose.msra.mxu0 0.0
        %1054 = vmatprep.subr.mxu0 0.0
        %1055 = vmatpush1.xpose.msra.mxu0 0.0
        %1056 = vmatprep.subr.mxu0 0.0
        %1057 = vmatpush1.xpose.msra.mxu0 0.0
        %1058 = vmatprep.mubr.f32.mxu0 0.0
        %1059 = vmatmul.mubr.f32.gmra.mrb[0].mxu0 %v990
        %v1060 = vpop.f32.mrb[0].mxu0
        %v1061 = vadd.f32 0.0, %v1060
        %v1062 = vpop.f32.mrb[0].mxu0
        %1063 = vdwg.mxu0
        %1065 = vrot.lane.b32.xlu0 %v983, 112
        %v1066 = vpop.permute.xlu0 %1065
        %v1067 = vsel %vm989, %v983, 0
        %v1069 = vsel %vm989, %v1066, 0
        %1071 = vmatprep.subr.mxu0 0.0
        %1072 = vmatpush1.xpose.msra.mxu0 %v1069
        %1073 = vmatprep.subr.mxu0 0.0
        %1074 = vmatpush1.xpose.msra.mxu0 0.0
        %1075 = vmatprep.subr.mxu0 0.0
        %1076 = vmatpush1.xpose.msra.mxu0 0.0
        %1077 = vmatprep.subr.mxu0 0.0
        %1078 = vmatpush1.xpose.msra.mxu0 0.0
        %1079 = vmatprep.subr.mxu0 0.0
        %1080 = vmatpush1.xpose.msra.mxu0 0.0
        %1081 = vmatprep.subr.mxu0 0.0
        %1082 = vmatpush1.xpose.msra.mxu0 0.0
        %1083 = vmatprep.subr.mxu0 0.0
        %1084 = vmatpush1.xpose.msra.mxu0 0.0
        %1085 = vmatprep.subr.mxu0 0.0
        %1086 = vmatpush1.xpose.msra.mxu0 0.0
        %1087 = vmatprep.subr.mxu0 0.0
        %1088 = vmatpush1.xpose.msra.mxu0 0.0
        %1089 = vmatprep.subr.mxu0 0.0
        %1090 = vmatpush1.xpose.msra.mxu0 0.0
        %1091 = vmatprep.subr.mxu0 0.0
        %1092 = vmatpush1.xpose.msra.mxu0 0.0
        %1093 = vmatprep.subr.mxu0 0.0
        %1094 = vmatpush1.xpose.msra.mxu0 0.0
        %1095 = vmatprep.subr.mxu0 0.0
        %1096 = vmatpush1.xpose.msra.mxu0 0.0
        %1097 = vmatprep.subr.mxu0 0.0
        %1098 = vmatpush1.xpose.msra.mxu0 0.0
        %1099 = vmatprep.subr.mxu0 0.0
        %1100 = vmatpush1.xpose.msra.mxu0 0.0
        %1101 = vmatprep.subr.mxu0 0.0
        %1102 = vmatpush1.xpose.msra.mxu0 0.0
        %1103 = vmatprep.subr.mxu0 0.0
        %1104 = vmatpush1.xpose.msra.mxu0 0.0
        %1105 = vmatprep.subr.mxu0 0.0
        %1106 = vmatpush1.xpose.msra.mxu0 0.0
        %1107 = vmatprep.subr.mxu0 0.0
        %1108 = vmatpush1.xpose.msra.mxu0 0.0
        %1109 = vmatprep.subr.mxu0 0.0
        %1110 = vmatpush1.xpose.msra.mxu0 0.0
        %1111 = vmatprep.subr.mxu0 0.0
        %1112 = vmatpush1.xpose.msra.mxu0 0.0
        %1113 = vmatprep.subr.mxu0 0.0
        %1114 = vmatpush1.xpose.msra.mxu0 0.0
        %1115 = vmatprep.subr.mxu0 0.0
        %1116 = vmatpush1.xpose.msra.mxu0 0.0
        %1117 = vmatprep.subr.mxu0 0.0
        %1118 = vmatpush1.xpose.msra.mxu0 0.0
        %1119 = vmatprep.subr.mxu0 0.0
        %1120 = vmatpush1.xpose.msra.mxu0 0.0
        %1121 = vmatprep.subr.mxu0 0.0
        %1122 = vmatpush1.xpose.msra.mxu0 0.0
        %1123 = vmatprep.subr.mxu0 0.0
        %1124 = vmatpush1.xpose.msra.mxu0 0.0
        %1125 = vmatprep.subr.mxu0 0.0
        %1126 = vmatpush1.xpose.msra.mxu0 0.0
        %1127 = vmatprep.subr.mxu0 0.0
        %1128 = vmatpush1.xpose.msra.mxu0 0.0
        %1129 = vmatprep.subr.mxu0 0.0
        %1130 = vmatpush1.xpose.msra.mxu0 0.0
        %1131 = vmatprep.subr.mxu0 0.0
        %1132 = vmatpush1.xpose.msra.mxu0 0.0
        %1133 = vmatprep.subr.mxu0 0.0
        %1134 = vmatpush1.xpose.msra.mxu0 0.0
        %1135 = vmatprep.mubr.f32.mxu0 0.0
        %1136 = vmatmul.mubr.f32.gmra.mrb[0].mxu0 %v1067
        %v1137 = vpop.f32.mrb[0].mxu0
        %v1138 = vadd.f32 0.0, %v1137
        %v1139 = vpop.f32.mrb[0].mxu0
        %1140 = vdwg.mxu0
        %v1141 = vlaneseq
        %v1142 = vshrl.u32 %v1141, 7
        %v1143 = vlaneseq
        %v1144 = vand.u32 %v1143, 127
        %vm1145 = vcmp.le.s32.totalorder %v1144, %v1142
        %v1146 = vsel %vm1145, %v1061, -1e+20
        %v1147 = vsel %vm1145, %v1138, -1e+20
        %vm1148 = vcmask 64512
        %v1149 = vsel %vm1148, %v1146, -inf
        %1150 = vmax.xlane.f32.xlu0 %v1149
        %v1151 = vpop.xlane.xlu0 %1150
        %v1152 = vsel %vm1148, %v1147, -inf
        %1153 = vmax.xlane.f32.xlu0 %v1152
        %v1154 = vpop.xlane.xlu0 %1153
        %v1155 = vsub.f32 %v1146, %v1151
        %v1156 = vsub.f32 %v1147, %v1154
        %v1157 = vmul.f32 %v1155, 1.442695
        %v1158 = vpow.pop %v1157
        %v1159 = vmul.f32 %v1156, 1.442695
        %v1160 = vpow.pop %v1159
        %v1161 = vsel %vm1148, %v1158, 0.0
        %1162 = vadd.xlane.f32.xlu0 %v1161
        %v1163 = vpop.xlane.xlu0 %1162
        %v1164 = vsel %vm1148, %v1160, 0.0
        %1165 = vadd.xlane.f32.xlu0 %v1164
        %v1166 = vpop.xlane.xlu0 %1165
        %v1167 = vrcp.pop %v1163
        %v1168 = vrcp.pop %v1166
        %v1169 = vmul.f32 %v1158, %v1167
        %v1170 = vmul.f32 %v1160, %v1168
        %1171 = vrot.lane.b32.xlu0 %v913, 96
        %v1172 = vpop.permute.xlu0 %1171
        %v1175 = vsel %vm1148, %v1169, 0
        %1177 = vmatprep.subr.mxu0 0.0
        %1178 = vmatpush1.msra.mxu0 %v1172
        %1179 = vmatprep.subr.mxu0 0.0
        %1180 = vmatpush1.msra.mxu0 0.0
        %1181 = vmatprep.subr.mxu0 0.0
        %1182 = vmatpush1.msra.mxu0 0.0
        %1183 = vmatprep.subr.mxu0 0.0
        %1184 = vmatpush1.msra.mxu0 0.0
        %1185 = vmatprep.subr.mxu0 0.0
        %1186 = vmatpush1.msra.mxu0 0.0
        %1187 = vmatprep.subr.mxu0 0.0
        %1188 = vmatpush1.msra.mxu0 0.0
        %1189 = vmatprep.subr.mxu0 0.0
        %1190 = vmatpush1.msra.mxu0 0.0
        %1191 = vmatprep.subr.mxu0 0.0
        %1192 = vmatpush1.msra.mxu0 0.0
        %1193 = vmatprep.subr.mxu0 0.0
        %1194 = vmatpush1.msra.mxu0 0.0
        %1195 = vmatprep.subr.mxu0 0.0
        %1196 = vmatpush1.msra.mxu0 0.0
        %1197 = vmatprep.subr.mxu0 0.0
        %1198 = vmatpush1.msra.mxu0 0.0
        %1199 = vmatprep.subr.mxu0 0.0
        %1200 = vmatpush1.msra.mxu0 0.0
        %1201 = vmatprep.subr.mxu0 0.0
        %1202 = vmatpush1.msra.mxu0 0.0
        %1203 = vmatprep.subr.mxu0 0.0
        %1204 = vmatpush1.msra.mxu0 0.0
        %1205 = vmatprep.subr.mxu0 0.0
        %1206 = vmatpush1.msra.mxu0 0.0
        %1207 = vmatprep.subr.mxu0 0.0
        %1208 = vmatpush1.msra.mxu0 0.0
        %1209 = vmatprep.subr.mxu0 0.0
        %1210 = vmatpush1.msra.mxu0 0.0
        %1211 = vmatprep.subr.mxu0 0.0
        %1212 = vmatpush1.msra.mxu0 0.0
        %1213 = vmatprep.subr.mxu0 0.0
        %1214 = vmatpush1.msra.mxu0 0.0
        %1215 = vmatprep.subr.mxu0 0.0
        %1216 = vmatpush1.msra.mxu0 0.0
        %1217 = vmatprep.subr.mxu0 0.0
        %1218 = vmatpush1.msra.mxu0 0.0
        %1219 = vmatprep.subr.mxu0 0.0
        %1220 = vmatpush1.msra.mxu0 0.0
        %1221 = vmatprep.subr.mxu0 0.0
        %1222 = vmatpush1.msra.mxu0 0.0
        %1223 = vmatprep.subr.mxu0 0.0
        %1224 = vmatpush1.msra.mxu0 0.0
        %1225 = vmatprep.subr.mxu0 0.0
        %1226 = vmatpush1.msra.mxu0 0.0
        %1227 = vmatprep.subr.mxu0 0.0
        %1228 = vmatpush1.msra.mxu0 0.0
        %1229 = vmatprep.subr.mxu0 0.0
        %1230 = vmatpush1.msra.mxu0 0.0
        %1231 = vmatprep.subr.mxu0 0.0
        %1232 = vmatpush1.msra.mxu0 0.0
        %1233 = vmatprep.subr.mxu0 0.0
        %1234 = vmatpush1.msra.mxu0 0.0
        %1235 = vmatprep.subr.mxu0 0.0
        %1236 = vmatpush1.msra.mxu0 0.0
        %1237 = vmatprep.subr.mxu0 0.0
        %1238 = vmatpush1.msra.mxu0 0.0
        %1239 = vmatprep.subr.mxu0 0.0
        %1240 = vmatpush1.msra.mxu0 0.0
        %1241 = vmatprep.mubr.f32.mxu0 0.0
        %1242 = vmatmul.mubr.f32.gmra.mrb[0].mxu0 %v1175
        %v1243 = vpop.f32.mrb[0].mxu0
        %v1244 = vadd.f32 0.0, %v1243
        %v1245 = vpop.f32.mrb[0].mxu0
        %1246 = vdwg.mxu0
        %1247 = vrot.lane.b32.xlu0 %v983, 96
        %v1248 = vpop.permute.xlu0 %1247
        %v1251 = vsel %vm1148, %v1170, 0
        %1253 = vmatprep.subr.mxu0 0.0
        %1254 = vmatpush1.msra.mxu0 %v1248
        %1255 = vmatprep.subr.mxu0 0.0
        %1256 = vmatpush1.msra.mxu0 0.0
        %1257 = vmatprep.subr.mxu0 0.0
        %1258 = vmatpush1.msra.mxu0 0.0
        %1259 = vmatprep.subr.mxu0 0.0
        %1260 = vmatpush1.msra.mxu0 0.0
        %1261 = vmatprep.subr.mxu0 0.0
        %1262 = vmatpush1.msra.mxu0 0.0
        %1263 = vmatprep.subr.mxu0 0.0
        %1264 = vmatpush1.msra.mxu0 0.0
        %1265 = vmatprep.subr.mxu0 0.0
        %1266 = vmatpush1.msra.mxu0 0.0
        %1267 = vmatprep.subr.mxu0 0.0
        %1268 = vmatpush1.msra.mxu0 0.0
        %1269 = vmatprep.subr.mxu0 0.0
        %1270 = vmatpush1.msra.mxu0 0.0
        %1271 = vmatprep.subr.mxu0 0.0
        %1272 = vmatpush1.msra.mxu0 0.0
        %1273 = vmatprep.subr.mxu0 0.0
        %1274 = vmatpush1.msra.mxu0 0.0
        %1275 = vmatprep.subr.mxu0 0.0
        %1276 = vmatpush1.msra.mxu0 0.0
        %1277 = vmatprep.subr.mxu0 0.0
        %1278 = vmatpush1.msra.mxu0 0.0
        %1279 = vmatprep.subr.mxu0 0.0
        %1280 = vmatpush1.msra.mxu0 0.0
        %1281 = vmatprep.subr.mxu0 0.0
        %1282 = vmatpush1.msra.mxu0 0.0
        %1283 = vmatprep.subr.mxu0 0.0
        %1284 = vmatpush1.msra.mxu0 0.0
        %1285 = vmatprep.subr.mxu0 0.0
        %1286 = vmatpush1.msra.mxu0 0.0
        %1287 = vmatprep.subr.mxu0 0.0
        %1288 = vmatpush1.msra.mxu0 0.0
        %1289 = vmatprep.subr.mxu0 0.0
        %1290 = vmatpush1.msra.mxu0 0.0
        %1291 = vmatprep.subr.mxu0 0.0
        %1292 = vmatpush1.msra.mxu0 0.0
        %1293 = vmatprep.subr.mxu0 0.0
        %1294 = vmatpush1.msra.mxu0 0.0
        %1295 = vmatprep.subr.mxu0 0.0
        %1296 = vmatpush1.msra.mxu0 0.0
        %1297 = vmatprep.subr.mxu0 0.0
        %1298 = vmatpush1.msra.mxu0 0.0
        %1299 = vmatprep.subr.mxu0 0.0
        %1300 = vmatpush1.msra.mxu0 0.0
        %1301 = vmatprep.subr.mxu0 0.0
        %1302 = vmatpush1.msra.mxu0 0.0
        %1303 = vmatprep.subr.mxu0 0.0
        %1304 = vmatpush1.msra.mxu0 0.0
        %1305 = vmatprep.subr.mxu0 0.0
        %1306 = vmatpush1.msra.mxu0 0.0
        %1307 = vmatprep.subr.mxu0 0.0
        %1308 = vmatpush1.msra.mxu0 0.0
        %1309 = vmatprep.subr.mxu0 0.0
        %1310 = vmatpush1.msra.mxu0 0.0
        %1311 = vmatprep.subr.mxu0 0.0
        %1312 = vmatpush1.msra.mxu0 0.0
        %1313 = vmatprep.subr.mxu0 0.0
        %1314 = vmatpush1.msra.mxu0 0.0
        %1315 = vmatprep.subr.mxu0 0.0
        %1316 = vmatpush1.msra.mxu0 0.0
        %1317 = vmatprep.mubr.f32.mxu0 0.0
        %1318 = vmatmul.mubr.f32.gmra.mrb[0].mxu0 %v1251
        %v1319 = vpop.f32.mrb[0].mxu0
        %v1320 = vadd.f32 0.0, %v1319
        %v1321 = vpop.f32.mrb[0].mxu0
        %1322 = vdwg.mxu0
        %v1323 = vld [vmem:[%s6] sm:$0xff]
        %v1324 = vld [vmem:[%s6 + $0x8] sm:$0xff]
        %v1325 = vld [vmem:[%s6 + $0x10] sm:$0xff]
        %v1326 = vld [vmem:[%s6 + $0x18] sm:$0xff]
        %v1328 = vsel %vm989, %v1244, 0
        %1330 = vmatprep.subr.mxu0 0.0
        %1331 = vmatpush1.msra.mxu0 %v1323
        %1332 = vmatprep.subr.mxu0 0.0
        %1333 = vmatpush1.msra.mxu0 %v1324
        %1334 = vmatprep.subr.mxu0 0.0
        %1335 = vmatpush1.msra.mxu0 0.0
        %1336 = vmatprep.subr.mxu0 0.0
        %1337 = vmatpush1.msra.mxu0 0.0
        %1338 = vmatprep.subr.mxu0 0.0
        %1339 = vmatpush1.msra.mxu0 0.0
        %1340 = vmatprep.subr.mxu0 0.0
        %1341 = vmatpush1.msra.mxu0 0.0
        %1342 = vmatprep.subr.mxu0 0.0
        %1343 = vmatpush1.msra.mxu0 0.0
        %1344 = vmatprep.subr.mxu0 0.0
        %1345 = vmatpush1.msra.mxu0 0.0
        %1346 = vmatprep.subr.mxu0 0.0
        %1347 = vmatpush1.msra.mxu0 0.0
        %1348 = vmatprep.subr.mxu0 0.0
        %1349 = vmatpush1.msra.mxu0 0.0
        %1350 = vmatprep.subr.mxu0 0.0
        %1351 = vmatpush1.msra.mxu0 0.0
        %1352 = vmatprep.subr.mxu0 0.0
        %1353 = vmatpush1.msra.mxu0 0.0
        %1354 = vmatprep.subr.mxu0 0.0
        %1355 = vmatpush1.msra.mxu0 0.0
        %1356 = vmatprep.subr.mxu0 0.0
        %1357 = vmatpush1.msra.mxu0 0.0
        %1358 = vmatprep.subr.mxu0 0.0
        %1359 = vmatpush1.msra.mxu0 0.0
        %1360 = vmatprep.subr.mxu0 0.0
        %1361 = vmatpush1.msra.mxu0 0.0
        %1362 = vmatprep.subr.mxu0 0.0
        %1363 = vmatpush1.msra.mxu0 0.0
        %1364 = vmatprep.subr.mxu0 0.0
        %1365 = vmatpush1.msra.mxu0 0.0
        %1366 = vmatprep.subr.mxu0 0.0
        %1367 = vmatpush1.msra.mxu0 0.0
        %1368 = vmatprep.subr.mxu0 0.0
        %1369 = vmatpush1.msra.mxu0 0.0
        %1370 = vmatprep.subr.mxu0 0.0
        %1371 = vmatpush1.msra.mxu0 0.0
        %1372 = vmatprep.subr.mxu0 0.0
        %1373 = vmatpush1.msra.mxu0 0.0
        %1374 = vmatprep.subr.mxu0 0.0
        %1375 = vmatpush1.msra.mxu0 0.0
        %1376 = vmatprep.subr.mxu0 0.0
        %1377 = vmatpush1.msra.mxu0 0.0
        %1378 = vmatprep.subr.mxu0 0.0
        %1379 = vmatpush1.msra.mxu0 0.0
        %1380 = vmatprep.subr.mxu0 0.0
        %1381 = vmatpush1.msra.mxu0 0.0
        %1382 = vmatprep.subr.mxu0 0.0
        %1383 = vmatpush1.msra.mxu0 0.0
        %1384 = vmatprep.subr.mxu0 0.0
        %1385 = vmatpush1.msra.mxu0 0.0
        %1386 = vmatprep.subr.mxu0 0.0
        %1387 = vmatpush1.msra.mxu0 0.0
        %1388 = vmatprep.subr.mxu0 0.0
        %1389 = vmatpush1.msra.mxu0 0.0
        %1390 = vmatprep.subr.mxu0 0.0
        %1391 = vmatpush1.msra.mxu0 0.0
        %1392 = vmatprep.subr.mxu0 0.0
        %1393 = vmatpush1.msra.mxu0 0.0
        %1394 = vmatprep.mubr.f32.mxu0 0.0
        %1395 = vmatmul.mubr.f32.gmra.mrb[0].mxu0 %v1328
        %v1396 = vpop.f32.mrb[0].mxu0
        %v1397 = vadd.f32 0.0, %v1396
        %v1398 = vpop.f32.mrb[0].mxu0
        %1399 = vdwg.mxu0
        %v1401 = vsel %vm989, %v1320, 0
        %1403 = vmatprep.subr.mxu0 0.0
        %1404 = vmatpush1.msra.mxu0 %v1325
        %1405 = vmatprep.subr.mxu0 0.0
        %1406 = vmatpush1.msra.mxu0 %v1326
        %1407 = vmatprep.subr.mxu0 0.0
        %1408 = vmatpush1.msra.mxu0 0.0
        %1409 = vmatprep.subr.mxu0 0.0
        %1410 = vmatpush1.msra.mxu0 0.0
        %1411 = vmatprep.subr.mxu0 0.0
        %1412 = vmatpush1.msra.mxu0 0.0
        %1413 = vmatprep.subr.mxu0 0.0
        %1414 = vmatpush1.msra.mxu0 0.0
        %1415 = vmatprep.subr.mxu0 0.0
        %1416 = vmatpush1.msra.mxu0 0.0
        %1417 = vmatprep.subr.mxu0 0.0
        %1418 = vmatpush1.msra.mxu0 0.0
        %1419 = vmatprep.subr.mxu0 0.0
        %1420 = vmatpush1.msra.mxu0 0.0
        %1421 = vmatprep.subr.mxu0 0.0
        %1422 = vmatpush1.msra.mxu0 0.0
        %1423 = vmatprep.subr.mxu0 0.0
        %1424 = vmatpush1.msra.mxu0 0.0
        %1425 = vmatprep.subr.mxu0 0.0
        %1426 = vmatpush1.msra.mxu0 0.0
        %1427 = vmatprep.subr.mxu0 0.0
        %1428 = vmatpush1.msra.mxu0 0.0
        %1429 = vmatprep.subr.mxu0 0.0
        %1430 = vmatpush1.msra.mxu0 0.0
        %1431 = vmatprep.subr.mxu0 0.0
        %1432 = vmatpush1.msra.mxu0 0.0
        %1433 = vmatprep.subr.mxu0 0.0
        %1434 = vmatpush1.msra.mxu0 0.0
        %1435 = vmatprep.subr.mxu0 0.0
        %1436 = vmatpush1.msra.mxu0 0.0
        %1437 = vmatprep.subr.mxu0 0.0
        %1438 = vmatpush1.msra.mxu0 0.0
        %1439 = vmatprep.subr.mxu0 0.0
        %1440 = vmatpush1.msra.mxu0 0.0
        %1441 = vmatprep.subr.mxu0 0.0
        %1442 = vmatpush1.msra.mxu0 0.0
        %1443 = vmatprep.subr.mxu0 0.0
        %1444 = vmatpush1.msra.mxu0 0.0
        %1445 = vmatprep.subr.mxu0 0.0
        %1446 = vmatpush1.msra.mxu0 0.0
        %1447 = vmatprep.subr.mxu0 0.0
        %1448 = vmatpush1.msra.mxu0 0.0
        %1449 = vmatprep.subr.mxu0 0.0
        %1450 = vmatpush1.msra.mxu0 0.0
        %1451 = vmatprep.subr.mxu0 0.0
        %1452 = vmatpush1.msra.mxu0 0.0
        %1453 = vmatprep.subr.mxu0 0.0
        %1454 = vmatpush1.msra.mxu0 0.0
        %1455 = vmatprep.subr.mxu0 0.0
        %1456 = vmatpush1.msra.mxu0 0.0
        %1457 = vmatprep.subr.mxu0 0.0
        %1458 = vmatpush1.msra.mxu0 0.0
        %1459 = vmatprep.subr.mxu0 0.0
        %1460 = vmatpush1.msra.mxu0 0.0
        %1461 = vmatprep.subr.mxu0 0.0
        %1462 = vmatpush1.msra.mxu0 0.0
        %1463 = vmatprep.subr.mxu0 0.0
        %1464 = vmatpush1.msra.mxu0 0.0
        %1465 = vmatprep.subr.mxu0 0.0
        %1466 = vmatpush1.msra.mxu0 0.0
        %1467 = vmatprep.mubr.f32.mxu0 0.0
        %1468 = vmatmul.mubr.f32.gmra.mrb[0].mxu0 %v1401
        %v1469 = vpop.f32.mrb[0].mxu0
        %v1470 = vadd.f32 0.0, %v1469
        %v1471 = vpop.f32.mrb[0].mxu0
        %1472 = vdwg.mxu0
        %v1473 = vsel %vm842, %v1397, 0.0
        %v1474 = vsel %vm842, %v1470, 0.0
        %v1475 = vadd.f32 %v1473, %v1474
        %v1476 = vld [vmem:[%s7] sm:$0x1]
        %v1478 = vlaneseq
        %v1479 = vshrl.u32 %v1478, 7
        %v1480 = vsub.s32 0, %v1479
        %v1481 = vrot.slane %v1476, %v1480
        %v1483 = vadd.f32 %v1475, %v1481
        %v1484 = vld [vmem:[%s8] sm:$0x1]
        %v1485 = vld [vmem:[%s9] sm:$0x1]
        %v1486 = vsel %vm842, %v1483, 0.0
        %1487 = vadd.xlane.f32.xlu0 %v1486
        %v1488 = vpop.xlane.xlu0 %1487
        %v1489 = vrcp.pop 32.0
        %v1490 = vmul.f32 %v1488, %v1489
        %v1491 = vsub.f32 %v1483, %v1490
        %v1492 = vmul.f32 %v1491, %v1491
        %v1493 = vsel %vm842, %v1492, 0.0
        %1494 = vadd.xlane.f32.xlu0 %v1493
        %v1495 = vpop.xlane.xlu0 %1494
        %v1496 = vmul.f32 %v1495, %v1489
        %v1497 = vadd.f32 %v1496, 1e-05
        %v1498 = vrsqrt.pop %v1497
        %v1499 = vmul.f32 %v1491, %v1498
        %v1501 = vlaneseq
        %v1502 = vshrl.u32 %v1501, 7
        %v1503 = vsub.s32 0, %v1502
        %v1504 = vrot.slane %v1484, %v1503
        %v1506 = vmul.f32 %v1499, %v1504
        %v1508 = vlaneseq
        %v1509 = vshrl.u32 %v1508, 7
        %v1510 = vsub.s32 0, %v1509
        %v1511 = vrot.slane %v1485, %v1510
        %v1513 = vadd.f32 %v1506, %v1511
        %v1514 = vld [vmem:[%s815] sm:$0xff]
        %v1515 = vld [vmem:[%s10] sm:$0xff]
        %v1516 = vld [vmem:[%s10 + $0x8] sm:$0xff]
        %v1517 = vld [vmem:[%s10 + $0x10] sm:$0xff]
        %v1518 = vld [vmem:[%s10 + $0x18] sm:$0xff]
        %v1519 = vld [vmem:[%s10 + $0x20] sm:$0xff]
        %v1520 = vld [vmem:[%s10 + $0x28] sm:$0xff]
        %v1521 = vld [vmem:[%s10 + $0x30] sm:$0xff]
        %v1522 = vld [vmem:[%s10 + $0x38] sm:$0xff]
        %v1523 = vld [vmem:[%s11] sm:$0x1]
        %v1524 = vld [vmem:[%s11 + $0x1] sm:$0x1]
        %v1527 = vlaneseq
        %v1528 = vshrl.u32 %v1527, 7
        %v1529 = vsub.s32 0, %v1528
        %v1530 = vrot.slane %v1523, %v1529
        %v1531 = vlaneseq
        %v1532 = vshrl.u32 %v1531, 7
        %v1533 = vsub.s32 0, %v1532
        %v1534 = vrot.slane %v1524, %v1533
        %v1538 = vsel %vm842, %v1513, 0
        %1540 = vmatprep.subr.mxu0 0.0
        %1541 = vmatpush1.msra.mxu0 %v1515
        %1542 = vmatprep.subr.mxu0 0.0
        %1543 = vmatpush1.msra.mxu0 %v1516
        %1544 = vmatprep.subr.mxu0 0.0
        %1545 = vmatpush1.msra.mxu0 %v1517
        %1546 = vmatprep.subr.mxu0 0.0
        %1547 = vmatpush1.msra.mxu0 %v1518
        %1548 = vmatprep.subr.mxu0 0.0
        %1549 = vmatpush1.msra.mxu0 0.0
        %1550 = vmatprep.subr.mxu0 0.0
        %1551 = vmatpush1.msra.mxu0 0.0
        %1552 = vmatprep.subr.mxu0 0.0
        %1553 = vmatpush1.msra.mxu0 0.0
        %1554 = vmatprep.subr.mxu0 0.0
        %1555 = vmatpush1.msra.mxu0 0.0
        %1556 = vmatprep.subr.mxu0 0.0
        %1557 = vmatpush1.msra.mxu0 0.0
        %1558 = vmatprep.subr.mxu0 0.0
        %1559 = vmatpush1.msra.mxu0 0.0
        %1560 = vmatprep.subr.mxu0 0.0
        %1561 = vmatpush1.msra.mxu0 0.0
        %1562 = vmatprep.subr.mxu0 0.0
        %1563 = vmatpush1.msra.mxu0 0.0
        %1564 = vmatprep.subr.mxu0 0.0
        %1565 = vmatpush1.msra.mxu0 0.0
        %1566 = vmatprep.subr.mxu0 0.0
        %1567 = vmatpush1.msra.mxu0 0.0
        %1568 = vmatprep.subr.mxu0 0.0
        %1569 = vmatpush1.msra.mxu0 0.0
        %1570 = vmatprep.subr.mxu0 0.0
        %1571 = vmatpush1.msra.mxu0 0.0
        %1572 = vmatprep.subr.mxu0 0.0
        %1573 = vmatpush1.msra.mxu0 0.0
        %1574 = vmatprep.subr.mxu0 0.0
        %1575 = vmatpush1.msra.mxu0 0.0
        %1576 = vmatprep.subr.mxu0 0.0
        %1577 = vmatpush1.msra.mxu0 0.0
        %1578 = vmatprep.subr.mxu0 0.0
        %1579 = vmatpush1.msra.mxu0 0.0
        %1580 = vmatprep.subr.mxu0 0.0
        %1581 = vmatpush1.msra.mxu0 0.0
        %1582 = vmatprep.subr.mxu0 0.0
        %1583 = vmatpush1.msra.mxu0 0.0
        %1584 = vmatprep.subr.mxu0 0.0
        %1585 = vmatpush1.msra.mxu0 0.0
        %1586 = vmatprep.subr.mxu0 0.0
        %1587 = vmatpush1.msra.mxu0 0.0
        %1588 = vmatprep.subr.mxu0 0.0
        %1589 = vmatpush1.msra.mxu0 0.0
        %1590 = vmatprep.subr.mxu0 0.0
        %1591 = vmatpush1.msra.mxu0 0.0
        %1592 = vmatprep.subr.mxu0 0.0
        %1593 = vmatpush1.msra.mxu0 0.0
        %1594 = vmatprep.subr.mxu0 0.0
        %1595 = vmatpush1.msra.mxu0 0.0
        %1596 = vmatprep.subr.mxu0 0.0
        %1597 = vmatpush1.msra.mxu0 0.0
        %1598 = vmatprep.subr.mxu0 0.0
        %1599 = vmatpush1.msra.mxu0 0.0
        %1600 = vmatprep.subr.mxu0 0.0
        %1601 = vmatpush1.msra.mxu0 0.0
        %1602 = vmatprep.subr.mxu0 0.0
        %1603 = vmatpush1.msra.mxu0 0.0
        %1604 = vmatprep.mubr.f32.mxu0 0.0
        %1605 = vmatmul.mubr.f32.gmra.mrb[0].mxu0 %v1538
        %v1606 = vpop.f32.mrb[0].mxu0
        %v1607 = vadd.f32 %v1530, %v1606
        %v1608 = vpop.f32.mrb[0].mxu0
        %1609 = vdwg.mxu0
        %1610 = vmatprep.subr.mxu0 0.0
        %1611 = vmatpush1.msra.mxu0 %v1519
        %1612 = vmatprep.subr.mxu0 0.0
        %1613 = vmatpush1.msra.mxu0 %v1520
        %1614 = vmatprep.subr.mxu0 0.0
        %1615 = vmatpush1.msra.mxu0 %v1521
        %1616 = vmatprep.subr.mxu0 0.0
        %1617 = vmatpush1.msra.mxu0 %v1522
        %1618 = vmatprep.subr.mxu0 0.0
        %1619 = vmatpush1.msra.mxu0 0.0
        %1620 = vmatprep.subr.mxu0 0.0
        %1621 = vmatpush1.msra.mxu0 0.0
        %1622 = vmatprep.subr.mxu0 0.0
        %1623 = vmatpush1.msra.mxu0 0.0
        %1624 = vmatprep.subr.mxu0 0.0
        %1625 = vmatpush1.msra.mxu0 0.0
        %1626 = vmatprep.subr.mxu0 0.0
        %1627 = vmatpush1.msra.mxu0 0.0
        %1628 = vmatprep.subr.mxu0 0.0
        %1629 = vmatpush1.msra.mxu0 0.0
        %1630 = vmatprep.subr.mxu0 0.0
        %1631 = vmatpush1.msra.mxu0 0.0
        %1632 = vmatprep.subr.mxu0 0.0
        %1633 = vmatpush1.msra.mxu0 0.0
        %1634 = vmatprep.subr.mxu0 0.0
        %1635 = vmatpush1.msra.mxu0 0.0
        %1636 = vmatprep.subr.mxu0 0.0
        %1637 = vmatpush1.msra.mxu0 0.0
        %1638 = vmatprep.subr.mxu0 0.0
        %1639 = vmatpush1.msra.mxu0 0.0
        %1640 = vmatprep.subr.mxu0 0.0
        %1641 = vmatpush1.msra.mxu0 0.0
        %1642 = vmatprep.subr.mxu0 0.0
        %1643 = vmatpush1.msra.mxu0 0.0
        %1644 = vmatprep.subr.mxu0 0.0
        %1645 = vmatpush1.msra.mxu0 0.0
        %1646 = vmatprep.subr.mxu0 0.0
        %1647 = vmatpush1.msra.mxu0 0.0
        %1648 = vmatprep.subr.mxu0 0.0
        %1649 = vmatpush1.msra.mxu0 0.0
        %1650 = vmatprep.subr.mxu0 0.0
        %1651 = vmatpush1.msra.mxu0 0.0
        %1652 = vmatprep.subr.mxu0 0.0
        %1653 = vmatpush1.msra.mxu0 0.0
        %1654 = vmatprep.subr.mxu0 0.0
        %1655 = vmatpush1.msra.mxu0 0.0
        %1656 = vmatprep.subr.mxu0 0.0
        %1657 = vmatpush1.msra.mxu0 0.0
        %1658 = vmatprep.subr.mxu0 0.0
        %1659 = vmatpush1.msra.mxu0 0.0
        %1660 = vmatprep.subr.mxu0 0.0
        %1661 = vmatpush1.msra.mxu0 0.0
        %1662 = vmatprep.subr.mxu0 0.0
        %1663 = vmatpush1.msra.mxu0 0.0
        %1664 = vmatprep.subr.mxu0 0.0
        %1665 = vmatpush1.msra.mxu0 0.0
        %1666 = vmatprep.subr.mxu0 0.0
        %1667 = vmatpush1.msra.mxu0 0.0
        %1668 = vmatprep.subr.mxu0 0.0
        %1669 = vmatpush1.msra.mxu0 0.0
        %1670 = vmatprep.subr.mxu0 0.0
        %1671 = vmatpush1.msra.mxu0 0.0
        %1672 = vmatprep.subr.mxu0 0.0
        %1673 = vmatpush1.msra.mxu0 0.0
        %1674 = vmatprep.mubr.f32.mxu0 0.0
        %1675 = vmatmul.mubr.f32.gmra.mrb[0].mxu0 %v1538
        %v1676 = vpop.f32.mrb[0].mxu0
        %v1677 = vadd.f32 %v1534, %v1676
        %v1678 = vpop.f32.mrb[0].mxu0
        %1679 = vdwg.mxu0
        %v1680 = vld [vmem:[%s12] sm:$0xff]
        %v1681 = vld [vmem:[%s12 + $0x8] sm:$0xff]
        %v1682 = vld [vmem:[%s12 + $0x10] sm:$0xff]
        %v1683 = vld [vmem:[%s12 + $0x18] sm:$0xff]
        %v1684 = vld [vmem:[%s12 + $0x20] sm:$0xff]
        %v1685 = vld [vmem:[%s12 + $0x28] sm:$0xff]
        %v1686 = vld [vmem:[%s12 + $0x30] sm:$0xff]
        %v1687 = vld [vmem:[%s12 + $0x38] sm:$0xff]
        %v1688 = vld [vmem:[%s13] sm:$0x1]
        %v1689 = vld [vmem:[%s13 + $0x1] sm:$0x1]
        %v1692 = vlaneseq
        %v1693 = vshrl.u32 %v1692, 7
        %v1694 = vsub.s32 0, %v1693
        %v1695 = vrot.slane %v1688, %v1694
        %v1696 = vlaneseq
        %v1697 = vshrl.u32 %v1696, 7
        %v1698 = vsub.s32 0, %v1697
        %v1699 = vrot.slane %v1689, %v1698
        %v1703 = vsel %vm842, %v1514, 0
        %1705 = vmatprep.subr.mxu0 0.0
        %1706 = vmatpush1.msra.mxu0 %v1680
        %1707 = vmatprep.subr.mxu0 0.0
        %1708 = vmatpush1.msra.mxu0 %v1681
        %1709 = vmatprep.subr.mxu0 0.0
        %1710 = vmatpush1.msra.mxu0 %v1682
        %1711 = vmatprep.subr.mxu0 0.0
        %1712 = vmatpush1.msra.mxu0 %v1683
        %1713 = vmatprep.subr.mxu0 0.0
        %1714 = vmatpush1.msra.mxu0 0.0
        %1715 = vmatprep.subr.mxu0 0.0
        %1716 = vmatpush1.msra.mxu0 0.0
        %1717 = vmatprep.subr.mxu0 0.0
        %1718 = vmatpush1.msra.mxu0 0.0
        %1719 = vmatprep.subr.mxu0 0.0
        %1720 = vmatpush1.msra.mxu0 0.0
        %1721 = vmatprep.subr.mxu0 0.0
        %1722 = vmatpush1.msra.mxu0 0.0
        %1723 = vmatprep.subr.mxu0 0.0
        %1724 = vmatpush1.msra.mxu0 0.0
        %1725 = vmatprep.subr.mxu0 0.0
        %1726 = vmatpush1.msra.mxu0 0.0
        %1727 = vmatprep.subr.mxu0 0.0
        %1728 = vmatpush1.msra.mxu0 0.0
        %1729 = vmatprep.subr.mxu0 0.0
        %1730 = vmatpush1.msra.mxu0 0.0
        %1731 = vmatprep.subr.mxu0 0.0
        %1732 = vmatpush1.msra.mxu0 0.0
        %1733 = vmatprep.subr.mxu0 0.0
        %1734 = vmatpush1.msra.mxu0 0.0
        %1735 = vmatprep.subr.mxu0 0.0
        %1736 = vmatpush1.msra.mxu0 0.0
        %1737 = vmatprep.subr.mxu0 0.0
        %1738 = vmatpush1.msra.mxu0 0.0
        %1739 = vmatprep.subr.mxu0 0.0
        %1740 = vmatpush1.msra.mxu0 0.0
        %1741 = vmatprep.subr.mxu0 0.0
        %1742 = vmatpush1.msra.mxu0 0.0
        %1743 = vmatprep.subr.mxu0 0.0
        %1744 = vmatpush1.msra.mxu0 0.0
        %1745 = vmatprep.subr.mxu0 0.0
        %1746 = vmatpush1.msra.mxu0 0.0
        %1747 = vmatprep.subr.mxu0 0.0
        %1748 = vmatpush1.msra.mxu0 0.0
        %1749 = vmatprep.subr.mxu0 0.0
        %1750 = vmatpush1.msra.mxu0 0.0
        %1751 = vmatprep.subr.mxu0 0.0
        %1752 = vmatpush1.msra.mxu0 0.0
        %1753 = vmatprep.subr.mxu0 0.0
        %1754 = vmatpush1.msra.mxu0 0.0
        %1755 = vmatprep.subr.mxu0 0.0
        %1756 = vmatpush1.msra.mxu0 0.0
        %1757 = vmatprep.subr.mxu0 0.0
        %1758 = vmatpush1.msra.mxu0 0.0
        %1759 = vmatprep.subr.mxu0 0.0
        %1760 = vmatpush1.msra.mxu0 0.0
        %1761 = vmatprep.subr.mxu0 0.0
        %1762 = vmatpush1.msra.mxu0 0.0
        %1763 = vmatprep.subr.mxu0 0.0
        %1764 = vmatpush1.msra.mxu0 0.0
        %1765 = vmatprep.subr.mxu0 0.0
        %1766 = vmatpush1.msra.mxu0 0.0
        %1767 = vmatprep.subr.mxu0 0.0
        %1768 = vmatpush1.msra.mxu0 0.0
        %1769 = vmatprep.mubr.f32.mxu0 0.0
        %1770 = vmatmul.mubr.f32.gmra.mrb[0].mxu0 %v1703
        %v1771 = vpop.f32.mrb[0].mxu0
        %v1772 = vadd.f32 %v1695, %v1771
        %v1773 = vpop.f32.mrb[0].mxu0
        %1774 = vdwg.mxu0
        %1775 = vmatprep.subr.mxu0 0.0
        %1776 = vmatpush1.msra.mxu0 %v1684
        %1777 = vmatprep.subr.mxu0 0.0
        %1778 = vmatpush1.msra.mxu0 %v1685
        %1779 = vmatprep.subr.mxu0 0.0
        %1780 = vmatpush1.msra.mxu0 %v1686
        %1781 = vmatprep.subr.mxu0 0.0
        %1782 = vmatpush1.msra.mxu0 %v1687
        %1783 = vmatprep.subr.mxu0 0.0
        %1784 = vmatpush1.msra.mxu0 0.0
        %1785 = vmatprep.subr.mxu0 0.0
        %1786 = vmatpush1.msra.mxu0 0.0
        %1787 = vmatprep.subr.mxu0 0.0
        %1788 = vmatpush1.msra.mxu0 0.0
        %1789 = vmatprep.subr.mxu0 0.0
        %1790 = vmatpush1.msra.mxu0 0.0
        %1791 = vmatprep.subr.mxu0 0.0
        %1792 = vmatpush1.msra.mxu0 0.0
        %1793 = vmatprep.subr.mxu0 0.0
        %1794 = vmatpush1.msra.mxu0 0.0
        %1795 = vmatprep.subr.mxu0 0.0
        %1796 = vmatpush1.msra.mxu0 0.0
        %1797 = vmatprep.subr.mxu0 0.0
        %1798 = vmatpush1.msra.mxu0 0.0
        %1799 = vmatprep.subr.mxu0 0.0
        %1800 = vmatpush1.msra.mxu0 0.0
        %1801 = vmatprep.subr.mxu0 0.0
        %1802 = vmatpush1.msra.mxu0 0.0
        %1803 = vmatprep.subr.mxu0 0.0
        %1804 = vmatpush1.msra.mxu0 0.0
        %1805 = vmatprep.subr.mxu0 0.0
        %1806 = vmatpush1.msra.mxu0 0.0
        %1807 = vmatprep.subr.mxu0 0.0
        %1808 = vmatpush1.msra.mxu0 0.0
        %1809 = vmatprep.subr.mxu0 0.0
        %1810 = vmatpush1.msra.mxu0 0.0
        %1811 = vmatprep.subr.mxu0 0.0
        %1812 = vmatpush1.msra.mxu0 0.0
        %1813 = vmatprep.subr.mxu0 0.0
        %1814 = vmatpush1.msra.mxu0 0.0
        %1815 = vmatprep.subr.mxu0 0.0
        %1816 = vmatpush1.msra.mxu0 0.0
        %1817 = vmatprep.subr.mxu0 0.0
        %1818 = vmatpush1.msra.mxu0 0.0
        %1819 = vmatprep.subr.mxu0 0.0
        %1820 = vmatpush1.msra.mxu0 0.0
        %1821 = vmatprep.subr.mxu0 0.0
        %1822 = vmatpush1.msra.mxu0 0.0
        %1823 = vmatprep.subr.mxu0 0.0
        %1824 = vmatpush1.msra.mxu0 0.0
        %1825 = vmatprep.subr.mxu0 0.0
        %1826 = vmatpush1.msra.mxu0 0.0
        %1827 = vmatprep.subr.mxu0 0.0
        %1828 = vmatpush1.msra.mxu0 0.0
        %1829 = vmatprep.subr.mxu0 0.0
        %1830 = vmatpush1.msra.mxu0 0.0
        %1831 = vmatprep.subr.mxu0 0.0
        %1832 = vmatpush1.msra.mxu0 0.0
        %1833 = vmatprep.subr.mxu0 0.0
        %1834 = vmatpush1.msra.mxu0 0.0
        %1835 = vmatprep.subr.mxu0 0.0
        %1836 = vmatpush1.msra.mxu0 0.0
        %1837 = vmatprep.subr.mxu0 0.0
        %1838 = vmatpush1.msra.mxu0 0.0
        %1839 = vmatprep.mubr.f32.mxu0 0.0
        %1840 = vmatmul.mubr.f32.gmra.mrb[0].mxu0 %v1703
        %v1841 = vpop.f32.mrb[0].mxu0
        %v1842 = vadd.f32 %v1699, %v1841
        %v1843 = vpop.f32.mrb[0].mxu0
        %1844 = vdwg.mxu0
        %v1846 = vsel %vm989, %v1607, 0
        %v1849 = vsel %vm989, %v1772, 0
        %1851 = vmatprep.subr.mxu0 0.0
        %1852 = vmatpush1.xpose.msra.mxu0 %v1849
        %1853 = vmatprep.subr.mxu0 0.0
        %1854 = vmatpush1.xpose.msra.mxu0 0.0
        %1855 = vmatprep.subr.mxu0 0.0
        %1856 = vmatpush1.xpose.msra.mxu0 0.0
        %1857 = vmatprep.subr.mxu0 0.0
        %1858 = vmatpush1.xpose.msra.mxu0 0.0
        %1859 = vmatprep.subr.mxu0 0.0
        %1860 = vmatpush1.xpose.msra.mxu0 0.0
        %1861 = vmatprep.subr.mxu0 0.0
        %1862 = vmatpush1.xpose.msra.mxu0 0.0
        %1863 = vmatprep.subr.mxu0 0.0
        %1864 = vmatpush1.xpose.msra.mxu0 0.0
        %1865 = vmatprep.subr.mxu0 0.0
        %1866 = vmatpush1.xpose.msra.mxu0 0.0
        %1867 = vmatprep.subr.mxu0 0.0
        %1868 = vmatpush1.xpose.msra.mxu0 0.0
        %1869 = vmatprep.subr.mxu0 0.0
        %1870 = vmatpush1.xpose.msra.mxu0 0.0
        %1871 = vmatprep.subr.mxu0 0.0
        %1872 = vmatpush1.xpose.msra.mxu0 0.0
        %1873 = vmatprep.subr.mxu0 0.0
        %1874 = vmatpush1.xpose.msra.mxu0 0.0
        %1875 = vmatprep.subr.mxu0 0.0
        %1876 = vmatpush1.xpose.msra.mxu0 0.0
        %1877 = vmatprep.subr.mxu0 0.0
        %1878 = vmatpush1.xpose.msra.mxu0 0.0
        %1879 = vmatprep.subr.mxu0 0.0
        %1880 = vmatpush1.xpose.msra.mxu0 0.0
        %1881 = vmatprep.subr.mxu0 0.0
        %1882 = vmatpush1.xpose.msra.mxu0 0.0
        %1883 = vmatprep.subr.mxu0 0.0
        %1884 = vmatpush1.xpose.msra.mxu0 0.0
        %1885 = vmatprep.subr.mxu0 0.0
        %1886 = vmatpush1.xpose.msra.mxu0 0.0
        %1887 = vmatprep.subr.mxu0 0.0
        %1888 = vmatpush1.xpose.msra.mxu0 0.0
        %1889 = vmatprep.subr.mxu0 0.0
        %1890 = vmatpush1.xpose.msra.mxu0 0.0
        %1891 = vmatprep.subr.mxu0 0.0
        %1892 = vmatpush1.xpose.msra.mxu0 0.0
        %1893 = vmatprep.subr.mxu0 0.0
        %1894 = vmatpush1.xpose.msra.mxu0 0.0
        %1895 = vmatprep.subr.mxu0 0.0
        %1896 = vmatpush1.xpose.msra.mxu0 0.0
        %1897 = vmatprep.subr.mxu0 0.0
        %1898 = vmatpush1.xpose.msra.mxu0 0.0
        %1899 = vmatprep.subr.mxu0 0.0
        %1900 = vmatpush1.xpose.msra.mxu0 0.0
        %1901 = vmatprep.subr.mxu0 0.0
        %1902 = vmatpush1.xpose.msra.mxu0 0.0
        %1903 = vmatprep.subr.mxu0 0.0
        %1904 = vmatpush1.xpose.msra.mxu0 0.0
        %1905 = vmatprep.subr.mxu0 0.0
        %1906 = vmatpush1.xpose.msra.mxu0 0.0
        %1907 = vmatprep.subr.mxu0 0.0
        %1908 = vmatpush1.xpose.msra.mxu0 0.0
        %1909 = vmatprep.subr.mxu0 0.0
        %1910 = vmatpush1.xpose.msra.mxu0 0.0
        %1911 = vmatprep.subr.mxu0 0.0
        %1912 = vmatpush1.xpose.msra.mxu0 0.0
        %1913 = vmatprep.subr.mxu0 0.0
        %1914 = vmatpush1.xpose.msra.mxu0 0.0
        %1915 = vmatprep.mubr.f32.mxu0 0.0
        %1916 = vmatmul.mubr.f32.gmra.mrb[0].mxu0 %v1846
        %v1917 = vpop.f32.mrb[0].mxu0
        %v1918 = vadd.f32 0.0, %v1917
        %v1919 = vpop.f32.mrb[0].mxu0
        %1920 = vdwg.mxu0
        %v1922 = vsel %vm989, %v1677, 0
        %v1925 = vsel %vm989, %v1842, 0
        %1927 = vmatprep.subr.mxu0 0.0
        %1928 = vmatpush1.xpose.msra.mxu0 %v1925
        %1929 = vmatprep.subr.mxu0 0.0
        %1930 = vmatpush1.xpose.msra.mxu0 0.0
        %1931 = vmatprep.subr.mxu0 0.0
        %1932 = vmatpush1.xpose.msra.mxu0 0.0
        %1933 = vmatprep.subr.mxu0 0.0
        %1934 = vmatpush1.xpose.msra.mxu0 0.0
        %1935 = vmatprep.subr.mxu0 0.0
        %1936 = vmatpush1.xpose.msra.mxu0 0.0
        %1937 = vmatprep.subr.mxu0 0.0
        %1938 = vmatpush1.xpose.msra.mxu0 0.0
        %1939 = vmatprep.subr.mxu0 0.0
        %1940 = vmatpush1.xpose.msra.mxu0 0.0
        %1941 = vmatprep.subr.mxu0 0.0
        %1942 = vmatpush1.xpose.msra.mxu0 0.0
        %1943 = vmatprep.subr.mxu0 0.0
        %1944 = vmatpush1.xpose.msra.mxu0 0.0
        %1945 = vmatprep.subr.mxu0 0.0
        %1946 = vmatpush1.xpose.msra.mxu0 0.0
        %1947 = vmatprep.subr.mxu0 0.0
        %1948 = vmatpush1.xpose.msra.mxu0 0.0
        %1949 = vmatprep.subr.mxu0 0.0
        %1950 = vmatpush1.xpose.msra.mxu0 0.0
        %1951 = vmatprep.subr.mxu0 0.0
        %1952 = vmatpush1.xpose.msra.mxu0 0.0
        %1953 = vmatprep.subr.mxu0 0.0
        %1954 = vmatpush1.xpose.msra.mxu0 0.0
        %1955 = vmatprep.subr.mxu0 0.0
        %1956 = vmatpush1.xpose.msra.mxu0 0.0
        %1957 = vmatprep.subr.mxu0 0.0
        %1958 = vmatpush1.xpose.msra.mxu0 0.0
        %1959 = vmatprep.subr.mxu0 0.0
        %1960 = vmatpush1.xpose.msra.mxu0 0.0
        %1961 = vmatprep.subr.mxu0 0.0
        %1962 = vmatpush1.xpose.msra.mxu0 0.0
        %1963 = vmatprep.subr.mxu0 0.0
        %1964 = vmatpush1.xpose.msra.mxu0 0.0
        %1965 = vmatprep.subr.mxu0 0.0
        %1966 = vmatpush1.xpose.msra.mxu0 0.0
        %1967 = vmatprep.subr.mxu0 0.0
        %1968 = vmatpush1.xpose.msra.mxu0 0.0
        %1969 = vmatprep.subr.mxu0 0.0
        %1970 = vmatpush1.xpose.msra.mxu0 0.0
        %1971 = vmatprep.subr.mxu0 0.0
        %1972 = vmatpush1.xpose.msra.mxu0 0.0
        %1973 = vmatprep.subr.mxu0 0.0
        %1974 = vmatpush1.xpose.msra.mxu0 0.0
        %1975 = vmatprep.subr.mxu0 0.0
        %1976 = vmatpush1.xpose.msra.mxu0 0.0
        %1977 = vmatprep.subr.mxu0 0.0
        %1978 = vmatpush1.xpose.msra.mxu0 0.0
        %1979 = vmatprep.subr.mxu0 0.0
        %1980 = vmatpush1.xpose.msra.mxu0 0.0
        %1981 = vmatprep.subr.mxu0 0.0
        %1982 = vmatpush1.xpose.msra.mxu0 0.0
        %1983 = vmatprep.subr.mxu0 0.0
        %1984 = vmatpush1.xpose.msra.mxu0 0.0
        %1985 = vmatprep.subr.mxu0 0.0
        %1986 = vmatpush1.xpose.msra.mxu0 0.0
        %1987 = vmatprep.subr.mxu0 0.0
        %1988 = vmatpush1.xpose.msra.mxu0 0.0
        %1989 = vmatprep.subr.mxu0 0.0
        %1990 = vmatpush1.xpose.msra.mxu0 0.0
        %1991 = vmatprep.mubr.f32.mxu0 0.0
        %1992 = vmatmul.mubr.f32.gmra.mrb[0].mxu0 %v1922
        %v1993 = vpop.f32.mrb[0].mxu0
        %v1994 = vadd.f32 0.0, %v1993
        %v1995 = vpop.f32.mrb[0].mxu0
        %1996 = vdwg.mxu0
        %v1997 = vld [vmem:[%s818] sm:$0x1]
        %vm1998 = vcmp.eq.f32.partialorder %v1997, 0.0
        %v1999 = vsel %vm1998, 1, 0
        %v2000 = vlaneseq
        %v2001 = vshrl.u32 %v2000, 7
        %v2002 = vsub.s32 0, %v2001
        %v2003 = vrot.slane %v1999, %v2002
        %vm2004 = vcmp.eq.s32.totalorder %v2003, 1
        %v2005 = vsel %vm2004, -1e+20, %v1918
        %v2006 = vsel %vm2004, -1e+20, %v1994
        %v2007 = vsel %vm1148, %v2005, -inf
        %2008 = vmax.xlane.f32.xlu0 %v2007
        %v2009 = vpop.xlane.xlu0 %2008
        %v2010 = vsel %vm1148, %v2006, -inf
        %2011 = vmax.xlane.f32.xlu0 %v2010
        %v2012 = vpop.xlane.xlu0 %2011
        %v2013 = vsub.f32 %v2005, %v2009
        %v2014 = vsub.f32 %v2006, %v2012
        %v2015 = vmul.f32 %v2013, 1.442695
        %v2016 = vpow.pop %v2015
        %v2017 = vmul.f32 %v2014, 1.442695
        %v2018 = vpow.pop %v2017
        %v2019 = vsel %vm1148, %v2016, 0.0
        %2020 = vadd.xlane.f32.xlu0 %v2019
        %v2021 = vpop.xlane.xlu0 %2020
        %v2022 = vsel %vm1148, %v2018, 0.0
        %2023 = vadd.xlane.f32.xlu0 %v2022
        %v2024 = vpop.xlane.xlu0 %2023
        %v2025 = vrcp.pop %v2021
        %v2026 = vrcp.pop %v2024
        %v2027 = vmul.f32 %v2016, %v2025
        %v2028 = vmul.f32 %v2018, %v2026
        %2029 = vrot.lane.b32.xlu0 %v1772, 112
        %v2030 = vpop.permute.xlu0 %2029
        %v2033 = vsel %vm1148, %v2027, 0
        %2035 = vmatprep.subr.mxu0 0.0
        %2036 = vmatpush1.msra.mxu0 %v2030
        %2037 = vmatprep.subr.mxu0 0.0
        %2038 = vmatpush1.msra.mxu0 0.0
        %2039 = vmatprep.subr.mxu0 0.0
        %2040 = vmatpush1.msra.mxu0 0.0
        %2041 = vmatprep.subr.mxu0 0.0
        %2042 = vmatpush1.msra.mxu0 0.0
        %2043 = vmatprep.subr.mxu0 0.0
        %2044 = vmatpush1.msra.mxu0 0.0
        %2045 = vmatprep.subr.mxu0 0.0
        %2046 = vmatpush1.msra.mxu0 0.0
        %2047 = vmatprep.subr.mxu0 0.0
        %2048 = vmatpush1.msra.mxu0 0.0
        %2049 = vmatprep.subr.mxu0 0.0
        %2050 = vmatpush1.msra.mxu0 0.0
        %2051 = vmatprep.subr.mxu0 0.0
        %2052 = vmatpush1.msra.mxu0 0.0
        %2053 = vmatprep.subr.mxu0 0.0
        %2054 = vmatpush1.msra.mxu0 0.0
        %2055 = vmatprep.subr.mxu0 0.0
        %2056 = vmatpush1.msra.mxu0 0.0
        %2057 = vmatprep.subr.mxu0 0.0
        %2058 = vmatpush1.msra.mxu0 0.0
        %2059 = vmatprep.subr.mxu0 0.0
        %2060 = vmatpush1.msra.mxu0 0.0
        %2061 = vmatprep.subr.mxu0 0.0
        %2062 = vmatpush1.msra.mxu0 0.0
        %2063 = vmatprep.subr.mxu0 0.0
        %2064 = vmatpush1.msra.mxu0 0.0
        %2065 = vmatprep.subr.mxu0 0.0
        %2066 = vmatpush1.msra.mxu0 0.0
        %2067 = vmatprep.subr.mxu0 0.0
        %2068 = vmatpush1.msra.mxu0 0.0
        %2069 = vmatprep.subr.mxu0 0.0
        %2070 = vmatpush1.msra.mxu0 0.0
        %2071 = vmatprep.subr.mxu0 0.0
        %2072 = vmatpush1.msra.mxu0 0.0
        %2073 = vmatprep.subr.mxu0 0.0
        %2074 = vmatpush1.msra.mxu0 0.0
        %2075 = vmatprep.subr.mxu0 0.0
        %2076 = vmatpush1.msra.mxu0 0.0
        %2077 = vmatprep.subr.mxu0 0.0
        %2078 = vmatpush1.msra.mxu0 0.0
        %2079 = vmatprep.subr.mxu0 0.0
        %2080 = vmatpush1.msra.mxu0 0.0
        %2081 = vmatprep.subr.mxu0 0.0
        %2082 = vmatpush1.msra.mxu0 0.0
        %2083 = vmatprep.subr.mxu0 0.0
        %2084 = vmatpush1.msra.mxu0 0.0
        %2085 = vmatprep.subr.mxu0 0.0
        %2086 = vmatpush1.msra.mxu0 0.0
        %2087 = vmatprep.subr.mxu0 0.0
        %2088 = vmatpush1.msra.mxu0 0.0
        %2089 = vmatprep.subr.mxu0 0.0
        %2090 = vmatpush1.msra.mxu0 0.0
        %2091 = vmatprep.subr.mxu0 0.0
        %2092 = vmatpush1.msra.mxu0 0.0
        %2093 = vmatprep.subr.mxu0 0.0
        %2094 = vmatpush1.msra.mxu0 0.0
        %2095 = vmatprep.subr.mxu0 0.0
        %2096 = vmatpush1.msra.mxu0 0.0
        %2097 = vmatprep.subr.mxu0 0.0
        %2098 = vmatpush1.msra.mxu0 0.0
        %2099 = vmatprep.mubr.f32.mxu0 0.0
        %2100 = vmatmul.mubr.f32.gmra.mrb[0].mxu0 %v2033
        %v2101 = vpop.f32.mrb[0].mxu0
        %v2102 = vadd.f32 0.0, %v2101
        %v2103 = vpop.f32.mrb[0].mxu0
        %2104 = vdwg.mxu0
        %2105 = vrot.lane.b32.xlu0 %v1842, 112
        %v2106 = vpop.permute.xlu0 %2105
        %v2109 = vsel %vm1148, %v2028, 0
        %2111 = vmatprep.subr.mxu0 0.0
        %2112 = vmatpush1.msra.mxu0 %v2106
        %2113 = vmatprep.subr.mxu0 0.0
        %2114 = vmatpush1.msra.mxu0 0.0
        %2115 = vmatprep.subr.mxu0 0.0
        %2116 = vmatpush1.msra.mxu0 0.0
        %2117 = vmatprep.subr.mxu0 0.0
        %2118 = vmatpush1.msra.mxu0 0.0
        %2119 = vmatprep.subr.mxu0 0.0
        %2120 = vmatpush1.msra.mxu0 0.0
        %2121 = vmatprep.subr.mxu0 0.0
        %2122 = vmatpush1.msra.mxu0 0.0
        %2123 = vmatprep.subr.mxu0 0.0
        %2124 = vmatpush1.msra.mxu0 0.0
        %2125 = vmatprep.subr.mxu0 0.0
        %2126 = vmatpush1.msra.mxu0 0.0
        %2127 = vmatprep.subr.mxu0 0.0
        %2128 = vmatpush1.msra.mxu0 0.0
        %2129 = vmatprep.subr.mxu0 0.0
        %2130 = vmatpush1.msra.mxu0 0.0
        %2131 = vmatprep.subr.mxu0 0.0
        %2132 = vmatpush1.msra.mxu0 0.0
        %2133 = vmatprep.subr.mxu0 0.0
        %2134 = vmatpush1.msra.mxu0 0.0
        %2135 = vmatprep.subr.mxu0 0.0
        %2136 = vmatpush1.msra.mxu0 0.0
        %2137 = vmatprep.subr.mxu0 0.0
        %2138 = vmatpush1.msra.mxu0 0.0
        %2139 = vmatprep.subr.mxu0 0.0
        %2140 = vmatpush1.msra.mxu0 0.0
        %2141 = vmatprep.subr.mxu0 0.0
        %2142 = vmatpush1.msra.mxu0 0.0
        %2143 = vmatprep.subr.mxu0 0.0
        %2144 = vmatpush1.msra.mxu0 0.0
        %2145 = vmatprep.subr.mxu0 0.0
        %2146 = vmatpush1.msra.mxu0 0.0
        %2147 = vmatprep.subr.mxu0 0.0
        %2148 = vmatpush1.msra.mxu0 0.0
        %2149 = vmatprep.subr.mxu0 0.0
        %2150 = vmatpush1.msra.mxu0 0.0
        %2151 = vmatprep.subr.mxu0 0.0
        %2152 = vmatpush1.msra.mxu0 0.0
        %2153 = vmatprep.subr.mxu0 0.0
        %2154 = vmatpush1.msra.mxu0 0.0
        %2155 = vmatprep.subr.mxu0 0.0
        %2156 = vmatpush1.msra.mxu0 0.0
        %2157 = vmatprep.subr.mxu0 0.0
        %2158 = vmatpush1.msra.mxu0 0.0
        %2159 = vmatprep.subr.mxu0 0.0
        %2160 = vmatpush1.msra.mxu0 0.0
        %2161 = vmatprep.subr.mxu0 0.0
        %2162 = vmatpush1.msra.mxu0 0.0
        %2163 = vmatprep.subr.mxu0 0.0
        %2164 = vmatpush1.msra.mxu0 0.0
        %2165 = vmatprep.subr.mxu0 0.0
        %2166 = vmatpush1.msra.mxu0 0.0
        %2167 = vmatprep.subr.mxu0 0.0
        %2168 = vmatpush1.msra.mxu0 0.0
        %2169 = vmatprep.subr.mxu0 0.0
        %2170 = vmatpush1.msra.mxu0 0.0
        %2171 = vmatprep.subr.mxu0 0.0
        %2172 = vmatpush1.msra.mxu0 0.0
        %2173 = vmatprep.subr.mxu0 0.0
        %2174 = vmatpush1.msra.mxu0 0.0
        %2175 = vmatprep.mubr.f32.mxu0 0.0
        %2176 = vmatmul.mubr.f32.gmra.mrb[0].mxu0 %v2109
        %v2177 = vpop.f32.mrb[0].mxu0
        %v2178 = vadd.f32 0.0, %v2177
        %v2179 = vpop.f32.mrb[0].mxu0
        %2180 = vdwg.mxu0
        %v2181 = vld [vmem:[%s14] sm:$0xff]
        %v2182 = vld [vmem:[%s14 + $0x8] sm:$0xff]
        %v2183 = vld [vmem:[%s14 + $0x10] sm:$0xff]
        %v2184 = vld [vmem:[%s14 + $0x18] sm:$0xff]
        %v2186 = vsel %vm989, %v2102, 0
        %2188 = vmatprep.subr.mxu0 0.0
        %2189 = vmatpush1.msra.mxu0 %v2181
        %2190 = vmatprep.subr.mxu0 0.0
        %2191 = vmatpush1.msra.mxu0 %v2182
        %2192 = vmatprep.subr.mxu0 0.0
        %2193 = vmatpush1.msra.mxu0 0.0
        %2194 = vmatprep.subr.mxu0 0.0
        %2195 = vmatpush1.msra.mxu0 0.0
        %2196 = vmatprep.subr.mxu0 0.0
        %2197 = vmatpush1.msra.mxu0 0.0
        %2198 = vmatprep.subr.mxu0 0.0
        %2199 = vmatpush1.msra.mxu0 0.0
        %2200 = vmatprep.subr.mxu0 0.0
        %2201 = vmatpush1.msra.mxu0 0.0
        %2202 = vmatprep.subr.mxu0 0.0
        %2203 = vmatpush1.msra.mxu0 0.0
        %2204 = vmatprep.subr.mxu0 0.0
        %2205 = vmatpush1.msra.mxu0 0.0
        %2206 = vmatprep.subr.mxu0 0.0
        %2207 = vmatpush1.msra.mxu0 0.0
        %2208 = vmatprep.subr.mxu0 0.0
        %2209 = vmatpush1.msra.mxu0 0.0
        %2210 = vmatprep.subr.mxu0 0.0
        %2211 = vmatpush1.msra.mxu0 0.0
        %2212 = vmatprep.subr.mxu0 0.0
        %2213 = vmatpush1.msra.mxu0 0.0
        %2214 = vmatprep.subr.mxu0 0.0
        %2215 = vmatpush1.msra.mxu0 0.0
        %2216 = vmatprep.subr.mxu0 0.0
        %2217 = vmatpush1.msra.mxu0 0.0
        %2218 = vmatprep.subr.mxu0 0.0
        %2219 = vmatpush1.msra.mxu0 0.0
        %2220 = vmatprep.subr.mxu0 0.0
        %2221 = vmatpush1.msra.mxu0 0.0
        %2222 = vmatprep.subr.mxu0 0.0
        %2223 = vmatpush1.msra.mxu0 0.0
        %2224 = vmatprep.subr.mxu0 0.0
        %2225 = vmatpush1.msra.mxu0 0.0
        %2226 = vmatprep.subr.mxu0 0.0
        %2227 = vmatpush1.msra.mxu0 0.0
        %2228 = vmatprep.subr.mxu0 0.0
        %2229 = vmatpush1.msra.mxu0 0.0
        %2230 = vmatprep.subr.mxu0 0.0
        %2231 = vmatpush1.msra.mxu0 0.0
        %2232 = vmatprep.subr.mxu0 0.0
        %2233 = vmatpush1.msra.mxu0 0.0
        %2234 = vmatprep.subr.mxu0 0.0
        %2235 = vmatpush1.msra.mxu0 0.0
        %2236 = vmatprep.subr.mxu0 0.0
        %2237 = vmatpush1.msra.mxu0 0.0
        %2238 = vmatprep.subr.mxu0 0.0
        %2239 = vmatpush1.msra.mxu0 0.0
        %2240 = vmatprep.subr.mxu0 0.0
        %2241 = vmatpush1.msra.mxu0 0.0
        %2242 = vmatprep.subr.mxu0 0.0
        %2243 = vmatpush1.msra.mxu0 0.0
        %2244 = vmatprep.subr.mxu0 0.0
        %2245 = vmatpush1.msra.mxu0 0.0
        %2246 = vmatprep.subr.mxu0 0.0
        %2247 = vmatpush1.msra.mxu0 0.0
        %2248 = vmatprep.subr.mxu0 0.0
        %2249 = vmatpush1.msra.mxu0 0.0
        %2250 = vmatprep.subr.mxu0 0.0
        %2251 = vmatpush1.msra.mxu0 0.0
        %2252 = vmatprep.mubr.f32.mxu0 0.0
        %2253 = vmatmul.mubr.f32.gmra.mrb[0].mxu0 %v2186
        %v2254 = vpop.f32.mrb[0].mxu0
        %v2255 = vadd.f32 0.0, %v2254
        %v2256 = vpop.f32.mrb[0].mxu0
        %2257 = vdwg.mxu0
        %v2259 = vsel %vm989, %v2178, 0
        %2261 = vmatprep.subr.mxu0 0.0
        %2262 = vmatpush1.msra.mxu0 %v2183
        %2263 = vmatprep.subr.mxu0 0.0
        %2264 = vmatpush1.msra.mxu0 %v2184
        %2265 = vmatprep.subr.mxu0 0.0
        %2266 = vmatpush1.msra.mxu0 0.0
        %2267 = vmatprep.subr.mxu0 0.0
        %2268 = vmatpush1.msra.mxu0 0.0
        %2269 = vmatprep.subr.mxu0 0.0
        %2270 = vmatpush1.msra.mxu0 0.0
        %2271 = vmatprep.subr.mxu0 0.0
        %2272 = vmatpush1.msra.mxu0 0.0
        %2273 = vmatprep.subr.mxu0 0.0
        %2274 = vmatpush1.msra.mxu0 0.0
        %2275 = vmatprep.subr.mxu0 0.0
        %2276 = vmatpush1.msra.mxu0 0.0
        %2277 = vmatprep.subr.mxu0 0.0
        %2278 = vmatpush1.msra.mxu0 0.0
        %2279 = vmatprep.subr.mxu0 0.0
        %2280 = vmatpush1.msra.mxu0 0.0
        %2281 = vmatprep.subr.mxu0 0.0
        %2282 = vmatpush1.msra.mxu0 0.0
        %2283 = vmatprep.subr.mxu0 0.0
        %2284 = vmatpush1.msra.mxu0 0.0
        %2285 = vmatprep.subr.mxu0 0.0
        %2286 = vmatpush1.msra.mxu0 0.0
        %2287 = vmatprep.subr.mxu0 0.0
        %2288 = vmatpush1.msra.mxu0 0.0
        %2289 = vmatprep.subr.mxu0 0.0
        %2290 = vmatpush1.msra.mxu0 0.0
        %2291 = vmatprep.subr.mxu0 0.0
        %2292 = vmatpush1.msra.mxu0 0.0
        %2293 = vmatprep.subr.mxu0 0.0
        %2294 = vmatpush1.msra.mxu0 0.0
        %2295 = vmatprep.subr.mxu0 0.0
        %2296 = vmatpush1.msra.mxu0 0.0
        %2297 = vmatprep.subr.mxu0 0.0
        %2298 = vmatpush1.msra.mxu0 0.0
        %2299 = vmatprep.subr.mxu0 0.0
        %2300 = vmatpush1.msra.mxu0 0.0
        %2301 = vmatprep.subr.mxu0 0.0
        %2302 = vmatpush1.msra.mxu0 0.0
        %2303 = vmatprep.subr.mxu0 0.0
        %2304 = vmatpush1.msra.mxu0 0.0
        %2305 = vmatprep.subr.mxu0 0.0
        %2306 = vmatpush1.msra.mxu0 0.0
        %2307 = vmatprep.subr.mxu0 0.0
        %2308 = vmatpush1.msra.mxu0 0.0
        %2309 = vmatprep.subr.mxu0 0.0
        %2310 = vmatpush1.msra.mxu0 0.0
        %2311 = vmatprep.subr.mxu0 0.0
        %2312 = vmatpush1.msra.mxu0 0.0
        %2313 = vmatprep.subr.mxu0 0.0
        %2314 = vmatpush1.msra.mxu0 0.0
        %2315 = vmatprep.subr.mxu0 0.0
        %2316 = vmatpush1.msra.mxu0 0.0
        %2317 = vmatprep.subr.mxu0 0.0
        %2318 = vmatpush1.msra.mxu0 0.0
        %2319 = vmatprep.subr.mxu0 0.0
        %2320 = vmatpush1.msra.mxu0 0.0
        %2321 = vmatprep.subr.mxu0 0.0
        %2322 = vmatpush1.msra.mxu0 0.0
        %2323 = vmatprep.subr.mxu0 0.0
        %2324 = vmatpush1.msra.mxu0 0.0
        %2325 = vmatprep.mubr.f32.mxu0 0.0
        %2326 = vmatmul.mubr.f32.gmra.mrb[0].mxu0 %v2259
        %v2327 = vpop.f32.mrb[0].mxu0
        %v2328 = vadd.f32 0.0, %v2327
        %v2329 = vpop.f32.mrb[0].mxu0
        %2330 = vdwg.mxu0
        %v2331 = vsel %vm842, %v2255, 0.0
        %v2332 = vsel %vm842, %v2328, 0.0
        %v2333 = vadd.f32 %v2331, %v2332
        %v2334 = vld [vmem:[%s15] sm:$0x1]
        %v2336 = vlaneseq
        %v2337 = vshrl.u32 %v2336, 7
        %v2338 = vsub.s32 0, %v2337
        %v2339 = vrot.slane %v2334, %v2338
        %v2341 = vadd.f32 %v2333, %v2339
        %v2342 = vld [vmem:[%s16] sm:$0x1]
        %v2343 = vld [vmem:[%s17] sm:$0x1]
        %v2344 = vsel %vm842, %v2341, 0.0
        %2345 = vadd.xlane.f32.xlu0 %v2344
        %v2346 = vpop.xlane.xlu0 %2345
        %v2347 = vmul.f32 %v2346, %v1489
        %v2348 = vsub.f32 %v2341, %v2347
        %v2349 = vmul.f32 %v2348, %v2348
        %v2350 = vsel %vm842, %v2349, 0.0
        %2351 = vadd.xlane.f32.xlu0 %v2350
        %v2352 = vpop.xlane.xlu0 %2351
        %v2353 = vmul.f32 %v2352, %v1489
        %v2354 = vadd.f32 %v2353, 1e-05
        %v2355 = vrsqrt.pop %v2354
        %v2356 = vmul.f32 %v2348, %v2355
        %v2358 = vlaneseq
        %v2359 = vshrl.u32 %v2358, 7
        %v2360 = vsub.s32 0, %v2359
        %v2361 = vrot.slane %v2342, %v2360
        %v2363 = vmul.f32 %v2356, %v2361
        %v2365 = vlaneseq
        %v2366 = vshrl.u32 %v2365, 7
        %v2367 = vsub.s32 0, %v2366
        %v2368 = vrot.slane %v2343, %v2367
        %v2370 = vadd.f32 %v2363, %v2368
        %v2371 = vld [vmem:[%s811] sm:$0xff]
        %v2372 = vld [vmem:[%s18] sm:$0xff]
        %v2373 = vld [vmem:[%s18 + $0x8] sm:$0xff]
        %v2374 = vld [vmem:[%s18 + $0x10] sm:$0xff]
        %v2375 = vld [vmem:[%s18 + $0x18] sm:$0xff]
        %v2376 = vld [vmem:[%s20] sm:$0x1]
        %v2378 = vlaneseq
        %v2379 = vshrl.u32 %v2378, 7
        %v2380 = vsub.s32 0, %v2379
        %v2381 = vrot.slane %v2376, %v2380
        %v2384 = vsel %vm842, %v2370, 0
        %2386 = vmatprep.subr.mxu0 0.0
        %2387 = vmatpush1.msra.mxu0 %v2372
        %2388 = vmatprep.subr.mxu0 0.0
        %2389 = vmatpush1.msra.mxu0 %v2373
        %2390 = vmatprep.subr.mxu0 0.0
        %2391 = vmatpush1.msra.mxu0 %v2374
        %2392 = vmatprep.subr.mxu0 0.0
        %2393 = vmatpush1.msra.mxu0 %v2375
        %2394 = vmatprep.subr.mxu0 0.0
        %2395 = vmatpush1.msra.mxu0 0.0
        %2396 = vmatprep.subr.mxu0 0.0
        %2397 = vmatpush1.msra.mxu0 0.0
        %2398 = vmatprep.subr.mxu0 0.0
        %2399 = vmatpush1.msra.mxu0 0.0
        %2400 = vmatprep.subr.mxu0 0.0
        %2401 = vmatpush1.msra.mxu0 0.0
        %2402 = vmatprep.subr.mxu0 0.0
        %2403 = vmatpush1.msra.mxu0 0.0
        %2404 = vmatprep.subr.mxu0 0.0
        %2405 = vmatpush1.msra.mxu0 0.0
        %2406 = vmatprep.subr.mxu0 0.0
        %2407 = vmatpush1.msra.mxu0 0.0
        %2408 = vmatprep.subr.mxu0 0.0
        %2409 = vmatpush1.msra.mxu0 0.0
        %2410 = vmatprep.subr.mxu0 0.0
        %2411 = vmatpush1.msra.mxu0 0.0
        %2412 = vmatprep.subr.mxu0 0.0
        %2413 = vmatpush1.msra.mxu0 0.0
        %2414 = vmatprep.subr.mxu0 0.0
        %2415 = vmatpush1.msra.mxu0 0.0
        %2416 = vmatprep.subr.mxu0 0.0
        %2417 = vmatpush1.msra.mxu0 0.0
        %2418 = vmatprep.subr.mxu0 0.0
        %2419 = vmatpush1.msra.mxu0 0.0
        %2420 = vmatprep.subr.mxu0 0.0
        %2421 = vmatpush1.msra.mxu0 0.0
        %2422 = vmatprep.subr.mxu0 0.0
        %2423 = vmatpush1.msra.mxu0 0.0
        %2424 = vmatprep.subr.mxu0 0.0
        %2425 = vmatpush1.msra.mxu0 0.0
        %2426 = vmatprep.subr.mxu0 0.0
        %2427 = vmatpush1.msra.mxu0 0.0
        %2428 = vmatprep.subr.mxu0 0.0
        %2429 = vmatpush1.msra.mxu0 0.0
        %2430 = vmatprep.subr.mxu0 0.0
        %2431 = vmatpush1.msra.mxu0 0.0
        %2432 = vmatprep.subr.mxu0 0.0
        %2433 = vmatpush1.msra.mxu0 0.0
        %2434 = vmatprep.subr.mxu0 0.0
        %2435 = vmatpush1.msra.mxu0 0.0
        %2436 = vmatprep.subr.mxu0 0.0
        %2437 = vmatpush1.msra.mxu0 0.0
        %2438 = vmatprep.subr.mxu0 0.0
        %2439 = vmatpush1.msra.mxu0 0.0
        %2440 = vmatprep.subr.mxu0 0.0
        %2441 = vmatpush1.msra.mxu0 0.0
        %2442 = vmatprep.subr.mxu0 0.0
        %2443 = vmatpush1.msra.mxu0 0.0
        %2444 = vmatprep.subr.mxu0 0.0
        %2445 = vmatpush1.msra.mxu0 0.0
        %2446 = vmatprep.subr.mxu0 0.0
        %2447 = vmatpush1.msra.mxu0 0.0
        %2448 = vmatprep.subr.mxu0 0.0
        %2449 = vmatpush1.msra.mxu0 0.0
        %2450 = vmatprep.mubr.f32.mxu0 0.0
        %2451 = vmatmul.mubr.f32.gmra.mrb[0].mxu0 %v2384
        %v2452 = vpop.f32.mrb[0].mxu0
        %v2453 = vadd.f32 %v2381, %v2452
        %v2454 = vpop.f32.mrb[0].mxu0
        %2455 = vdwg.mxu0
        %v2456 = vld [vmem:[%s19] sm:$0xff]
        %v2457 = vld [vmem:[%s19 + $0x8] sm:$0xff]
        %v2458 = vld [vmem:[%s19 + $0x10] sm:$0xff]
        %v2459 = vld [vmem:[%s19 + $0x18] sm:$0xff]
        %v2460 = vld [vmem:[%s21] sm:$0x1]
        %v2462 = vlaneseq
        %v2463 = vshrl.u32 %v2462, 7
        %v2464 = vsub.s32 0, %v2463
        %v2465 = vrot.slane %v2460, %v2464
        %v2468 = vsel %vm842, %v2371, 0
        %2470 = vmatprep.subr.mxu0 0.0
        %2471 = vmatpush1.msra.mxu0 %v2456
        %2472 = vmatprep.subr.mxu0 0.0
        %2473 = vmatpush1.msra.mxu0 %v2457
        %2474 = vmatprep.subr.mxu0 0.0
        %2475 = vmatpush1.msra.mxu0 %v2458
        %2476 = vmatprep.subr.mxu0 0.0
        %2477 = vmatpush1.msra.mxu0 %v2459
        %2478 = vmatprep.subr.mxu0 0.0
        %2479 = vmatpush1.msra.mxu0 0.0
        %2480 = vmatprep.subr.mxu0 0.0
        %2481 = vmatpush1.msra.mxu0 0.0
        %2482 = vmatprep.subr.mxu0 0.0
        %2483 = vmatpush1.msra.mxu0 0.0
        %2484 = vmatprep.subr.mxu0 0.0
        %2485 = vmatpush1.msra.mxu0 0.0
        %2486 = vmatprep.subr.mxu0 0.0
        %2487 = vmatpush1.msra.mxu0 0.0
        %2488 = vmatprep.subr.mxu0 0.0
        %2489 = vmatpush1.msra.mxu0 0.0
        %2490 = vmatprep.subr.mxu0 0.0
        %2491 = vmatpush1.msra.mxu0 0.0
        %2492 = vmatprep.subr.mxu0 0.0
        %2493 = vmatpush1.msra.mxu0 0.0
        %2494 = vmatprep.subr.mxu0 0.0
        %2495 = vmatpush1.msra.mxu0 0.0
        %2496 = vmatprep.subr.mxu0 0.0
        %2497 = vmatpush1.msra.mxu0 0.0
        %2498 = vmatprep.subr.mxu0 0.0
        %2499 = vmatpush1.msra.mxu0 0.0
        %2500 = vmatprep.subr.mxu0 0.0
        %2501 = vmatpush1.msra.mxu0 0.0
        %2502 = vmatprep.subr.mxu0 0.0
        %2503 = vmatpush1.msra.mxu0 0.0
        %2504 = vmatprep.subr.mxu0 0.0
        %2505 = vmatpush1.msra.mxu0 0.0
        %2506 = vmatprep.subr.mxu0 0.0
        %2507 = vmatpush1.msra.mxu0 0.0
        %2508 = vmatprep.subr.mxu0 0.0
        %2509 = vmatpush1.msra.mxu0 0.0
        %2510 = vmatprep.subr.mxu0 0.0
        %2511 = vmatpush1.msra.mxu0 0.0
        %2512 = vmatprep.subr.mxu0 0.0
        %2513 = vmatpush1.msra.mxu0 0.0
        %2514 = vmatprep.subr.mxu0 0.0
        %2515 = vmatpush1.msra.mxu0 0.0
        %2516 = vmatprep.subr.mxu0 0.0
        %2517 = vmatpush1.msra.mxu0 0.0
        %2518 = vmatprep.subr.mxu0 0.0
        %2519 = vmatpush1.msra.mxu0 0.0
        %2520 = vmatprep.subr.mxu0 0.0
        %2521 = vmatpush1.msra.mxu0 0.0
        %2522 = vmatprep.subr.mxu0 0.0
        %2523 = vmatpush1.msra.mxu0 0.0
        %2524 = vmatprep.subr.mxu0 0.0
        %2525 = vmatpush1.msra.mxu0 0.0
        %2526 = vmatprep.subr.mxu0 0.0
        %2527 = vmatpush1.msra.mxu0 0.0
        %2528 = vmatprep.subr.mxu0 0.0
        %2529 = vmatpush1.msra.mxu0 0.0
        %2530 = vmatprep.subr.mxu0 0.0
        %2531 = vmatpush1.msra.mxu0 0.0
        %2532 = vmatprep.subr.mxu0 0.0
        %2533 = vmatpush1.msra.mxu0 0.0
        %2534 = vmatprep.mubr.f32.mxu0 0.0
        %2535 = vmatmul.mubr.f32.gmra.mrb[0].mxu0 %v2468
        %v2536 = vpop.f32.mrb[0].mxu0
        %v2537 = vadd.f32 %v2465, %v2536
        %v2538 = vpop.f32.mrb[0].mxu0
        %2539 = vdwg.mxu0
        %v2540 = vadd.f32 %v2453, %v2537
        %v2541 = vxor.u32 %v2540, 2147483648
        %v2542 = vmul.f32 %v2541, 1.442695
        %v2543 = vpow.pop %v2542
        %v2544 = vadd.f32 %v2543, 1.0
        %v2545 = vrcp.pop %v2544
        %v2546 = vmul.f32 1.0, %v2545
        %2548 = vrot.lane.b32.xlu0 %v2537, 64
        %v2549 = vpop.permute.xlu0 %2548
        %v2551 = vmul.f32 %v2546, %v2549
        %2553 = vrot.lane.b32.xlu0 %v2551, 64
        %v2554 = vpop.permute.xlu0 %2553
        %v2556 = vadd.f32 %v2453, %v2554
        %v2557 = vtanh.pop %v2556
        %v2558 = vsub.f32 1.0, %v2546
        %2560 = vrot.lane.b32.xlu0 %v2557, 96
        %v2561 = vpop.permute.xlu0 %2560
        %v2563 = vmul.f32 %v2558, %v2561
        %2564 = vrot.lane.b32.xlu0 %v2371, 32
        %v2565 = vpop.permute.xlu0 %2564
        %v2567 = vmul.f32 %v2546, %v2565
        %v2568 = vadd.f32 %v2563, %v2567
        %v2569 = vld [vmem:[%s22] sm:$0x1]
        %v2570 = vld [vmem:[%s23] sm:$0x1]
        %2572 = vrot.lane.b32.xlu0 %v2568, 96
        %v2573 = vpop.permute.xlu0 %2572
        %v2575 = vsel %vm842, %v2573, 0.0
        %2576 = vadd.xlane.f32.xlu0 %v2575
        %v2577 = vpop.xlane.xlu0 %2576
        %v2578 = vmul.f32 %v2577, %v1489
        %v2579 = vsub.f32 %v2568, %v2578
        %v2580 = vmul.f32 %v2579, %v2579
        %2582 = vrot.lane.b32.xlu0 %v2580, 96
        %v2583 = vpop.permute.xlu0 %2582
        %v2585 = vsel %vm842, %v2583, 0.0
        %2586 = vadd.xlane.f32.xlu0 %v2585
        %v2587 = vpop.xlane.xlu0 %2586
        %v2588 = vmul.f32 %v2587, %v1489
        %v2589 = vadd.f32 %v2588, 1e-05
        %v2590 = vrsqrt.pop %v2589
        %v2591 = vmul.f32 %v2579, %v2590
        %v2593 = vlaneseq
        %v2594 = vshrl.u32 %v2593, 7
        %v2595 = vsub.s32 0, %v2594
        %v2596 = vrot.slane %v2569, %v2595
        %2597 = vrot.lane.b32.xlu0 %v2596, 32
        %v2598 = vpop.permute.xlu0 %2597
        %v2600 = vmul.f32 %v2591, %v2598
        %v2602 = vlaneseq
        %v2603 = vshrl.u32 %v2602, 7
        %v2604 = vsub.s32 0, %v2603
        %v2605 = vrot.slane %v2570, %v2604
        %2606 = vrot.lane.b32.xlu0 %v2605, 32
        %v2607 = vpop.permute.xlu0 %2606
        %v2609 = vadd.f32 %v2600, %v2607
        %2611 = vrot.lane.b32.xlu0 %v2609, 96
        %v2612 = vpop.permute.xlu0 %2611
        %2614 = vst.msk [vmem:[%s796] sm:$0xff] %vm842, %v2612
        %2615 = vst.msk [vmem:[%s803] sm:$0xff] %vm842, %v2573
        %s2616 = sand.u32 %s575, 1
        %s2617 = scalar_lea.sflag [#allocation3], %s2616
        %s2618 = sand.u32 %s575, 1
        %s2619 = smul.addr %s2618, 8
        %s2620 = scalar_lea.vmem [#allocation2], %s2619
        %s2621 = sand.u32 %s601, 1
        %s2622 = scalar_lea.sflag [#allocation5], %s2621
        %s2623 = sand.u32 %s601, 1
        %s2624 = smul.addr %s2623, 8
        %s2625 = scalar_lea.vmem [#allocation4], %s2624
        // Predicated region
        $region117: #{reformer_decoder_layer.1} parent=115 // pred_check
          %p2626 = pneg %p585
        $region118: #{reformer_decoder_layer.1} parent=115 // pred_check_branch
          %2628 = sbr.rel (%p2626) target = $region120
        $region119: #{reformer_decoder_layer.1} parent=115 // pred_region
          %s2630 = ssub.s32 128, 128
          %2631 = vsyncadd %s2617, %s2630
          %s2632 = smul.addr %s43, 128
          %s2633 = scalar_lea.hbm %s24, %s2632
          %s2635 = sshll.u32 %s2620, 4
          %s2636 = int_to_ptr.vmem [resolvable:$true] %s2635
          %2638 = dma.vmem_to_hbm [thread:$0]  %s2636, 128, %s2633, %s2617
        $region120: #{reformer_decoder_layer.1} parent=115 // pred_fallthru
          _
        // Predicated region
        $region121: #{reformer_decoder_layer.1} parent=115 // pred_check
          %p2639 = pneg %p611
        $region122: #{reformer_decoder_layer.1} parent=115 // pred_check_branch
          %2641 = sbr.rel (%p2639) target = $region124
        $region123: #{reformer_decoder_layer.1} parent=115 // pred_region
          %s2643 = ssub.s32 128, 128
          %2644 = vsyncadd %s2622, %s2643
          %s2645 = smul.addr %s43, 128
          %s2646 = scalar_lea.hbm %s25, %s2645
          %s2648 = sshll.u32 %s2625, 4
          %s2649 = int_to_ptr.vmem [resolvable:$true] %s2648
          %2651 = dma.vmem_to_hbm [thread:$0]  %s2649, 128, %s2646, %s2622
        $region124: #{reformer_decoder_layer.1} parent=115 // pred_fallthru
          _
      $region116: #{reformer_decoder_layer.1} parent=5 // pred_fallthru
        _
      %p2652 = scmp.le.s32.totalorder 2, %s38
      // Predicated region
      $region125: #{reformer_decoder_layer.1} parent=5 // pred_check
        %p2653 = pneg %p2652
      $region126: #{reformer_decoder_layer.1} parent=5 // pred_check_branch
        %2655 = sbr.rel (%p2653) target = $region128
      $region127: #{reformer_decoder_layer.1} parent=5 // pred_region
        %s2656 = ssub.s32 %s38, 2
        // Predicated region
        $region129: #{reformer_decoder_layer.1} parent=127 // pred_check
          %p2657 = pneg %p591
        $region130: #{reformer_decoder_layer.1} parent=127 // pred_check_branch
          %2659 = sbr.rel (%p2657) target = $region132
        $region131: #{reformer_decoder_layer.1} parent=127 // pred_region
          %s2660 = sand.u32 %s576, 1
          %s2661 = scalar_lea.sflag [#allocation3], %s2660
          %s2662 = sand.u32 %s576, 1
          %s2663 = smul.addr %s2662, 8
          %s2664 = scalar_lea.vmem [#allocation2], %s2663
          %2665 = dma.done %s2661, 128
        $region132: #{reformer_decoder_layer.1} parent=127 // pred_fallthru
          _
        // Predicated region
        $region133: #{reformer_decoder_layer.1} parent=127 // pred_check
          %p2666 = pneg %p617
        $region134: #{reformer_decoder_layer.1} parent=127 // pred_check_branch
          %2668 = sbr.rel (%p2666) target = $region136
        $region135: #{reformer_decoder_layer.1} parent=127 // pred_region
          %s2669 = sand.u32 %s602, 1
          %s2670 = scalar_lea.sflag [#allocation5], %s2669
          %s2671 = sand.u32 %s602, 1
          %s2672 = smul.addr %s2671, 8
          %s2673 = scalar_lea.vmem [#allocation4], %s2672
          %2674 = dma.done %s2670, 128
        $region136: #{reformer_decoder_layer.1} parent=127 // pred_fallthru
          _
      $region128: #{reformer_decoder_layer.1} parent=5 // pred_fallthru
        _
    $region6: #{reformer_decoder_layer.1} parent=1 // loop_footer
      %s42 = sadd.s32 1, %s38
    $region7: #{reformer_decoder_layer.1} parent=1 // loop_footer_branch
      %37 = sbr.rel target = $region3
    $region8: #{reformer_decoder_layer.1} parent=1 // loop_exit
      _
    %2675 = vsyncpa [#allocation3], 1
    %s2676 = scalar_lea.sflag [#allocation3], 1
    %2677 = vsyncpa %s2676, 1
    %2678 = vsyncpa [#allocation5], 1
    %s2679 = scalar_lea.sflag [#allocation5], 1
    %2680 = vsyncpa %s2679, 1

</llo_original>
